<compile_context>
chip_gen: v7x
topology: tpu7x:2x2x1
jax: 0.10.0
libtpu: 0.0.40
codegen_flags: <defaults>
</compile_context>

<pallas_src>
import functools

import jax
import jax.numpy as jnp
from jax import lax
from jax.experimental import pallas as pl
from jax.experimental.pallas import tpu as pltpu

PRED_LEN = 12  # hard-coded `range(12)` in the PyTorch forward


# ---------------------------------------------------------------------------
# Pallas kernel
# ---------------------------------------------------------------------------
def _activate(gates, c, H):
    """Gate nonlinearities + state update, PyTorch gate order (i, f, g, o).

    Full-width sigmoid/tanh (2 EUP passes over the 4H lanes) followed by
    static lane slices, instead of 4 padded quarter-width transcendental ops.
    """
    sig = jax.nn.sigmoid(gates)
    tnh = jnp.tanh(gates)
    i_g = sig[:, 0 * H:1 * H]
    f_g = sig[:, 1 * H:2 * H]
    g_g = tnh[:, 2 * H:3 * H]
    o_g = sig[:, 3 * H:4 * H]
    c_new = f_g * c + i_g * g_g
    h_new = o_g * jnp.tanh(c_new)
    return h_new, c_new


def lstm_model_kernel(infer, *refs):
    """Encoder LSTM over obs_traj, then 12 decode steps, all in VMEM.

    infer=True  refs: obs, w_ih_t, w_hh_t, b, gate_w, gate_b, w_out_t, b_out, pred
    infer=False refs: obs, gt,  w_ih_t, w_hh_t, b,          w_out_t, b_out, pred
    obs / gt are pre-flattened to (T*N, in_dim) in the wrapper.
    """
    if infer:
        (obs_ref, w_ih_ref, w_hh_ref, b_ref, gate_w_ref, gate_b_ref,
         w_out_ref, b_out_ref, pred_ref) = refs
        gt_ref = None
    else:
        (obs_ref, gt_ref, w_ih_ref, w_hh_ref, b_ref,
         w_out_ref, b_out_ref, pred_ref) = refs
        # Teacher forcing: decoder gate matrix is just W_hh^T, bias is the
        # plain LSTM bias (the x @ W_ih^T part comes from gt_proj below).
        gate_w_ref, gate_b_ref = w_hh_ref, b_ref

    num_ped = pred_ref.shape[1]
    obs_len = obs_ref.shape[0] // num_ped
    H = w_hh_ref.shape[0]

    w_hh_t = w_hh_ref[...]                                   # (H, 4H)
    w_out_t = w_out_ref[...]                                 # (H, out_dim)
    gate_w = gate_w_ref[...]                                 # (H, 4H)
    # Hoisted bias broadcasts (done once, not per step).
    gate_b = jnp.broadcast_to(gate_b_ref[...], (num_ped, 4 * H))
    b_out = jnp.broadcast_to(b_out_ref[...], (num_ped, w_out_t.shape[1]))

    # ---- input projections hoisted off the sequential chain (one matmul) ---
    obs_proj = (jnp.dot(obs_ref[...], w_ih_ref[...],
                        preferred_element_type=jnp.float32)
                + b_ref[...])                                # (obs_len*N, 4H)
    if not infer:
        gt_proj = jnp.dot(gt_ref[...], w_ih_ref[...],
                          preferred_element_type=jnp.float32)  # (12*N, 4H)

    h = jnp.zeros((num_ped, H), jnp.float32)
    c = jnp.zeros((num_ped, H), jnp.float32)

    # ---- encoder: LSTM over observed trajectory (fully unrolled) ----
    # One serial matmul per step: h @ W_hh; the x @ W_ih part is precomputed.
    for t in range(obs_len):
        gates = (obs_proj[t * num_ped:(t + 1) * num_ped, :]
                 + jnp.dot(h, w_hh_t, preferred_element_type=jnp.float32))
        h, c = _activate(gates, c, H)

    # ---- decoder: 12 prediction steps (fully unrolled) ----
    # The trajectory projection only depends on the current h, never on the
    # state update, so it is independent MXU work off the serial chain.  The
    # serial chain is one 128-lane-aligned (N,H)@(H,4H) matmul per step; in
    # infer mode the output-layer feedback is pre-folded into gate_w / gate_b.
    for i in range(PRED_LEN):
        pred_ref[i] = (jnp.dot(h, w_out_t,
                               preferred_element_type=jnp.float32)
                       + b_out)                 # pred_traj[i] = output_layer(hn)
        if i < PRED_LEN - 1:                    # last cell update is dead code
            gates = (jnp.dot(h, gate_w, preferred_element_type=jnp.float32)
                     + gate_b)
            if not infer:                       # teacher forcing: add gt proj
                gates = gates + gt_proj[i * num_ped:(i + 1) * num_ped, :]
            h, c = _activate(gates, c, H)


# ---------------------------------------------------------------------------
# Wrapper
# ---------------------------------------------------------------------------
def lstm_model_forward(obs_traj, pred_traj_gt, params, *, infer):
    obs_len, num_ped, in_dim = obs_traj.shape
    out_dim = params["w_out"].shape[0]

    # Pre-transpose weights; fold the two LSTM biases together.
    w_ih_t = params["w_ih"].T                                   # (in_dim, 4H)
    w_hh_t = params["w_hh"].T                                   # (H, 4H)
    b = (params["b_ih"] + params["b_hh"]).reshape(1, -1)        # (1, 4H)
    w_out_t = params["w_out"].T                                 # (H, out_dim)
    b_out = params["b_out"].reshape(1, -1)                      # (1, out_dim)

    args = [obs_traj.reshape(obs_len * num_ped, in_dim)]
    if infer:
        # Fold the output layer into the recurrence (done ONCE, f32-exact):
        #   gates = h @ (W_out^T W_ih^T + W_hh^T) + (b_out W_ih^T + b)
        assert out_dim == in_dim, "infer mode feeds traj back as LSTM input"
        gate_w = jnp.dot(w_out_t, w_ih_t,
                         precision=lax.Precision.HIGHEST) + w_hh_t  # (H, 4H)
        gate_b = jnp.dot(b_out, w_ih_t,
                         precision=lax.Precision.HIGHEST) + b       # (1, 4H)
        args += [w_ih_t, w_hh_t, b, gate_w, gate_b, w_out_t, b_out]
    else:
        args += [pred_traj_gt.reshape(PRED_LEN * num_ped, in_dim),
                 w_ih_t, w_hh_t, b, w_out_t, b_out]

    kernel = functools.partial(lstm_model_kernel, bool(infer))
    vmem = lambda: pl.BlockSpec(memory_space=pltpu.MemorySpace.VMEM)

    return pl.pallas_call(
        kernel,
        out_shape=jax.ShapeDtypeStruct((PRED_LEN, num_ped, out_dim),
                                       jnp.float32),
        in_specs=[vmem() for _ in args],
        out_specs=vmem(),
    )(*args)


# ---------------------------------------------------------------------------
# Pure-JAX reference (ground truth, f32-accurate matmuls)
# ---------------------------------------------------------------------------
def lstm_model_reference(obs_traj, pred_traj_gt, params, *, infer):
    H = params["w_hh"].shape[1]
    num_ped = obs_traj.shape[1]
    w_ih_t = params["w_ih"].T
    w_hh_t = params["w_hh"].T
    b = (params["b_ih"] + params["b_hh"]).reshape(1, -1)
    w_out_t = params["w_out"].T
    b_out = params["b_out"].reshape(1, -1)
    dot = functools.partial(jnp.dot, precision=lax.Precision.HIGHEST)

    def cell(x, h, c):
        g = dot(x, w_ih_t) + dot(h, w_hh_t) + b
        i_g = jax.nn.sigmoid(g[:, 0 * H:1 * H])
        f_g = jax.nn.sigmoid(g[:, 1 * H:2 * H])
        g_g = jnp.tanh(g[:, 2 * H:3 * H])
        o_g = jax.nn.sigmoid(g[:, 3 * H:4 * H])
        c_n = f_g * c + i_g * g_g
        return o_g * jnp.tanh(c_n), c_n

    h = jnp.zeros((num_ped, H), jnp.float32)
    c = jnp.zeros((num_ped, H), jnp.float32)
    for t in range(obs_traj.shape[0]):
        h, c = cell(obs_traj[t], h, c)
    preds = []
    for i in range(PRED_LEN):
        traj = dot(h, w_out_t) + b_out
        preds.append(traj)
        x = traj if infer else pred_traj_gt[i]
        h, c = cell(x, h, c)
    return jnp.stack(preds, axis=0)


# ---------------------------------------------------------------------------
# Main
# ---------------------------------------------------------------------------
if __name__ == "__main__":
    # Small config consistent with the module:
    #   input to lstm_layer is 2-D (x, y), output_dim = 2, num_layers = 1.
    obs_len, num_ped, in_dim = 8, 4, 2
    rnn_dim, out_dim = 32, 2

    key = jax.random.PRNGKey(0)
    ks = jax.random.split(key, 8)
    bound = 1.0 / jnp.sqrt(rnn_dim)

    params = {
        "w_ih": jax.random.uniform(ks[0], (4 * rnn_dim, in_dim),
                                   jnp.float32, -bound, bound),
        "w_hh": jax.random.uniform(ks[1], (4 * rnn_dim, rnn_dim),
                                   jnp.float32, -bound, bound),
        "b_ih": jax.random.uniform(ks[2], (4 * rnn_dim,),
                                   jnp.float32, -bound, bound),
        "b_hh": jax.random.uniform(ks[3], (4 * rnn_dim,),
                                   jnp.float32, -bound, bound),
        "w_out": jax.random.uniform(ks[4], (out_dim, rnn_dim),
                                    jnp.float32, -bound, bound),
        "b_out": jax.random.uniform(ks[5], (out_dim,),
                                    jnp.float32, -bound, bound),
    }

    obs_traj = jax.random.normal(ks[6], (obs_len, num_ped, in_dim), jnp.float32)
    pred_traj_gt = jax.random.normal(ks[7], (PRED_LEN, num_ped, in_dim),
                                     jnp.float32)

    ok = True
    for infer in (True, False):
        pred = lstm_model_forward(obs_traj, pred_traj_gt, params, infer=infer)
        pred = jax.block_until_ready(pred)
        ref = lstm_model_reference(obs_traj, pred_traj_gt, params, infer=infer)
        assert pred.shape == (PRED_LEN, num_ped, out_dim)
        # Kernel uses default (bf16-pass) MXU precision over a 20-step
        # recurrence, so compare against the f32-accurate reference with a
        # correspondingly modest tolerance.
        err = float(jnp.max(jnp.abs(pred - ref)))
        assert jnp.allclose(pred, ref, rtol=1e-2, atol=1e-2), (
            f"infer={infer}: max abs err {err}")
        ok = ok and True

    if ok:
        print("KERNEL_OK")
</pallas_src>

<mosaic_0001>
module attributes {stable_mosaic.version = 11 : i64} {
  func.func @lstm_model_kernel(%arg0: memref<32x2xf32, #tpu.memory_space<vmem>>, %arg1: memref<2x128xf32, #tpu.memory_space<vmem>>, %arg2: memref<32x128xf32, #tpu.memory_space<vmem>>, %arg3: memref<1x128xf32, #tpu.memory_space<vmem>>, %arg4: memref<32x128xf32, #tpu.memory_space<vmem>>, %arg5: memref<1x128xf32, #tpu.memory_space<vmem>>, %arg6: memref<32x2xf32, #tpu.memory_space<vmem>>, %arg7: memref<1x2xf32, #tpu.memory_space<vmem>>, %arg8: memref<12x4x2xf32, #tpu.memory_space<vmem>>) attributes {dimension_semantics = [], scalar_prefetch = 0 : i64, scratch_operands = 0 : i64, tpu.core_type = #tpu.core_type<tc>} {
    %c0 = arith.constant 0 : index
    %c0_0 = arith.constant 0 : index
    %0 = vector.load %arg2[%c0, %c0_0] : memref<32x128xf32, #tpu.memory_space<vmem>>, vector<32x128xf32>
    %c0_1 = arith.constant 0 : index
    %c0_2 = arith.constant 0 : index
    %1 = vector.load %arg6[%c0_1, %c0_2] : memref<32x2xf32, #tpu.memory_space<vmem>>, vector<32x2xf32>
    %c0_3 = arith.constant 0 : index
    %c0_4 = arith.constant 0 : index
    %2 = vector.load %arg4[%c0_3, %c0_4] : memref<32x128xf32, #tpu.memory_space<vmem>>, vector<32x128xf32>
    %c0_5 = arith.constant 0 : index
    %c0_6 = arith.constant 0 : index
    %3 = vector.load %arg5[%c0_5, %c0_6] : memref<1x128xf32, #tpu.memory_space<vmem>>, vector<1x128xf32>
    %4 = vector.shape_cast %3 : vector<1x128xf32> to vector<1x128xf32>
    %5 = vector.broadcast %4 : vector<1x128xf32> to vector<4x128xf32>
    %c0_7 = arith.constant 0 : index
    %c0_8 = arith.constant 0 : index
    %6 = vector.load %arg7[%c0_7, %c0_8] : memref<1x2xf32, #tpu.memory_space<vmem>>, vector<1x2xf32>
    %7 = vector.shape_cast %6 : vector<1x2xf32> to vector<1x2xf32>
    %8 = vector.broadcast %7 : vector<1x2xf32> to vector<4x2xf32>
    %c0_9 = arith.constant 0 : index
    %c0_10 = arith.constant 0 : index
    %9 = vector.load %arg0[%c0_9, %c0_10] : memref<32x2xf32, #tpu.memory_space<vmem>>, vector<32x2xf32>
    %c0_11 = arith.constant 0 : index
    %c0_12 = arith.constant 0 : index
    %10 = vector.load %arg1[%c0_11, %c0_12] : memref<2x128xf32, #tpu.memory_space<vmem>>, vector<2x128xf32>
    %cst = arith.constant dense<0.000000e+00> : vector<32x128xf32>
    %11 = tpu.matmul %9, %10, %cst {dimension_numbers = #tpu.dot_dimension_numbers<[1], [0], [0], [1], [0, 0, 1, 1], [], []>} : vector<32x2xf32>, vector<2x128xf32>, vector<32x128xf32> -> vector<32x128xf32>
    %c0_13 = arith.constant 0 : index
    %c0_14 = arith.constant 0 : index
    %12 = vector.load %arg3[%c0_13, %c0_14] : memref<1x128xf32, #tpu.memory_space<vmem>>, vector<1x128xf32>
    %13 = vector.broadcast %12 : vector<1x128xf32> to vector<32x128xf32>
    %14 = arith.addf %11, %13 : vector<32x128xf32>
    %cst_15 = arith.constant 0.000000e+00 : f32
    %15 = vector.broadcast %cst_15 : f32 to vector<4x32xf32>
    %cst_16 = arith.constant 0.000000e+00 : f32
    %16 = vector.broadcast %cst_16 : f32 to vector<4x32xf32>
    %17 = vector.extract_strided_slice %14 {offsets = [0, 0], sizes = [4, 128], strides = [1, 1]} : vector<32x128xf32> to vector<4x128xf32>
    %cst_17 = arith.constant dense<0.000000e+00> : vector<4x128xf32>
    %18 = tpu.matmul %15, %0, %cst_17 {dimension_numbers = #tpu.dot_dimension_numbers<[1], [0], [0], [1], [0, 0, 1, 1], [], []>} : vector<4x32xf32>, vector<32x128xf32>, vector<4x128xf32> -> vector<4x128xf32>
    %19 = arith.addf %17, %18 : vector<4x128xf32>
    %20 = arith.negf %19 : vector<4x128xf32>
    %21 = math.exp %20 : vector<4x128xf32>
    %cst_18 = arith.constant 1.000000e+00 : f32
    %22 = vector.broadcast %cst_18 : f32 to vector<4x128xf32>
    %23 = arith.addf %22, %21 : vector<4x128xf32>
    %24 = arith.divf %22, %23 : vector<4x128xf32>
    %25 = math.tanh %19 : vector<4x128xf32>
    %26 = vector.extract_strided_slice %24 {offsets = [0, 0], sizes = [4, 32], strides = [1, 1]} : vector<4x128xf32> to vector<4x32xf32>
    %27 = vector.extract_strided_slice %24 {offsets = [0, 32], sizes = [4, 32], strides = [1, 1]} : vector<4x128xf32> to vector<4x32xf32>
    %28 = vector.extract_strided_slice %25 {offsets = [0, 64], sizes = [4, 32], strides = [1, 1]} : vector<4x128xf32> to vector<4x32xf32>
    %29 = vector.extract_strided_slice %24 {offsets = [0, 96], sizes = [4, 32], strides = [1, 1]} : vector<4x128xf32> to vector<4x32xf32>
    %30 = arith.mulf %27, %16 : vector<4x32xf32>
    %31 = arith.mulf %26, %28 : vector<4x32xf32>
    %32 = arith.addf %30, %31 : vector<4x32xf32>
    %33 = math.tanh %32 : vector<4x32xf32>
    %34 = arith.mulf %29, %33 : vector<4x32xf32>
    %35 = vector.extract_strided_slice %14 {offsets = [4, 0], sizes = [4, 128], strides = [1, 1]} : vector<32x128xf32> to vector<4x128xf32>
    %cst_19 = arith.constant dense<0.000000e+00> : vector<4x128xf32>
    %36 = tpu.matmul %34, %0, %cst_19 {dimension_numbers = #tpu.dot_dimension_numbers<[1], [0], [0], [1], [0, 0, 1, 1], [], []>} : vector<4x32xf32>, vector<32x128xf32>, vector<4x128xf32> -> vector<4x128xf32>
    %37 = arith.addf %35, %36 : vector<4x128xf32>
    %38 = arith.negf %37 : vector<4x128xf32>
    %39 = math.exp %38 : vector<4x128xf32>
    %cst_20 = arith.constant 1.000000e+00 : f32
    %40 = vector.broadcast %cst_20 : f32 to vector<4x128xf32>
    %41 = arith.addf %40, %39 : vector<4x128xf32>
    %42 = arith.divf %40, %41 : vector<4x128xf32>
    %43 = math.tanh %37 : vector<4x128xf32>
    %44 = vector.extract_strided_slice %42 {offsets = [0, 0], sizes = [4, 32], strides = [1, 1]} : vector<4x128xf32> to vector<4x32xf32>
    %45 = vector.extract_strided_slice %42 {offsets = [0, 32], sizes = [4, 32], strides = [1, 1]} : vector<4x128xf32> to vector<4x32xf32>
    %46 = vector.extract_strided_slice %43 {offsets = [0, 64], sizes = [4, 32], strides = [1, 1]} : vector<4x128xf32> to vector<4x32xf32>
    %47 = vector.extract_strided_slice %42 {offsets = [0, 96], sizes = [4, 32], strides = [1, 1]} : vector<4x128xf32> to vector<4x32xf32>
    %48 = arith.mulf %45, %32 : vector<4x32xf32>
    %49 = arith.mulf %44, %46 : vector<4x32xf32>
    %50 = arith.addf %48, %49 : vector<4x32xf32>
    %51 = math.tanh %50 : vector<4x32xf32>
    %52 = arith.mulf %47, %51 : vector<4x32xf32>
    %53 = vector.extract_strided_slice %14 {offsets = [8, 0], sizes = [4, 128], strides = [1, 1]} : vector<32x128xf32> to vector<4x128xf32>
    %cst_21 = arith.constant dense<0.000000e+00> : vector<4x128xf32>
    %54 = tpu.matmul %52, %0, %cst_21 {dimension_numbers = #tpu.dot_dimension_numbers<[1], [0], [0], [1], [0, 0, 1, 1], [], []>} : vector<4x32xf32>, vector<32x128xf32>, vector<4x128xf32> -> vector<4x128xf32>
    %55 = arith.addf %53, %54 : vector<4x128xf32>
    %56 = arith.negf %55 : vector<4x128xf32>
    %57 = math.exp %56 : vector<4x128xf32>
    %cst_22 = arith.constant 1.000000e+00 : f32
    %58 = vector.broadcast %cst_22 : f32 to vector<4x128xf32>
    %59 = arith.addf %58, %57 : vector<4x128xf32>
    %60 = arith.divf %58, %59 : vector<4x128xf32>
    %61 = math.tanh %55 : vector<4x128xf32>
    %62 = vector.extract_strided_slice %60 {offsets = [0, 0], sizes = [4, 32], strides = [1, 1]} : vector<4x128xf32> to vector<4x32xf32>
    %63 = vector.extract_strided_slice %60 {offsets = [0, 32], sizes = [4, 32], strides = [1, 1]} : vector<4x128xf32> to vector<4x32xf32>
    %64 = vector.extract_strided_slice %61 {offsets = [0, 64], sizes = [4, 32], strides = [1, 1]} : vector<4x128xf32> to vector<4x32xf32>
    %65 = vector.extract_strided_slice %60 {offsets = [0, 96], sizes = [4, 32], strides = [1, 1]} : vector<4x128xf32> to vector<4x32xf32>
    %66 = arith.mulf %63, %50 : vector<4x32xf32>
    %67 = arith.mulf %62, %64 : vector<4x32xf32>
    %68 = arith.addf %66, %67 : vector<4x32xf32>
    %69 = math.tanh %68 : vector<4x32xf32>
    %70 = arith.mulf %65, %69 : vector<4x32xf32>
    %71 = vector.extract_strided_slice %14 {offsets = [12, 0], sizes = [4, 128], strides = [1, 1]} : vector<32x128xf32> to vector<4x128xf32>
    %cst_23 = arith.constant dense<0.000000e+00> : vector<4x128xf32>
    %72 = tpu.matmul %70, %0, %cst_23 {dimension_numbers = #tpu.dot_dimension_numbers<[1], [0], [0], [1], [0, 0, 1, 1], [], []>} : vector<4x32xf32>, vector<32x128xf32>, vector<4x128xf32> -> vector<4x128xf32>
    %73 = arith.addf %71, %72 : vector<4x128xf32>
    %74 = arith.negf %73 : vector<4x128xf32>
    %75 = math.exp %74 : vector<4x128xf32>
    %cst_24 = arith.constant 1.000000e+00 : f32
    %76 = vector.broadcast %cst_24 : f32 to vector<4x128xf32>
    %77 = arith.addf %76, %75 : vector<4x128xf32>
    %78 = arith.divf %76, %77 : vector<4x128xf32>
    %79 = math.tanh %73 : vector<4x128xf32>
    %80 = vector.extract_strided_slice %78 {offsets = [0, 0], sizes = [4, 32], strides = [1, 1]} : vector<4x128xf32> to vector<4x32xf32>
    %81 = vector.extract_strided_slice %78 {offsets = [0, 32], sizes = [4, 32], strides = [1, 1]} : vector<4x128xf32> to vector<4x32xf32>
    %82 = vector.extract_strided_slice %79 {offsets = [0, 64], sizes = [4, 32], strides = [1, 1]} : vector<4x128xf32> to vector<4x32xf32>
    %83 = vector.extract_strided_slice %78 {offsets = [0, 96], sizes = [4, 32], strides = [1, 1]} : vector<4x128xf32> to vector<4x32xf32>
    %84 = arith.mulf %81, %68 : vector<4x32xf32>
    %85 = arith.mulf %80, %82 : vector<4x32xf32>
    %86 = arith.addf %84, %85 : vector<4x32xf32>
    %87 = math.tanh %86 : vector<4x32xf32>
    %88 = arith.mulf %83, %87 : vector<4x32xf32>
    %89 = vector.extract_strided_slice %14 {offsets = [16, 0], sizes = [4, 128], strides = [1, 1]} : vector<32x128xf32> to vector<4x128xf32>
    %cst_25 = arith.constant dense<0.000000e+00> : vector<4x128xf32>
    %90 = tpu.matmul %88, %0, %cst_25 {dimension_numbers = #tpu.dot_dimension_numbers<[1], [0], [0], [1], [0, 0, 1, 1], [], []>} : vector<4x32xf32>, vector<32x128xf32>, vector<4x128xf32> -> vector<4x128xf32>
    %91 = arith.addf %89, %90 : vector<4x128xf32>
    %92 = arith.negf %91 : vector<4x128xf32>
    %93 = math.exp %92 : vector<4x128xf32>
    %cst_26 = arith.constant 1.000000e+00 : f32
    %94 = vector.broadcast %cst_26 : f32 to vector<4x128xf32>
    %95 = arith.addf %94, %93 : vector<4x128xf32>
    %96 = arith.divf %94, %95 : vector<4x128xf32>
    %97 = math.tanh %91 : vector<4x128xf32>
    %98 = vector.extract_strided_slice %96 {offsets = [0, 0], sizes = [4, 32], strides = [1, 1]} : vector<4x128xf32> to vector<4x32xf32>
    %99 = vector.extract_strided_slice %96 {offsets = [0, 32], sizes = [4, 32], strides = [1, 1]} : vector<4x128xf32> to vector<4x32xf32>
    %100 = vector.extract_strided_slice %97 {offsets = [0, 64], sizes = [4, 32], strides = [1, 1]} : vector<4x128xf32> to vector<4x32xf32>
    %101 = vector.extract_strided_slice %96 {offsets = [0, 96], sizes = [4, 32], strides = [1, 1]} : vector<4x128xf32> to vector<4x32xf32>
    %102 = arith.mulf %99, %86 : vector<4x32xf32>
    %103 = arith.mulf %98, %100 : vector<4x32xf32>
    %104 = arith.addf %102, %103 : vector<4x32xf32>
    %105 = math.tanh %104 : vector<4x32xf32>
    %106 = arith.mulf %101, %105 : vector<4x32xf32>
    %107 = vector.extract_strided_slice %14 {offsets = [20, 0], sizes = [4, 128], strides = [1, 1]} : vector<32x128xf32> to vector<4x128xf32>
    %cst_27 = arith.constant dense<0.000000e+00> : vector<4x128xf32>
    %108 = tpu.matmul %106, %0, %cst_27 {dimension_numbers = #tpu.dot_dimension_numbers<[1], [0], [0], [1], [0, 0, 1, 1], [], []>} : vector<4x32xf32>, vector<32x128xf32>, vector<4x128xf32> -> vector<4x128xf32>
    %109 = arith.addf %107, %108 : vector<4x128xf32>
    %110 = arith.negf %109 : vector<4x128xf32>
    %111 = math.exp %110 : vector<4x128xf32>
    %cst_28 = arith.constant 1.000000e+00 : f32
    %112 = vector.broadcast %cst_28 : f32 to vector<4x128xf32>
    %113 = arith.addf %112, %111 : vector<4x128xf32>
    %114 = arith.divf %112, %113 : vector<4x128xf32>
    %115 = math.tanh %109 : vector<4x128xf32>
    %116 = vector.extract_strided_slice %114 {offsets = [0, 0], sizes = [4, 32], strides = [1, 1]} : vector<4x128xf32> to vector<4x32xf32>
    %117 = vector.extract_strided_slice %114 {offsets = [0, 32], sizes = [4, 32], strides = [1, 1]} : vector<4x128xf32> to vector<4x32xf32>
    %118 = vector.extract_strided_slice %115 {offsets = [0, 64], sizes = [4, 32], strides = [1, 1]} : vector<4x128xf32> to vector<4x32xf32>
    %119 = vector.extract_strided_slice %114 {offsets = [0, 96], sizes = [4, 32], strides = [1, 1]} : vector<4x128xf32> to vector<4x32xf32>
    %120 = arith.mulf %117, %104 : vector<4x32xf32>
    %121 = arith.mulf %116, %118 : vector<4x32xf32>
    %122 = arith.addf %120, %121 : vector<4x32xf32>
    %123 = math.tanh %122 : vector<4x32xf32>
    %124 = arith.mulf %119, %123 : vector<4x32xf32>
    %125 = vector.extract_strided_slice %14 {offsets = [24, 0], sizes = [4, 128], strides = [1, 1]} : vector<32x128xf32> to vector<4x128xf32>
    %cst_29 = arith.constant dense<0.000000e+00> : vector<4x128xf32>
    %126 = tpu.matmul %124, %0, %cst_29 {dimension_numbers = #tpu.dot_dimension_numbers<[1], [0], [0], [1], [0, 0, 1, 1], [], []>} : vector<4x32xf32>, vector<32x128xf32>, vector<4x128xf32> -> vector<4x128xf32>
    %127 = arith.addf %125, %126 : vector<4x128xf32>
    %128 = arith.negf %127 : vector<4x128xf32>
    %129 = math.exp %128 : vector<4x128xf32>
    %cst_30 = arith.constant 1.000000e+00 : f32
    %130 = vector.broadcast %cst_30 : f32 to vector<4x128xf32>
    %131 = arith.addf %130, %129 : vector<4x128xf32>
    %132 = arith.divf %130, %131 : vector<4x128xf32>
    %133 = math.tanh %127 : vector<4x128xf32>
    %134 = vector.extract_strided_slice %132 {offsets = [0, 0], sizes = [4, 32], strides = [1, 1]} : vector<4x128xf32> to vector<4x32xf32>
    %135 = vector.extract_strided_slice %132 {offsets = [0, 32], sizes = [4, 32], strides = [1, 1]} : vector<4x128xf32> to vector<4x32xf32>
    %136 = vector.extract_strided_slice %133 {offsets = [0, 64], sizes = [4, 32], strides = [1, 1]} : vector<4x128xf32> to vector<4x32xf32>
    %137 = vector.extract_strided_slice %132 {offsets = [0, 96], sizes = [4, 32], strides = [1, 1]} : vector<4x128xf32> to vector<4x32xf32>
    %138 = arith.mulf %135, %122 : vector<4x32xf32>
    %139 = arith.mulf %134, %136 : vector<4x32xf32>
    %140 = arith.addf %138, %139 : vector<4x32xf32>
    %141 = math.tanh %140 : vector<4x32xf32>
    %142 = arith.mulf %137, %141 : vector<4x32xf32>
    %143 = vector.extract_strided_slice %14 {offsets = [28, 0], sizes = [4, 128], strides = [1, 1]} : vector<32x128xf32> to vector<4x128xf32>
    %cst_31 = arith.constant dense<0.000000e+00> : vector<4x128xf32>
    %144 = tpu.matmul %142, %0, %cst_31 {dimension_numbers = #tpu.dot_dimension_numbers<[1], [0], [0], [1], [0, 0, 1, 1], [], []>} : vector<4x32xf32>, vector<32x128xf32>, vector<4x128xf32> -> vector<4x128xf32>
    %145 = arith.addf %143, %144 : vector<4x128xf32>
    %146 = arith.negf %145 : vector<4x128xf32>
    %147 = math.exp %146 : vector<4x128xf32>
    %cst_32 = arith.constant 1.000000e+00 : f32
    %148 = vector.broadcast %cst_32 : f32 to vector<4x128xf32>
    %149 = arith.addf %148, %147 : vector<4x128xf32>
    %150 = arith.divf %148, %149 : vector<4x128xf32>
    %151 = math.tanh %145 : vector<4x128xf32>
    %152 = vector.extract_strided_slice %150 {offsets = [0, 0], sizes = [4, 32], strides = [1, 1]} : vector<4x128xf32> to vector<4x32xf32>
    %153 = vector.extract_strided_slice %150 {offsets = [0, 32], sizes = [4, 32], strides = [1, 1]} : vector<4x128xf32> to vector<4x32xf32>
    %154 = vector.extract_strided_slice %151 {offsets = [0, 64], sizes = [4, 32], strides = [1, 1]} : vector<4x128xf32> to vector<4x32xf32>
    %155 = vector.extract_strided_slice %150 {offsets = [0, 96], sizes = [4, 32], strides = [1, 1]} : vector<4x128xf32> to vector<4x32xf32>
    %156 = arith.mulf %153, %140 : vector<4x32xf32>
    %157 = arith.mulf %152, %154 : vector<4x32xf32>
    %158 = arith.addf %156, %157 : vector<4x32xf32>
    %159 = math.tanh %158 : vector<4x32xf32>
    %160 = arith.mulf %155, %159 : vector<4x32xf32>
    %cst_33 = arith.constant dense<0.000000e+00> : vector<4x2xf32>
    %161 = tpu.matmul %160, %1, %cst_33 {dimension_numbers = #tpu.dot_dimension_numbers<[1], [0], [0], [1], [0, 0, 1, 1], [], []>} : vector<4x32xf32>, vector<32x2xf32>, vector<4x2xf32> -> vector<4x2xf32>
    %162 = arith.addf %161, %8 : vector<4x2xf32>
    %c0_34 = arith.constant 0 : index
    %c0_35 = arith.constant 0 : index
    %c0_36 = arith.constant 0 : index
    %163 = vector.load %arg8[%c0_34, %c0_35, %c0_36] : memref<12x4x2xf32, #tpu.memory_space<vmem>>, vector<1x4x2xf32>
    %164 = vector.shape_cast %163 : vector<1x4x2xf32> to vector<4x2xf32>
    %165 = vector.shape_cast %162 : vector<4x2xf32> to vector<1x4x2xf32>
    tpu.vector_store %arg8[%c0_34, %c0_35, %c0_36], %165 {strides = array<i32>} : memref<12x4x2xf32, #tpu.memory_space<vmem>>, vector<1x4x2xf32>,
    %cst_37 = arith.constant dense<0.000000e+00> : vector<4x128xf32>
    %166 = tpu.matmul %160, %2, %cst_37 {dimension_numbers = #tpu.dot_dimension_numbers<[1], [0], [0], [1], [0, 0, 1, 1], [], []>} : vector<4x32xf32>, vector<32x128xf32>, vector<4x128xf32> -> vector<4x128xf32>
    %167 = arith.addf %166, %5 : vector<4x128xf32>
    %168 = arith.negf %167 : vector<4x128xf32>
    %169 = math.exp %168 : vector<4x128xf32>
    %cst_38 = arith.constant 1.000000e+00 : f32
    %170 = vector.broadcast %cst_38 : f32 to vector<4x128xf32>
    %171 = arith.addf %170, %169 : vector<4x128xf32>
    %172 = arith.divf %170, %171 : vector<4x128xf32>
    %173 = math.tanh %167 : vector<4x128xf32>
    %174 = vector.extract_strided_slice %172 {offsets = [0, 0], sizes = [4, 32], strides = [1, 1]} : vector<4x128xf32> to vector<4x32xf32>
    %175 = vector.extract_strided_slice %172 {offsets = [0, 32], sizes = [4, 32], strides = [1, 1]} : vector<4x128xf32> to vector<4x32xf32>
    %176 = vector.extract_strided_slice %173 {offsets = [0, 64], sizes = [4, 32], strides = [1, 1]} : vector<4x128xf32> to vector<4x32xf32>
    %177 = vector.extract_strided_slice %172 {offsets = [0, 96], sizes = [4, 32], strides = [1, 1]} : vector<4x128xf32> to vector<4x32xf32>
    %178 = arith.mulf %175, %158 : vector<4x32xf32>
    %179 = arith.mulf %174, %176 : vector<4x32xf32>
    %180 = arith.addf %178, %179 : vector<4x32xf32>
    %181 = math.tanh %180 : vector<4x32xf32>
    %182 = arith.mulf %177, %181 : vector<4x32xf32>
    %cst_39 = arith.constant dense<0.000000e+00> : vector<4x2xf32>
    %183 = tpu.matmul %182, %1, %cst_39 {dimension_numbers = #tpu.dot_dimension_numbers<[1], [0], [0], [1], [0, 0, 1, 1], [], []>} : vector<4x32xf32>, vector<32x2xf32>, vector<4x2xf32> -> vector<4x2xf32>
    %184 = arith.addf %183, %8 : vector<4x2xf32>
    %c1 = arith.constant 1 : index
    %c0_40 = arith.constant 0 : index
    %c0_41 = arith.constant 0 : index
    %185 = vector.load %arg8[%c1, %c0_40, %c0_41] : memref<12x4x2xf32, #tpu.memory_space<vmem>>, vector<1x4x2xf32>
    %186 = vector.shape_cast %185 : vector<1x4x2xf32> to vector<4x2xf32>
    %187 = vector.shape_cast %184 : vector<4x2xf32> to vector<1x4x2xf32>
    tpu.vector_store %arg8[%c1, %c0_40, %c0_41], %187 {strides = array<i32>} : memref<12x4x2xf32, #tpu.memory_space<vmem>>, vector<1x4x2xf32>,
    %cst_42 = arith.constant dense<0.000000e+00> : vector<4x128xf32>
    %188 = tpu.matmul %182, %2, %cst_42 {dimension_numbers = #tpu.dot_dimension_numbers<[1], [0], [0], [1], [0, 0, 1, 1], [], []>} : vector<4x32xf32>, vector<32x128xf32>, vector<4x128xf32> -> vector<4x128xf32>
    %189 = arith.addf %188, %5 : vector<4x128xf32>
    %190 = arith.negf %189 : vector<4x128xf32>
    %191 = math.exp %190 : vector<4x128xf32>
    %cst_43 = arith.constant 1.000000e+00 : f32
    %192 = vector.broadcast %cst_43 : f32 to vector<4x128xf32>
    %193 = arith.addf %192, %191 : vector<4x128xf32>
    %194 = arith.divf %192, %193 : vector<4x128xf32>
    %195 = math.tanh %189 : vector<4x128xf32>
    %196 = vector.extract_strided_slice %194 {offsets = [0, 0], sizes = [4, 32], strides = [1, 1]} : vector<4x128xf32> to vector<4x32xf32>
    %197 = vector.extract_strided_slice %194 {offsets = [0, 32], sizes = [4, 32], strides = [1, 1]} : vector<4x128xf32> to vector<4x32xf32>
    %198 = vector.extract_strided_slice %195 {offsets = [0, 64], sizes = [4, 32], strides = [1, 1]} : vector<4x128xf32> to vector<4x32xf32>
    %199 = vector.extract_strided_slice %194 {offsets = [0, 96], sizes = [4, 32], strides = [1, 1]} : vector<4x128xf32> to vector<4x32xf32>
    %200 = arith.mulf %197, %180 : vector<4x32xf32>
    %201 = arith.mulf %196, %198 : vector<4x32xf32>
    %202 = arith.addf %200, %201 : vector<4x32xf32>
    %203 = math.tanh %202 : vector<4x32xf32>
    %204 = arith.mulf %199, %203 : vector<4x32xf32>
    %cst_44 = arith.constant dense<0.000000e+00> : vector<4x2xf32>
    %205 = tpu.matmul %204, %1, %cst_44 {dimension_numbers = #tpu.dot_dimension_numbers<[1], [0], [0], [1], [0, 0, 1, 1], [], []>} : vector<4x32xf32>, vector<32x2xf32>, vector<4x2xf32> -> vector<4x2xf32>
    %206 = arith.addf %205, %8 : vector<4x2xf32>
    %c2 = arith.constant 2 : index
    %c0_45 = arith.constant 0 : index
    %c0_46 = arith.constant 0 : index
    %207 = vector.load %arg8[%c2, %c0_45, %c0_46] : memref<12x4x2xf32, #tpu.memory_space<vmem>>, vector<1x4x2xf32>
    %208 = vector.shape_cast %207 : vector<1x4x2xf32> to vector<4x2xf32>
    %209 = vector.shape_cast %206 : vector<4x2xf32> to vector<1x4x2xf32>
    tpu.vector_store %arg8[%c2, %c0_45, %c0_46], %209 {strides = array<i32>} : memref<12x4x2xf32, #tpu.memory_space<vmem>>, vector<1x4x2xf32>,
    %cst_47 = arith.constant dense<0.000000e+00> : vector<4x128xf32>
    %210 = tpu.matmul %204, %2, %cst_47 {dimension_numbers = #tpu.dot_dimension_numbers<[1], [0], [0], [1], [0, 0, 1, 1], [], []>} : vector<4x32xf32>, vector<32x128xf32>, vector<4x128xf32> -> vector<4x128xf32>
    %211 = arith.addf %210, %5 : vector<4x128xf32>
    %212 = arith.negf %211 : vector<4x128xf32>
    %213 = math.exp %212 : vector<4x128xf32>
    %cst_48 = arith.constant 1.000000e+00 : f32
    %214 = vector.broadcast %cst_48 : f32 to vector<4x128xf32>
    %215 = arith.addf %214, %213 : vector<4x128xf32>
    %216 = arith.divf %214, %215 : vector<4x128xf32>
    %217 = math.tanh %211 : vector<4x128xf32>
    %218 = vector.extract_strided_slice %216 {offsets = [0, 0], sizes = [4, 32], strides = [1, 1]} : vector<4x128xf32> to vector<4x32xf32>
    %219 = vector.extract_strided_slice %216 {offsets = [0, 32], sizes = [4, 32], strides = [1, 1]} : vector<4x128xf32> to vector<4x32xf32>
    %220 = vector.extract_strided_slice %217 {offsets = [0, 64], sizes = [4, 32], strides = [1, 1]} : vector<4x128xf32> to vector<4x32xf32>
    %221 = vector.extract_strided_slice %216 {offsets = [0, 96], sizes = [4, 32], strides = [1, 1]} : vector<4x128xf32> to vector<4x32xf32>
    %222 = arith.mulf %219, %202 : vector<4x32xf32>
    %223 = arith.mulf %218, %220 : vector<4x32xf32>
    %224 = arith.addf %222, %223 : vector<4x32xf32>
    %225 = math.tanh %224 : vector<4x32xf32>
    %226 = arith.mulf %221, %225 : vector<4x32xf32>
    %cst_49 = arith.constant dense<0.000000e+00> : vector<4x2xf32>
    %227 = tpu.matmul %226, %1, %cst_49 {dimension_numbers = #tpu.dot_dimension_numbers<[1], [0], [0], [1], [0, 0, 1, 1], [], []>} : vector<4x32xf32>, vector<32x2xf32>, vector<4x2xf32> -> vector<4x2xf32>
    %228 = arith.addf %227, %8 : vector<4x2xf32>
    %c3 = arith.constant 3 : index
    %c0_50 = arith.constant 0 : index
    %c0_51 = arith.constant 0 : index
    %229 = vector.load %arg8[%c3, %c0_50, %c0_51] : memref<12x4x2xf32, #tpu.memory_space<vmem>>, vector<1x4x2xf32>
    %230 = vector.shape_cast %229 : vector<1x4x2xf32> to vector<4x2xf32>
    %231 = vector.shape_cast %228 : vector<4x2xf32> to vector<1x4x2xf32>
    tpu.vector_store %arg8[%c3, %c0_50, %c0_51], %231 {strides = array<i32>} : memref<12x4x2xf32, #tpu.memory_space<vmem>>, vector<1x4x2xf32>,
    %cst_52 = arith.constant dense<0.000000e+00> : vector<4x128xf32>
    %232 = tpu.matmul %226, %2, %cst_52 {dimension_numbers = #tpu.dot_dimension_numbers<[1], [0], [0], [1], [0, 0, 1, 1], [], []>} : vector<4x32xf32>, vector<32x128xf32>, vector<4x128xf32> -> vector<4x128xf32>
    %233 = arith.addf %232, %5 : vector<4x128xf32>
    %234 = arith.negf %233 : vector<4x128xf32>
    %235 = math.exp %234 : vector<4x128xf32>
    %cst_53 = arith.constant 1.000000e+00 : f32
    %236 = vector.broadcast %cst_53 : f32 to vector<4x128xf32>
    %237 = arith.addf %236, %235 : vector<4x128xf32>
    %238 = arith.divf %236, %237 : vector<4x128xf32>
    %239 = math.tanh %233 : vector<4x128xf32>
    %240 = vector.extract_strided_slice %238 {offsets = [0, 0], sizes = [4, 32], strides = [1, 1]} : vector<4x128xf32> to vector<4x32xf32>
    %241 = vector.extract_strided_slice %238 {offsets = [0, 32], sizes = [4, 32], strides = [1, 1]} : vector<4x128xf32> to vector<4x32xf32>
    %242 = vector.extract_strided_slice %239 {offsets = [0, 64], sizes = [4, 32], strides = [1, 1]} : vector<4x128xf32> to vector<4x32xf32>
    %243 = vector.extract_strided_slice %238 {offsets = [0, 96], sizes = [4, 32], strides = [1, 1]} : vector<4x128xf32> to vector<4x32xf32>
    %244 = arith.mulf %241, %224 : vector<4x32xf32>
    %245 = arith.mulf %240, %242 : vector<4x32xf32>
    %246 = arith.addf %244, %245 : vector<4x32xf32>
    %247 = math.tanh %246 : vector<4x32xf32>
    %248 = arith.mulf %243, %247 : vector<4x32xf32>
    %cst_54 = arith.constant dense<0.000000e+00> : vector<4x2xf32>
    %249 = tpu.matmul %248, %1, %cst_54 {dimension_numbers = #tpu.dot_dimension_numbers<[1], [0], [0], [1], [0, 0, 1, 1], [], []>} : vector<4x32xf32>, vector<32x2xf32>, vector<4x2xf32> -> vector<4x2xf32>
    %250 = arith.addf %249, %8 : vector<4x2xf32>
    %c4 = arith.constant 4 : index
    %c0_55 = arith.constant 0 : index
    %c0_56 = arith.constant 0 : index
    %251 = vector.load %arg8[%c4, %c0_55, %c0_56] : memref<12x4x2xf32, #tpu.memory_space<vmem>>, vector<1x4x2xf32>
    %252 = vector.shape_cast %251 : vector<1x4x2xf32> to vector<4x2xf32>
    %253 = vector.shape_cast %250 : vector<4x2xf32> to vector<1x4x2xf32>
    tpu.vector_store %arg8[%c4, %c0_55, %c0_56], %253 {strides = array<i32>} : memref<12x4x2xf32, #tpu.memory_space<vmem>>, vector<1x4x2xf32>,
    %cst_57 = arith.constant dense<0.000000e+00> : vector<4x128xf32>
    %254 = tpu.matmul %248, %2, %cst_57 {dimension_numbers = #tpu.dot_dimension_numbers<[1], [0], [0], [1], [0, 0, 1, 1], [], []>} : vector<4x32xf32>, vector<32x128xf32>, vector<4x128xf32> -> vector<4x128xf32>
    %255 = arith.addf %254, %5 : vector<4x128xf32>
    %256 = arith.negf %255 : vector<4x128xf32>
    %257 = math.exp %256 : vector<4x128xf32>
    %cst_58 = arith.constant 1.000000e+00 : f32
    %258 = vector.broadcast %cst_58 : f32 to vector<4x128xf32>
    %259 = arith.addf %258, %257 : vector<4x128xf32>
    %260 = arith.divf %258, %259 : vector<4x128xf32>
    %261 = math.tanh %255 : vector<4x128xf32>
    %262 = vector.extract_strided_slice %260 {offsets = [0, 0], sizes = [4, 32], strides = [1, 1]} : vector<4x128xf32> to vector<4x32xf32>
    %263 = vector.extract_strided_slice %260 {offsets = [0, 32], sizes = [4, 32], strides = [1, 1]} : vector<4x128xf32> to vector<4x32xf32>
    %264 = vector.extract_strided_slice %261 {offsets = [0, 64], sizes = [4, 32], strides = [1, 1]} : vector<4x128xf32> to vector<4x32xf32>
    %265 = vector.extract_strided_slice %260 {offsets = [0, 96], sizes = [4, 32], strides = [1, 1]} : vector<4x128xf32> to vector<4x32xf32>
    %266 = arith.mulf %263, %246 : vector<4x32xf32>
    %267 = arith.mulf %262, %264 : vector<4x32xf32>
    %268 = arith.addf %266, %267 : vector<4x32xf32>
    %269 = math.tanh %268 : vector<4x32xf32>
    %270 = arith.mulf %265, %269 : vector<4x32xf32>
    %cst_59 = arith.constant dense<0.000000e+00> : vector<4x2xf32>
    %271 = tpu.matmul %270, %1, %cst_59 {dimension_numbers = #tpu.dot_dimension_numbers<[1], [0], [0], [1], [0, 0, 1, 1], [], []>} : vector<4x32xf32>, vector<32x2xf32>, vector<4x2xf32> -> vector<4x2xf32>
    %272 = arith.addf %271, %8 : vector<4x2xf32>
    %c5 = arith.constant 5 : index
    %c0_60 = arith.constant 0 : index
    %c0_61 = arith.constant 0 : index
    %273 = vector.load %arg8[%c5, %c0_60, %c0_61] : memref<12x4x2xf32, #tpu.memory_space<vmem>>, vector<1x4x2xf32>
    %274 = vector.shape_cast %273 : vector<1x4x2xf32> to vector<4x2xf32>
    %275 = vector.shape_cast %272 : vector<4x2xf32> to vector<1x4x2xf32>
    tpu.vector_store %arg8[%c5, %c0_60, %c0_61], %275 {strides = array<i32>} : memref<12x4x2xf32, #tpu.memory_space<vmem>>, vector<1x4x2xf32>,
    %cst_62 = arith.constant dense<0.000000e+00> : vector<4x128xf32>
    %276 = tpu.matmul %270, %2, %cst_62 {dimension_numbers = #tpu.dot_dimension_numbers<[1], [0], [0], [1], [0, 0, 1, 1], [], []>} : vector<4x32xf32>, vector<32x128xf32>, vector<4x128xf32> -> vector<4x128xf32>
    %277 = arith.addf %276, %5 : vector<4x128xf32>
    %278 = arith.negf %277 : vector<4x128xf32>
    %279 = math.exp %278 : vector<4x128xf32>
    %cst_63 = arith.constant 1.000000e+00 : f32
    %280 = vector.broadcast %cst_63 : f32 to vector<4x128xf32>
    %281 = arith.addf %280, %279 : vector<4x128xf32>
    %282 = arith.divf %280, %281 : vector<4x128xf32>
    %283 = math.tanh %277 : vector<4x128xf32>
    %284 = vector.extract_strided_slice %282 {offsets = [0, 0], sizes = [4, 32], strides = [1, 1]} : vector<4x128xf32> to vector<4x32xf32>
    %285 = vector.extract_strided_slice %282 {offsets = [0, 32], sizes = [4, 32], strides = [1, 1]} : vector<4x128xf32> to vector<4x32xf32>
    %286 = vector.extract_strided_slice %283 {offsets = [0, 64], sizes = [4, 32], strides = [1, 1]} : vector<4x128xf32> to vector<4x32xf32>
    %287 = vector.extract_strided_slice %282 {offsets = [0, 96], sizes = [4, 32], strides = [1, 1]} : vector<4x128xf32> to vector<4x32xf32>
    %288 = arith.mulf %285, %268 : vector<4x32xf32>
    %289 = arith.mulf %284, %286 : vector<4x32xf32>
    %290 = arith.addf %288, %289 : vector<4x32xf32>
    %291 = math.tanh %290 : vector<4x32xf32>
    %292 = arith.mulf %287, %291 : vector<4x32xf32>
    %cst_64 = arith.constant dense<0.000000e+00> : vector<4x2xf32>
    %293 = tpu.matmul %292, %1, %cst_64 {dimension_numbers = #tpu.dot_dimension_numbers<[1], [0], [0], [1], [0, 0, 1, 1], [], []>} : vector<4x32xf32>, vector<32x2xf32>, vector<4x2xf32> -> vector<4x2xf32>
    %294 = arith.addf %293, %8 : vector<4x2xf32>
    %c6 = arith.constant 6 : index
    %c0_65 = arith.constant 0 : index
    %c0_66 = arith.constant 0 : index
    %295 = vector.load %arg8[%c6, %c0_65, %c0_66] : memref<12x4x2xf32, #tpu.memory_space<vmem>>, vector<1x4x2xf32>
    %296 = vector.shape_cast %295 : vector<1x4x2xf32> to vector<4x2xf32>
    %297 = vector.shape_cast %294 : vector<4x2xf32> to vector<1x4x2xf32>
    tpu.vector_store %arg8[%c6, %c0_65, %c0_66], %297 {strides = array<i32>} : memref<12x4x2xf32, #tpu.memory_space<vmem>>, vector<1x4x2xf32>,
    %cst_67 = arith.constant dense<0.000000e+00> : vector<4x128xf32>
    %298 = tpu.matmul %292, %2, %cst_67 {dimension_numbers = #tpu.dot_dimension_numbers<[1], [0], [0], [1], [0, 0, 1, 1], [], []>} : vector<4x32xf32>, vector<32x128xf32>, vector<4x128xf32> -> vector<4x128xf32>
    %299 = arith.addf %298, %5 : vector<4x128xf32>
    %300 = arith.negf %299 : vector<4x128xf32>
    %301 = math.exp %300 : vector<4x128xf32>
    %cst_68 = arith.constant 1.000000e+00 : f32
    %302 = vector.broadcast %cst_68 : f32 to vector<4x128xf32>
    %303 = arith.addf %302, %301 : vector<4x128xf32>
    %304 = arith.divf %302, %303 : vector<4x128xf32>
    %305 = math.tanh %299 : vector<4x128xf32>
    %306 = vector.extract_strided_slice %304 {offsets = [0, 0], sizes = [4, 32], strides = [1, 1]} : vector<4x128xf32> to vector<4x32xf32>
    %307 = vector.extract_strided_slice %304 {offsets = [0, 32], sizes = [4, 32], strides = [1, 1]} : vector<4x128xf32> to vector<4x32xf32>
    %308 = vector.extract_strided_slice %305 {offsets = [0, 64], sizes = [4, 32], strides = [1, 1]} : vector<4x128xf32> to vector<4x32xf32>
    %309 = vector.extract_strided_slice %304 {offsets = [0, 96], sizes = [4, 32], strides = [1, 1]} : vector<4x128xf32> to vector<4x32xf32>
    %310 = arith.mulf %307, %290 : vector<4x32xf32>
    %311 = arith.mulf %306, %308 : vector<4x32xf32>
    %312 = arith.addf %310, %311 : vector<4x32xf32>
    %313 = math.tanh %312 : vector<4x32xf32>
    %314 = arith.mulf %309, %313 : vector<4x32xf32>
    %cst_69 = arith.constant dense<0.000000e+00> : vector<4x2xf32>
    %315 = tpu.matmul %314, %1, %cst_69 {dimension_numbers = #tpu.dot_dimension_numbers<[1], [0], [0], [1], [0, 0, 1, 1], [], []>} : vector<4x32xf32>, vector<32x2xf32>, vector<4x2xf32> -> vector<4x2xf32>
    %316 = arith.addf %315, %8 : vector<4x2xf32>
    %c7 = arith.constant 7 : index
    %c0_70 = arith.constant 0 : index
    %c0_71 = arith.constant 0 : index
    %317 = vector.load %arg8[%c7, %c0_70, %c0_71] : memref<12x4x2xf32, #tpu.memory_space<vmem>>, vector<1x4x2xf32>
    %318 = vector.shape_cast %317 : vector<1x4x2xf32> to vector<4x2xf32>
    %319 = vector.shape_cast %316 : vector<4x2xf32> to vector<1x4x2xf32>
    tpu.vector_store %arg8[%c7, %c0_70, %c0_71], %319 {strides = array<i32>} : memref<12x4x2xf32, #tpu.memory_space<vmem>>, vector<1x4x2xf32>,
    %cst_72 = arith.constant dense<0.000000e+00> : vector<4x128xf32>
    %320 = tpu.matmul %314, %2, %cst_72 {dimension_numbers = #tpu.dot_dimension_numbers<[1], [0], [0], [1], [0, 0, 1, 1], [], []>} : vector<4x32xf32>, vector<32x128xf32>, vector<4x128xf32> -> vector<4x128xf32>
    %321 = arith.addf %320, %5 : vector<4x128xf32>
    %322 = arith.negf %321 : vector<4x128xf32>
    %323 = math.exp %322 : vector<4x128xf32>
    %cst_73 = arith.constant 1.000000e+00 : f32
    %324 = vector.broadcast %cst_73 : f32 to vector<4x128xf32>
    %325 = arith.addf %324, %323 : vector<4x128xf32>
    %326 = arith.divf %324, %325 : vector<4x128xf32>
    %327 = math.tanh %321 : vector<4x128xf32>
    %328 = vector.extract_strided_slice %326 {offsets = [0, 0], sizes = [4, 32], strides = [1, 1]} : vector<4x128xf32> to vector<4x32xf32>
    %329 = vector.extract_strided_slice %326 {offsets = [0, 32], sizes = [4, 32], strides = [1, 1]} : vector<4x128xf32> to vector<4x32xf32>
    %330 = vector.extract_strided_slice %327 {offsets = [0, 64], sizes = [4, 32], strides = [1, 1]} : vector<4x128xf32> to vector<4x32xf32>
    %331 = vector.extract_strided_slice %326 {offsets = [0, 96], sizes = [4, 32], strides = [1, 1]} : vector<4x128xf32> to vector<4x32xf32>
    %332 = arith.mulf %329, %312 : vector<4x32xf32>
    %333 = arith.mulf %328, %330 : vector<4x32xf32>
    %334 = arith.addf %332, %333 : vector<4x32xf32>
    %335 = math.tanh %334 : vector<4x32xf32>
    %336 = arith.mulf %331, %335 : vector<4x32xf32>
    %cst_74 = arith.constant dense<0.000000e+00> : vector<4x2xf32>
    %337 = tpu.matmul %336, %1, %cst_74 {dimension_numbers = #tpu.dot_dimension_numbers<[1], [0], [0], [1], [0, 0, 1, 1], [], []>} : vector<4x32xf32>, vector<32x2xf32>, vector<4x2xf32> -> vector<4x2xf32>
    %338 = arith.addf %337, %8 : vector<4x2xf32>
    %c8 = arith.constant 8 : index
    %c0_75 = arith.constant 0 : index
    %c0_76 = arith.constant 0 : index
    %339 = vector.load %arg8[%c8, %c0_75, %c0_76] : memref<12x4x2xf32, #tpu.memory_space<vmem>>, vector<1x4x2xf32>
    %340 = vector.shape_cast %339 : vector<1x4x2xf32> to vector<4x2xf32>
    %341 = vector.shape_cast %338 : vector<4x2xf32> to vector<1x4x2xf32>
    tpu.vector_store %arg8[%c8, %c0_75, %c0_76], %341 {strides = array<i32>} : memref<12x4x2xf32, #tpu.memory_space<vmem>>, vector<1x4x2xf32>,
    %cst_77 = arith.constant dense<0.000000e+00> : vector<4x128xf32>
    %342 = tpu.matmul %336, %2, %cst_77 {dimension_numbers = #tpu.dot_dimension_numbers<[1], [0], [0], [1], [0, 0, 1, 1], [], []>} : vector<4x32xf32>, vector<32x128xf32>, vector<4x128xf32> -> vector<4x128xf32>
    %343 = arith.addf %342, %5 : vector<4x128xf32>
    %344 = arith.negf %343 : vector<4x128xf32>
    %345 = math.exp %344 : vector<4x128xf32>
    %cst_78 = arith.constant 1.000000e+00 : f32
    %346 = vector.broadcast %cst_78 : f32 to vector<4x128xf32>
    %347 = arith.addf %346, %345 : vector<4x128xf32>
    %348 = arith.divf %346, %347 : vector<4x128xf32>
    %349 = math.tanh %343 : vector<4x128xf32>
    %350 = vector.extract_strided_slice %348 {offsets = [0, 0], sizes = [4, 32], strides = [1, 1]} : vector<4x128xf32> to vector<4x32xf32>
    %351 = vector.extract_strided_slice %348 {offsets = [0, 32], sizes = [4, 32], strides = [1, 1]} : vector<4x128xf32> to vector<4x32xf32>
    %352 = vector.extract_strided_slice %349 {offsets = [0, 64], sizes = [4, 32], strides = [1, 1]} : vector<4x128xf32> to vector<4x32xf32>
    %353 = vector.extract_strided_slice %348 {offsets = [0, 96], sizes = [4, 32], strides = [1, 1]} : vector<4x128xf32> to vector<4x32xf32>
    %354 = arith.mulf %351, %334 : vector<4x32xf32>
    %355 = arith.mulf %350, %352 : vector<4x32xf32>
    %356 = arith.addf %354, %355 : vector<4x32xf32>
    %357 = math.tanh %356 : vector<4x32xf32>
    %358 = arith.mulf %353, %357 : vector<4x32xf32>
    %cst_79 = arith.constant dense<0.000000e+00> : vector<4x2xf32>
    %359 = tpu.matmul %358, %1, %cst_79 {dimension_numbers = #tpu.dot_dimension_numbers<[1], [0], [0], [1], [0, 0, 1, 1], [], []>} : vector<4x32xf32>, vector<32x2xf32>, vector<4x2xf32> -> vector<4x2xf32>
    %360 = arith.addf %359, %8 : vector<4x2xf32>
    %c9 = arith.constant 9 : index
    %c0_80 = arith.constant 0 : index
    %c0_81 = arith.constant 0 : index
    %361 = vector.load %arg8[%c9, %c0_80, %c0_81] : memref<12x4x2xf32, #tpu.memory_space<vmem>>, vector<1x4x2xf32>
    %362 = vector.shape_cast %361 : vector<1x4x2xf32> to vector<4x2xf32>
    %363 = vector.shape_cast %360 : vector<4x2xf32> to vector<1x4x2xf32>
    tpu.vector_store %arg8[%c9, %c0_80, %c0_81], %363 {strides = array<i32>} : memref<12x4x2xf32, #tpu.memory_space<vmem>>, vector<1x4x2xf32>,
    %cst_82 = arith.constant dense<0.000000e+00> : vector<4x128xf32>
    %364 = tpu.matmul %358, %2, %cst_82 {dimension_numbers = #tpu.dot_dimension_numbers<[1], [0], [0], [1], [0, 0, 1, 1], [], []>} : vector<4x32xf32>, vector<32x128xf32>, vector<4x128xf32> -> vector<4x128xf32>
    %365 = arith.addf %364, %5 : vector<4x128xf32>
    %366 = arith.negf %365 : vector<4x128xf32>
    %367 = math.exp %366 : vector<4x128xf32>
    %cst_83 = arith.constant 1.000000e+00 : f32
    %368 = vector.broadcast %cst_83 : f32 to vector<4x128xf32>
    %369 = arith.addf %368, %367 : vector<4x128xf32>
    %370 = arith.divf %368, %369 : vector<4x128xf32>
    %371 = math.tanh %365 : vector<4x128xf32>
    %372 = vector.extract_strided_slice %370 {offsets = [0, 0], sizes = [4, 32], strides = [1, 1]} : vector<4x128xf32> to vector<4x32xf32>
    %373 = vector.extract_strided_slice %370 {offsets = [0, 32], sizes = [4, 32], strides = [1, 1]} : vector<4x128xf32> to vector<4x32xf32>
    %374 = vector.extract_strided_slice %371 {offsets = [0, 64], sizes = [4, 32], strides = [1, 1]} : vector<4x128xf32> to vector<4x32xf32>
    %375 = vector.extract_strided_slice %370 {offsets = [0, 96], sizes = [4, 32], strides = [1, 1]} : vector<4x128xf32> to vector<4x32xf32>
    %376 = arith.mulf %373, %356 : vector<4x32xf32>
    %377 = arith.mulf %372, %374 : vector<4x32xf32>
    %378 = arith.addf %376, %377 : vector<4x32xf32>
    %379 = math.tanh %378 : vector<4x32xf32>
    %380 = arith.mulf %375, %379 : vector<4x32xf32>
    %cst_84 = arith.constant dense<0.000000e+00> : vector<4x2xf32>
    %381 = tpu.matmul %380, %1, %cst_84 {dimension_numbers = #tpu.dot_dimension_numbers<[1], [0], [0], [1], [0, 0, 1, 1], [], []>} : vector<4x32xf32>, vector<32x2xf32>, vector<4x2xf32> -> vector<4x2xf32>
    %382 = arith.addf %381, %8 : vector<4x2xf32>
    %c10 = arith.constant 10 : index
    %c0_85 = arith.constant 0 : index
    %c0_86 = arith.constant 0 : index
    %383 = vector.load %arg8[%c10, %c0_85, %c0_86] : memref<12x4x2xf32, #tpu.memory_space<vmem>>, vector<1x4x2xf32>
    %384 = vector.shape_cast %383 : vector<1x4x2xf32> to vector<4x2xf32>
    %385 = vector.shape_cast %382 : vector<4x2xf32> to vector<1x4x2xf32>
    tpu.vector_store %arg8[%c10, %c0_85, %c0_86], %385 {strides = array<i32>} : memref<12x4x2xf32, #tpu.memory_space<vmem>>, vector<1x4x2xf32>,
    %cst_87 = arith.constant dense<0.000000e+00> : vector<4x128xf32>
    %386 = tpu.matmul %380, %2, %cst_87 {dimension_numbers = #tpu.dot_dimension_numbers<[1], [0], [0], [1], [0, 0, 1, 1], [], []>} : vector<4x32xf32>, vector<32x128xf32>, vector<4x128xf32> -> vector<4x128xf32>
    %387 = arith.addf %386, %5 : vector<4x128xf32>
    %388 = arith.negf %387 : vector<4x128xf32>
    %389 = math.exp %388 : vector<4x128xf32>
    %cst_88 = arith.constant 1.000000e+00 : f32
    %390 = vector.broadcast %cst_88 : f32 to vector<4x128xf32>
    %391 = arith.addf %390, %389 : vector<4x128xf32>
    %392 = arith.divf %390, %391 : vector<4x128xf32>
    %393 = math.tanh %387 : vector<4x128xf32>
    %394 = vector.extract_strided_slice %392 {offsets = [0, 0], sizes = [4, 32], strides = [1, 1]} : vector<4x128xf32> to vector<4x32xf32>
    %395 = vector.extract_strided_slice %392 {offsets = [0, 32], sizes = [4, 32], strides = [1, 1]} : vector<4x128xf32> to vector<4x32xf32>
    %396 = vector.extract_strided_slice %393 {offsets = [0, 64], sizes = [4, 32], strides = [1, 1]} : vector<4x128xf32> to vector<4x32xf32>
    %397 = vector.extract_strided_slice %392 {offsets = [0, 96], sizes = [4, 32], strides = [1, 1]} : vector<4x128xf32> to vector<4x32xf32>
    %398 = arith.mulf %395, %378 : vector<4x32xf32>
    %399 = arith.mulf %394, %396 : vector<4x32xf32>
    %400 = arith.addf %398, %399 : vector<4x32xf32>
    %401 = math.tanh %400 : vector<4x32xf32>
    %402 = arith.mulf %397, %401 : vector<4x32xf32>
    %cst_89 = arith.constant dense<0.000000e+00> : vector<4x2xf32>
    %403 = tpu.matmul %402, %1, %cst_89 {dimension_numbers = #tpu.dot_dimension_numbers<[1], [0], [0], [1], [0, 0, 1, 1], [], []>} : vector<4x32xf32>, vector<32x2xf32>, vector<4x2xf32> -> vector<4x2xf32>
    %404 = arith.addf %403, %8 : vector<4x2xf32>
    %c11 = arith.constant 11 : index
    %c0_90 = arith.constant 0 : index
    %c0_91 = arith.constant 0 : index
    %405 = vector.load %arg8[%c11, %c0_90, %c0_91] : memref<12x4x2xf32, #tpu.memory_space<vmem>>, vector<1x4x2xf32>
    %406 = vector.shape_cast %405 : vector<1x4x2xf32> to vector<4x2xf32>
    %407 = vector.shape_cast %404 : vector<4x2xf32> to vector<1x4x2xf32>
    tpu.vector_store %arg8[%c11, %c0_90, %c0_91], %407 {strides = array<i32>} : memref<12x4x2xf32, #tpu.memory_space<vmem>>, vector<1x4x2xf32>,
    return
  }
}

</mosaic_0001>

<llo_original>
// kernel: tpu_custom_call.1
$region0: #{tpu_custom_call.1}
  #allocation0 [shape = 'u32[]', space=smem, size = 0x4, offset = 0x4, fixed_abs, tag = 'smem constant byte address 0x4 - core index']
  #allocation1 [shape = 'u32[144,128]{1,0:T(1,128)}', space=vmem, size = 0x12000, scoped, tag = 'internal scratch']
  %s0 = inlined_call_operand.vmem [shape: f32[32,2], index: 0, kind: input, shape index: {}]
  %s1 = inlined_call_operand.vmem [shape: f32[2,128], index: 1, kind: input, shape index: {}]
  %s2 = inlined_call_operand.vmem [shape: f32[32,128], index: 2, kind: input, shape index: {}]
  %s3 = inlined_call_operand.vmem [shape: f32[1,128], index: 3, kind: input, shape index: {}]
  %s4 = inlined_call_operand.vmem [shape: f32[32,128], index: 4, kind: input, shape index: {}]
  %s5 = inlined_call_operand.vmem [shape: f32[1,128], index: 5, kind: input, shape index: {}]
  %s6 = inlined_call_operand.vmem [shape: f32[32,2], index: 6, kind: input, shape index: {}]
  %s7 = inlined_call_operand.vmem [shape: f32[1,2], index: 7, kind: input, shape index: {}]
  %s8 = inlined_call_operand.vmem [shape: f32[12,4,2], index: 8, kind: output, shape index: {}]
  %s9 = sld [smem:[#allocation0]]
  $region42: #{tpu_custom_call.1} parent=0
    _
  %s11 = ssub.s32 1, %s9
  %s12 = scalar_select 0, %s11, %s9
  // Predicated region
  $region2: #{tpu_custom_call.1} parent=0 // pred_check
    _
  $region3: #{tpu_custom_call.1} parent=0 // pred_check_branch
    %14 = sbr.rel (0) target = $region5
  $region4: #{tpu_custom_call.1} parent=0 // pred_region
    _
  $region5: #{tpu_custom_call.1} parent=0 // pred_fallthru
    _
  // Predicated region
  $region6: #{tpu_custom_call.1} parent=0 // pred_check
    _
  $region7: #{tpu_custom_call.1} parent=0 // pred_check_branch
    %16 = sbr.rel (0) target = $region9
  $region8: #{tpu_custom_call.1} parent=0 // pred_region
    _
  $region9: #{tpu_custom_call.1} parent=0 // pred_fallthru
    _
  // Predicated region
  $region10: #{tpu_custom_call.1} parent=0 // pred_check
    _
  $region11: #{tpu_custom_call.1} parent=0 // pred_check_branch
    %18 = sbr.rel (0) target = $region13
  $region12: #{tpu_custom_call.1} parent=0 // pred_region
    _
  $region13: #{tpu_custom_call.1} parent=0 // pred_fallthru
    _
  // Predicated region
  $region14: #{tpu_custom_call.1} parent=0 // pred_check
    _
  $region15: #{tpu_custom_call.1} parent=0 // pred_check_branch
    %20 = sbr.rel (0) target = $region17
  $region16: #{tpu_custom_call.1} parent=0 // pred_region
    _
  $region17: #{tpu_custom_call.1} parent=0 // pred_fallthru
    _
  // Predicated region
  $region18: #{tpu_custom_call.1} parent=0 // pred_check
    _
  $region19: #{tpu_custom_call.1} parent=0 // pred_check_branch
    %22 = sbr.rel (0) target = $region21
  $region20: #{tpu_custom_call.1} parent=0 // pred_region
    _
  $region21: #{tpu_custom_call.1} parent=0 // pred_fallthru
    _
  // Predicated region
  $region22: #{tpu_custom_call.1} parent=0 // pred_check
    _
  $region23: #{tpu_custom_call.1} parent=0 // pred_check_branch
    %24 = sbr.rel (0) target = $region25
  $region24: #{tpu_custom_call.1} parent=0 // pred_region
    _
  $region25: #{tpu_custom_call.1} parent=0 // pred_fallthru
    _
  // Predicated region
  $region26: #{tpu_custom_call.1} parent=0 // pred_check
    _
  $region27: #{tpu_custom_call.1} parent=0 // pred_check_branch
    %26 = sbr.rel (0) target = $region29
  $region28: #{tpu_custom_call.1} parent=0 // pred_region
    _
  $region29: #{tpu_custom_call.1} parent=0 // pred_fallthru
    _
  // Predicated region
  $region30: #{tpu_custom_call.1} parent=0 // pred_check
    _
  $region31: #{tpu_custom_call.1} parent=0 // pred_check_branch
    %28 = sbr.rel (0) target = $region33
  $region32: #{tpu_custom_call.1} parent=0 // pred_region
    _
  $region33: #{tpu_custom_call.1} parent=0 // pred_fallthru
    _
  %v29 = vld [vmem:[%s2] sm:$0xff]
  %v30 = vld [vmem:[%s2 + $0x8] sm:$0xff]
  %v31 = vld [vmem:[%s2 + $0x10] sm:$0xff]
  %v32 = vld [vmem:[%s2 + $0x18] sm:$0xff]
  %v33 = vld [vmem:[%s6] sm:$0xff]
  %v34 = vld [vmem:[%s6 + $0x8] sm:$0xff]
  %v35 = vld [vmem:[%s6 + $0x10] sm:$0xff]
  %v36 = vld [vmem:[%s6 + $0x18] sm:$0xff]
  %v37 = vld [vmem:[%s4] sm:$0xff]
  %v38 = vld [vmem:[%s4 + $0x8] sm:$0xff]
  %v39 = vld [vmem:[%s4 + $0x10] sm:$0xff]
  %v40 = vld [vmem:[%s4 + $0x18] sm:$0xff]
  %v41 = vld [vmem:[%s5] sm:$0x1]
  %v43 = vlaneseq
  %v44 = vshrl.u32 %v43, 7
  %v45 = vsub.s32 0, %v44
  %v46 = vrot.slane %v41, %v45
  %v48 = vld [vmem:[%s7] sm:$0x1]
  %v50 = vlaneseq
  %v51 = vshrl.u32 %v50, 7
  %v52 = vsub.s32 0, %v51
  %v53 = vrot.slane %v48, %v52
  %v55 = vld [vmem:[%s0] sm:$0xff]
  %v56 = vld [vmem:[%s0 + $0x8] sm:$0xff]
  %v57 = vld [vmem:[%s0 + $0x10] sm:$0xff]
  %v58 = vld [vmem:[%s0 + $0x18] sm:$0xff]
  %v59 = vld [vmem:[%s1] sm:$0x3]
  %v60 = vld [vmem:[%s3] sm:$0x1]
  %v62 = vlaneseq
  %v63 = vshrl.u32 %v62, 7
  %v64 = vsub.s32 0, %v63
  %v65 = vrot.slane %v60, %v64
  %vm67 = vcmask 15360
  %v69 = vsel %vm67, %v55, 0
  %v72 = vsel %vm67, %v56, 0
  %v75 = vsel %vm67, %v57, 0
  %v78 = vsel %vm67, %v58, 0
  %vm80 = vcmask 1041408
  %v82 = vsel %vm80, %v59, 0
  %84 = vmatprep.subr.mxu0 0.0
  %85 = vmatpush1.msra.mxu0 %v82
  %86 = vmatprep.subr.mxu0 0.0
  %87 = vmatpush1.msra.mxu0 0.0
  %88 = vmatprep.subr.mxu0 0.0
  %89 = vmatpush1.msra.mxu0 0.0
  %90 = vmatprep.subr.mxu0 0.0
  %91 = vmatpush1.msra.mxu0 0.0
  %92 = vmatprep.subr.mxu0 0.0
  %93 = vmatpush1.msra.mxu0 0.0
  %94 = vmatprep.subr.mxu0 0.0
  %95 = vmatpush1.msra.mxu0 0.0
  %96 = vmatprep.subr.mxu0 0.0
  %97 = vmatpush1.msra.mxu0 0.0
  %98 = vmatprep.subr.mxu0 0.0
  %99 = vmatpush1.msra.mxu0 0.0
  %100 = vmatprep.subr.mxu0 0.0
  %101 = vmatpush1.msra.mxu0 0.0
  %102 = vmatprep.subr.mxu0 0.0
  %103 = vmatpush1.msra.mxu0 0.0
  %104 = vmatprep.subr.mxu0 0.0
  %105 = vmatpush1.msra.mxu0 0.0
  %106 = vmatprep.subr.mxu0 0.0
  %107 = vmatpush1.msra.mxu0 0.0
  %108 = vmatprep.subr.mxu0 0.0
  %109 = vmatpush1.msra.mxu0 0.0
  %110 = vmatprep.subr.mxu0 0.0
  %111 = vmatpush1.msra.mxu0 0.0
  %112 = vmatprep.subr.mxu0 0.0
  %113 = vmatpush1.msra.mxu0 0.0
  %114 = vmatprep.subr.mxu0 0.0
  %115 = vmatpush1.msra.mxu0 0.0
  %116 = vmatprep.subr.mxu0 0.0
  %117 = vmatpush1.msra.mxu0 0.0
  %118 = vmatprep.subr.mxu0 0.0
  %119 = vmatpush1.msra.mxu0 0.0
  %120 = vmatprep.subr.mxu0 0.0
  %121 = vmatpush1.msra.mxu0 0.0
  %122 = vmatprep.subr.mxu0 0.0
  %123 = vmatpush1.msra.mxu0 0.0
  %124 = vmatprep.subr.mxu0 0.0
  %125 = vmatpush1.msra.mxu0 0.0
  %126 = vmatprep.subr.mxu0 0.0
  %127 = vmatpush1.msra.mxu0 0.0
  %128 = vmatprep.subr.mxu0 0.0
  %129 = vmatpush1.msra.mxu0 0.0
  %130 = vmatprep.subr.mxu0 0.0
  %131 = vmatpush1.msra.mxu0 0.0
  %132 = vmatprep.subr.mxu0 0.0
  %133 = vmatpush1.msra.mxu0 0.0
  %134 = vmatprep.subr.mxu0 0.0
  %135 = vmatpush1.msra.mxu0 0.0
  %136 = vmatprep.subr.mxu0 0.0
  %137 = vmatpush1.msra.mxu0 0.0
  %138 = vmatprep.subr.mxu0 0.0
  %139 = vmatpush1.msra.mxu0 0.0
  %140 = vmatprep.subr.mxu0 0.0
  %141 = vmatpush1.msra.mxu0 0.0
  %142 = vmatprep.subr.mxu0 0.0
  %143 = vmatpush1.msra.mxu0 0.0
  %144 = vmatprep.subr.mxu0 0.0
  %145 = vmatpush1.msra.mxu0 0.0
  %146 = vmatprep.subr.mxu0 0.0
  %147 = vmatpush1.msra.mxu0 0.0
  %148 = vmatprep.mubr.f32.mxu0 0.0
  %149 = vmatmul.mubr.f32.gmra.mrb[0].mxu0 %v69
  %v150 = vpop.f32.mrb[0].mxu0
  %v151 = vadd.f32 %v65, %v150
  %v152 = vpop.f32.mrb[0].mxu0
  %153 = vmatprep.mubr.f32.mxu0 0.0
  %154 = vmatmul.mubr.f32.gmra.mrb[0].mxu0 %v72
  %v155 = vpop.f32.mrb[0].mxu0
  %v156 = vadd.f32 %v65, %v155
  %v157 = vpop.f32.mrb[0].mxu0
  %158 = vmatprep.mubr.f32.mxu0 0.0
  %159 = vmatmul.mubr.f32.gmra.mrb[0].mxu0 %v75
  %v160 = vpop.f32.mrb[0].mxu0
  %v161 = vadd.f32 %v65, %v160
  %v162 = vpop.f32.mrb[0].mxu0
  %163 = vmatprep.mubr.f32.mxu0 0.0
  %164 = vmatmul.mubr.f32.gmra.mrb[0].mxu0 %v78
  %v165 = vpop.f32.mrb[0].mxu0
  %v166 = vadd.f32 %v65, %v165
  %v167 = vpop.f32.mrb[0].mxu0
  %168 = vdwg.mxu0
  %vm169 = vcmask 261120
  %v171 = vsel %vm169, 0.0, 0
  %173 = vmatprep.subr.mxu0 0.0
  %174 = vmatpush1.msra.mxu0 %v29
  %175 = vmatprep.subr.mxu0 0.0
  %176 = vmatpush1.msra.mxu0 %v30
  %177 = vmatprep.subr.mxu0 0.0
  %178 = vmatpush1.msra.mxu0 %v31
  %179 = vmatprep.subr.mxu0 0.0
  %180 = vmatpush1.msra.mxu0 %v32
  %181 = vmatprep.subr.mxu0 0.0
  %182 = vmatpush1.msra.mxu0 0.0
  %183 = vmatprep.subr.mxu0 0.0
  %184 = vmatpush1.msra.mxu0 0.0
  %185 = vmatprep.subr.mxu0 0.0
  %186 = vmatpush1.msra.mxu0 0.0
  %187 = vmatprep.subr.mxu0 0.0
  %188 = vmatpush1.msra.mxu0 0.0
  %189 = vmatprep.subr.mxu0 0.0
  %190 = vmatpush1.msra.mxu0 0.0
  %191 = vmatprep.subr.mxu0 0.0
  %192 = vmatpush1.msra.mxu0 0.0
  %193 = vmatprep.subr.mxu0 0.0
  %194 = vmatpush1.msra.mxu0 0.0
  %195 = vmatprep.subr.mxu0 0.0
  %196 = vmatpush1.msra.mxu0 0.0
  %197 = vmatprep.subr.mxu0 0.0
  %198 = vmatpush1.msra.mxu0 0.0
  %199 = vmatprep.subr.mxu0 0.0
  %200 = vmatpush1.msra.mxu0 0.0
  %201 = vmatprep.subr.mxu0 0.0
  %202 = vmatpush1.msra.mxu0 0.0
  %203 = vmatprep.subr.mxu0 0.0
  %204 = vmatpush1.msra.mxu0 0.0
  %205 = vmatprep.subr.mxu0 0.0
  %206 = vmatpush1.msra.mxu0 0.0
  %207 = vmatprep.subr.mxu0 0.0
  %208 = vmatpush1.msra.mxu0 0.0
  %209 = vmatprep.subr.mxu0 0.0
  %210 = vmatpush1.msra.mxu0 0.0
  %211 = vmatprep.subr.mxu0 0.0
  %212 = vmatpush1.msra.mxu0 0.0
  %213 = vmatprep.subr.mxu0 0.0
  %214 = vmatpush1.msra.mxu0 0.0
  %215 = vmatprep.subr.mxu0 0.0
  %216 = vmatpush1.msra.mxu0 0.0
  %217 = vmatprep.subr.mxu0 0.0
  %218 = vmatpush1.msra.mxu0 0.0
  %219 = vmatprep.subr.mxu0 0.0
  %220 = vmatpush1.msra.mxu0 0.0
  %221 = vmatprep.subr.mxu0 0.0
  %222 = vmatpush1.msra.mxu0 0.0
  %223 = vmatprep.subr.mxu0 0.0
  %224 = vmatpush1.msra.mxu0 0.0
  %225 = vmatprep.subr.mxu0 0.0
  %226 = vmatpush1.msra.mxu0 0.0
  %227 = vmatprep.subr.mxu0 0.0
  %228 = vmatpush1.msra.mxu0 0.0
  %229 = vmatprep.subr.mxu0 0.0
  %230 = vmatpush1.msra.mxu0 0.0
  %231 = vmatprep.subr.mxu0 0.0
  %232 = vmatpush1.msra.mxu0 0.0
  %233 = vmatprep.subr.mxu0 0.0
  %234 = vmatpush1.msra.mxu0 0.0
  %235 = vmatprep.subr.mxu0 0.0
  %236 = vmatpush1.msra.mxu0 0.0
  %237 = vmatprep.mubr.f32.mxu0 0.0
  %238 = vmatmul.mubr.f32.gmra.mrb[0].mxu0 %v171
  %v239 = vpop.f32.mrb[0].mxu0
  %v240 = vadd.f32 0.0, %v239
  %v241 = vpop.f32.mrb[0].mxu0
  %242 = vdwg.mxu0
  %v243 = vadd.f32 %v151, %v240
  %v244 = vxor.u32 %v243, 2147483648
  %v245 = vmul.f32 %v244, 1.442695
  %v246 = vpow.pop %v245
  %v247 = vadd.f32 %v246, 1.0
  %v248 = vrcp.pop %v247
  %v249 = vmul.f32 1.0, %v248
  %v250 = vtanh.pop %v243
  %v251 = vmul.f32 %v249, 0.0
  %253 = vrot.lane.b32.xlu0 %v250, 64
  %v254 = vpop.permute.xlu0 %253
  %v256 = vmul.f32 %v249, %v254
  %258 = vrot.lane.b32.xlu0 %v256, 32
  %v259 = vpop.permute.xlu0 %258
  %v261 = vadd.f32 %v251, %v259
  %v262 = vtanh.pop %v261
  %264 = vrot.lane.b32.xlu0 %v262, 64
  %v265 = vpop.permute.xlu0 %264
  %v267 = vmul.f32 %v249, %v265
  %269 = vrot.lane.b32.xlu0 %v267, 32
  %v270 = vpop.permute.xlu0 %269
  %v271 = vsel %vm169, %v270, 0
  %273 = vmatprep.subr.mxu0 0.0
  %274 = vmatpush1.msra.mxu0 %v29
  %275 = vmatprep.subr.mxu0 0.0
  %276 = vmatpush1.msra.mxu0 %v30
  %277 = vmatprep.subr.mxu0 0.0
  %278 = vmatpush1.msra.mxu0 %v31
  %279 = vmatprep.subr.mxu0 0.0
  %280 = vmatpush1.msra.mxu0 %v32
  %281 = vmatprep.subr.mxu0 0.0
  %282 = vmatpush1.msra.mxu0 0.0
  %283 = vmatprep.subr.mxu0 0.0
  %284 = vmatpush1.msra.mxu0 0.0
  %285 = vmatprep.subr.mxu0 0.0
  %286 = vmatpush1.msra.mxu0 0.0
  %287 = vmatprep.subr.mxu0 0.0
  %288 = vmatpush1.msra.mxu0 0.0
  %289 = vmatprep.subr.mxu0 0.0
  %290 = vmatpush1.msra.mxu0 0.0
  %291 = vmatprep.subr.mxu0 0.0
  %292 = vmatpush1.msra.mxu0 0.0
  %293 = vmatprep.subr.mxu0 0.0
  %294 = vmatpush1.msra.mxu0 0.0
  %295 = vmatprep.subr.mxu0 0.0
  %296 = vmatpush1.msra.mxu0 0.0
  %297 = vmatprep.subr.mxu0 0.0
  %298 = vmatpush1.msra.mxu0 0.0
  %299 = vmatprep.subr.mxu0 0.0
  %300 = vmatpush1.msra.mxu0 0.0
  %301 = vmatprep.subr.mxu0 0.0
  %302 = vmatpush1.msra.mxu0 0.0
  %303 = vmatprep.subr.mxu0 0.0
  %304 = vmatpush1.msra.mxu0 0.0
  %305 = vmatprep.subr.mxu0 0.0
  %306 = vmatpush1.msra.mxu0 0.0
  %307 = vmatprep.subr.mxu0 0.0
  %308 = vmatpush1.msra.mxu0 0.0
  %309 = vmatprep.subr.mxu0 0.0
  %310 = vmatpush1.msra.mxu0 0.0
  %311 = vmatprep.subr.mxu0 0.0
  %312 = vmatpush1.msra.mxu0 0.0
  %313 = vmatprep.subr.mxu0 0.0
  %314 = vmatpush1.msra.mxu0 0.0
  %315 = vmatprep.subr.mxu0 0.0
  %316 = vmatpush1.msra.mxu0 0.0
  %317 = vmatprep.subr.mxu0 0.0
  %318 = vmatpush1.msra.mxu0 0.0
  %319 = vmatprep.subr.mxu0 0.0
  %320 = vmatpush1.msra.mxu0 0.0
  %321 = vmatprep.subr.mxu0 0.0
  %322 = vmatpush1.msra.mxu0 0.0
  %323 = vmatprep.subr.mxu0 0.0
  %324 = vmatpush1.msra.mxu0 0.0
  %325 = vmatprep.subr.mxu0 0.0
  %326 = vmatpush1.msra.mxu0 0.0
  %327 = vmatprep.subr.mxu0 0.0
  %328 = vmatpush1.msra.mxu0 0.0
  %329 = vmatprep.subr.mxu0 0.0
  %330 = vmatpush1.msra.mxu0 0.0
  %331 = vmatprep.subr.mxu0 0.0
  %332 = vmatpush1.msra.mxu0 0.0
  %333 = vmatprep.subr.mxu0 0.0
  %334 = vmatpush1.msra.mxu0 0.0
  %335 = vmatprep.subr.mxu0 0.0
  %336 = vmatpush1.msra.mxu0 0.0
  %337 = vmatprep.mubr.f32.mxu0 0.0
  %338 = vmatmul.mubr.f32.gmra.mrb[0].mxu0 %v271
  %v339 = vpop.f32.mrb[0].mxu0
  %v340 = vadd.f32 0.0, %v339
  %v341 = vpop.f32.mrb[0].mxu0
  %342 = vdwg.mxu0
  %v344 = vrot.slane %v340, 4
  %v346 = vadd.f32 %v151, %v344
  %v347 = vxor.u32 %v346, 2147483648
  %v348 = vmul.f32 %v347, 1.442695
  %v349 = vpow.pop %v348
  %v350 = vadd.f32 %v349, 1.0
  %v351 = vrcp.pop %v350
  %v352 = vmul.f32 1.0, %v351
  %v353 = vtanh.pop %v346
  %v355 = vrot.slane %v261, 4
  %v357 = vmul.f32 %v352, %v355
  %359 = vrot.lane.b32.xlu0 %v353, 64
  %v360 = vpop.permute.xlu0 %359
  %v362 = vmul.f32 %v352, %v360
  %364 = vrot.lane.b32.xlu0 %v362, 32
  %v365 = vpop.permute.xlu0 %364
  %v367 = vadd.f32 %v357, %v365
  %v368 = vtanh.pop %v367
  %370 = vrot.lane.b32.xlu0 %v368, 64
  %v371 = vpop.permute.xlu0 %370
  %v373 = vmul.f32 %v352, %v371
  %v375 = vrot.slane %v373, 4
  %376 = vrot.lane.b32.xlu0 %v375, 32
  %v377 = vpop.permute.xlu0 %376
  %v378 = vsel %vm169, %v377, 0
  %380 = vmatprep.subr.mxu0 0.0
  %381 = vmatpush1.msra.mxu0 %v29
  %382 = vmatprep.subr.mxu0 0.0
  %383 = vmatpush1.msra.mxu0 %v30
  %384 = vmatprep.subr.mxu0 0.0
  %385 = vmatpush1.msra.mxu0 %v31
  %386 = vmatprep.subr.mxu0 0.0
  %387 = vmatpush1.msra.mxu0 %v32
  %388 = vmatprep.subr.mxu0 0.0
  %389 = vmatpush1.msra.mxu0 0.0
  %390 = vmatprep.subr.mxu0 0.0
  %391 = vmatpush1.msra.mxu0 0.0
  %392 = vmatprep.subr.mxu0 0.0
  %393 = vmatpush1.msra.mxu0 0.0
  %394 = vmatprep.subr.mxu0 0.0
  %395 = vmatpush1.msra.mxu0 0.0
  %396 = vmatprep.subr.mxu0 0.0
  %397 = vmatpush1.msra.mxu0 0.0
  %398 = vmatprep.subr.mxu0 0.0
  %399 = vmatpush1.msra.mxu0 0.0
  %400 = vmatprep.subr.mxu0 0.0
  %401 = vmatpush1.msra.mxu0 0.0
  %402 = vmatprep.subr.mxu0 0.0
  %403 = vmatpush1.msra.mxu0 0.0
  %404 = vmatprep.subr.mxu0 0.0
  %405 = vmatpush1.msra.mxu0 0.0
  %406 = vmatprep.subr.mxu0 0.0
  %407 = vmatpush1.msra.mxu0 0.0
  %408 = vmatprep.subr.mxu0 0.0
  %409 = vmatpush1.msra.mxu0 0.0
  %410 = vmatprep.subr.mxu0 0.0
  %411 = vmatpush1.msra.mxu0 0.0
  %412 = vmatprep.subr.mxu0 0.0
  %413 = vmatpush1.msra.mxu0 0.0
  %414 = vmatprep.subr.mxu0 0.0
  %415 = vmatpush1.msra.mxu0 0.0
  %416 = vmatprep.subr.mxu0 0.0
  %417 = vmatpush1.msra.mxu0 0.0
  %418 = vmatprep.subr.mxu0 0.0
  %419 = vmatpush1.msra.mxu0 0.0
  %420 = vmatprep.subr.mxu0 0.0
  %421 = vmatpush1.msra.mxu0 0.0
  %422 = vmatprep.subr.mxu0 0.0
  %423 = vmatpush1.msra.mxu0 0.0
  %424 = vmatprep.subr.mxu0 0.0
  %425 = vmatpush1.msra.mxu0 0.0
  %426 = vmatprep.subr.mxu0 0.0
  %427 = vmatpush1.msra.mxu0 0.0
  %428 = vmatprep.subr.mxu0 0.0
  %429 = vmatpush1.msra.mxu0 0.0
  %430 = vmatprep.subr.mxu0 0.0
  %431 = vmatpush1.msra.mxu0 0.0
  %432 = vmatprep.subr.mxu0 0.0
  %433 = vmatpush1.msra.mxu0 0.0
  %434 = vmatprep.subr.mxu0 0.0
  %435 = vmatpush1.msra.mxu0 0.0
  %436 = vmatprep.subr.mxu0 0.0
  %437 = vmatpush1.msra.mxu0 0.0
  %438 = vmatprep.subr.mxu0 0.0
  %439 = vmatpush1.msra.mxu0 0.0
  %440 = vmatprep.subr.mxu0 0.0
  %441 = vmatpush1.msra.mxu0 0.0
  %442 = vmatprep.subr.mxu0 0.0
  %443 = vmatpush1.msra.mxu0 0.0
  %444 = vmatprep.mubr.f32.mxu0 0.0
  %445 = vmatmul.mubr.f32.gmra.mrb[0].mxu0 %v378
  %v446 = vpop.f32.mrb[0].mxu0
  %v447 = vadd.f32 0.0, %v446
  %v448 = vpop.f32.mrb[0].mxu0
  %449 = vdwg.mxu0
  %v450 = vadd.f32 %v156, %v447
  %v451 = vxor.u32 %v450, 2147483648
  %v452 = vmul.f32 %v451, 1.442695
  %v453 = vpow.pop %v452
  %v454 = vadd.f32 %v453, 1.0
  %v455 = vrcp.pop %v454
  %v456 = vmul.f32 1.0, %v455
  %v457 = vtanh.pop %v450
  %v459 = vrot.slane %v367, 4
  %v461 = vmul.f32 %v456, %v459
  %463 = vrot.lane.b32.xlu0 %v457, 64
  %v464 = vpop.permute.xlu0 %463
  %v466 = vmul.f32 %v456, %v464
  %468 = vrot.lane.b32.xlu0 %v466, 32
  %v469 = vpop.permute.xlu0 %468
  %v471 = vadd.f32 %v461, %v469
  %v472 = vtanh.pop %v471
  %474 = vrot.lane.b32.xlu0 %v472, 64
  %v475 = vpop.permute.xlu0 %474
  %v477 = vmul.f32 %v456, %v475
  %479 = vrot.lane.b32.xlu0 %v477, 32
  %v480 = vpop.permute.xlu0 %479
  %v481 = vsel %vm169, %v480, 0
  %483 = vmatprep.subr.mxu0 0.0
  %484 = vmatpush1.msra.mxu0 %v29
  %485 = vmatprep.subr.mxu0 0.0
  %486 = vmatpush1.msra.mxu0 %v30
  %487 = vmatprep.subr.mxu0 0.0
  %488 = vmatpush1.msra.mxu0 %v31
  %489 = vmatprep.subr.mxu0 0.0
  %490 = vmatpush1.msra.mxu0 %v32
  %491 = vmatprep.subr.mxu0 0.0
  %492 = vmatpush1.msra.mxu0 0.0
  %493 = vmatprep.subr.mxu0 0.0
  %494 = vmatpush1.msra.mxu0 0.0
  %495 = vmatprep.subr.mxu0 0.0
  %496 = vmatpush1.msra.mxu0 0.0
  %497 = vmatprep.subr.mxu0 0.0
  %498 = vmatpush1.msra.mxu0 0.0
  %499 = vmatprep.subr.mxu0 0.0
  %500 = vmatpush1.msra.mxu0 0.0
  %501 = vmatprep.subr.mxu0 0.0
  %502 = vmatpush1.msra.mxu0 0.0
  %503 = vmatprep.subr.mxu0 0.0
  %504 = vmatpush1.msra.mxu0 0.0
  %505 = vmatprep.subr.mxu0 0.0
  %506 = vmatpush1.msra.mxu0 0.0
  %507 = vmatprep.subr.mxu0 0.0
  %508 = vmatpush1.msra.mxu0 0.0
  %509 = vmatprep.subr.mxu0 0.0
  %510 = vmatpush1.msra.mxu0 0.0
  %511 = vmatprep.subr.mxu0 0.0
  %512 = vmatpush1.msra.mxu0 0.0
  %513 = vmatprep.subr.mxu0 0.0
  %514 = vmatpush1.msra.mxu0 0.0
  %515 = vmatprep.subr.mxu0 0.0
  %516 = vmatpush1.msra.mxu0 0.0
  %517 = vmatprep.subr.mxu0 0.0
  %518 = vmatpush1.msra.mxu0 0.0
  %519 = vmatprep.subr.mxu0 0.0
  %520 = vmatpush1.msra.mxu0 0.0
  %521 = vmatprep.subr.mxu0 0.0
  %522 = vmatpush1.msra.mxu0 0.0
  %523 = vmatprep.subr.mxu0 0.0
  %524 = vmatpush1.msra.mxu0 0.0
  %525 = vmatprep.subr.mxu0 0.0
  %526 = vmatpush1.msra.mxu0 0.0
  %527 = vmatprep.subr.mxu0 0.0
  %528 = vmatpush1.msra.mxu0 0.0
  %529 = vmatprep.subr.mxu0 0.0
  %530 = vmatpush1.msra.mxu0 0.0
  %531 = vmatprep.subr.mxu0 0.0
  %532 = vmatpush1.msra.mxu0 0.0
  %533 = vmatprep.subr.mxu0 0.0
  %534 = vmatpush1.msra.mxu0 0.0
  %535 = vmatprep.subr.mxu0 0.0
  %536 = vmatpush1.msra.mxu0 0.0
  %537 = vmatprep.subr.mxu0 0.0
  %538 = vmatpush1.msra.mxu0 0.0
  %539 = vmatprep.subr.mxu0 0.0
  %540 = vmatpush1.msra.mxu0 0.0
  %541 = vmatprep.subr.mxu0 0.0
  %542 = vmatpush1.msra.mxu0 0.0
  %543 = vmatprep.subr.mxu0 0.0
  %544 = vmatpush1.msra.mxu0 0.0
  %545 = vmatprep.subr.mxu0 0.0
  %546 = vmatpush1.msra.mxu0 0.0
  %547 = vmatprep.mubr.f32.mxu0 0.0
  %548 = vmatmul.mubr.f32.gmra.mrb[0].mxu0 %v481
  %v549 = vpop.f32.mrb[0].mxu0
  %v550 = vadd.f32 0.0, %v549
  %v551 = vpop.f32.mrb[0].mxu0
  %552 = vdwg.mxu0
  %v554 = vrot.slane %v550, 4
  %v556 = vadd.f32 %v156, %v554
  %v557 = vxor.u32 %v556, 2147483648
  %v558 = vmul.f32 %v557, 1.442695
  %v559 = vpow.pop %v558
  %v560 = vadd.f32 %v559, 1.0
  %v561 = vrcp.pop %v560
  %v562 = vmul.f32 1.0, %v561
  %v563 = vtanh.pop %v556
  %v565 = vrot.slane %v471, 4
  %v567 = vmul.f32 %v562, %v565
  %569 = vrot.lane.b32.xlu0 %v563, 64
  %v570 = vpop.permute.xlu0 %569
  %v572 = vmul.f32 %v562, %v570
  %574 = vrot.lane.b32.xlu0 %v572, 32
  %v575 = vpop.permute.xlu0 %574
  %v577 = vadd.f32 %v567, %v575
  %v578 = vtanh.pop %v577
  %580 = vrot.lane.b32.xlu0 %v578, 64
  %v581 = vpop.permute.xlu0 %580
  %v583 = vmul.f32 %v562, %v581
  %v585 = vrot.slane %v583, 4
  %586 = vrot.lane.b32.xlu0 %v585, 32
  %v587 = vpop.permute.xlu0 %586
  %v588 = vsel %vm169, %v587, 0
  %590 = vmatprep.subr.mxu0 0.0
  %591 = vmatpush1.msra.mxu0 %v29
  %592 = vmatprep.subr.mxu0 0.0
  %593 = vmatpush1.msra.mxu0 %v30
  %594 = vmatprep.subr.mxu0 0.0
  %595 = vmatpush1.msra.mxu0 %v31
  %596 = vmatprep.subr.mxu0 0.0
  %597 = vmatpush1.msra.mxu0 %v32
  %598 = vmatprep.subr.mxu0 0.0
  %599 = vmatpush1.msra.mxu0 0.0
  %600 = vmatprep.subr.mxu0 0.0
  %601 = vmatpush1.msra.mxu0 0.0
  %602 = vmatprep.subr.mxu0 0.0
  %603 = vmatpush1.msra.mxu0 0.0
  %604 = vmatprep.subr.mxu0 0.0
  %605 = vmatpush1.msra.mxu0 0.0
  %606 = vmatprep.subr.mxu0 0.0
  %607 = vmatpush1.msra.mxu0 0.0
  %608 = vmatprep.subr.mxu0 0.0
  %609 = vmatpush1.msra.mxu0 0.0
  %610 = vmatprep.subr.mxu0 0.0
  %611 = vmatpush1.msra.mxu0 0.0
  %612 = vmatprep.subr.mxu0 0.0
  %613 = vmatpush1.msra.mxu0 0.0
  %614 = vmatprep.subr.mxu0 0.0
  %615 = vmatpush1.msra.mxu0 0.0
  %616 = vmatprep.subr.mxu0 0.0
  %617 = vmatpush1.msra.mxu0 0.0
  %618 = vmatprep.subr.mxu0 0.0
  %619 = vmatpush1.msra.mxu0 0.0
  %620 = vmatprep.subr.mxu0 0.0
  %621 = vmatpush1.msra.mxu0 0.0
  %622 = vmatprep.subr.mxu0 0.0
  %623 = vmatpush1.msra.mxu0 0.0
  %624 = vmatprep.subr.mxu0 0.0
  %625 = vmatpush1.msra.mxu0 0.0
  %626 = vmatprep.subr.mxu0 0.0
  %627 = vmatpush1.msra.mxu0 0.0
  %628 = vmatprep.subr.mxu0 0.0
  %629 = vmatpush1.msra.mxu0 0.0
  %630 = vmatprep.subr.mxu0 0.0
  %631 = vmatpush1.msra.mxu0 0.0
  %632 = vmatprep.subr.mxu0 0.0
  %633 = vmatpush1.msra.mxu0 0.0
  %634 = vmatprep.subr.mxu0 0.0
  %635 = vmatpush1.msra.mxu0 0.0
  %636 = vmatprep.subr.mxu0 0.0
  %637 = vmatpush1.msra.mxu0 0.0
  %638 = vmatprep.subr.mxu0 0.0
  %639 = vmatpush1.msra.mxu0 0.0
  %640 = vmatprep.subr.mxu0 0.0
  %641 = vmatpush1.msra.mxu0 0.0
  %642 = vmatprep.subr.mxu0 0.0
  %643 = vmatpush1.msra.mxu0 0.0
  %644 = vmatprep.subr.mxu0 0.0
  %645 = vmatpush1.msra.mxu0 0.0
  %646 = vmatprep.subr.mxu0 0.0
  %647 = vmatpush1.msra.mxu0 0.0
  %648 = vmatprep.subr.mxu0 0.0
  %649 = vmatpush1.msra.mxu0 0.0
  %650 = vmatprep.subr.mxu0 0.0
  %651 = vmatpush1.msra.mxu0 0.0
  %652 = vmatprep.subr.mxu0 0.0
  %653 = vmatpush1.msra.mxu0 0.0
  %654 = vmatprep.mubr.f32.mxu0 0.0
  %655 = vmatmul.mubr.f32.gmra.mrb[0].mxu0 %v588
  %v656 = vpop.f32.mrb[0].mxu0
  %v657 = vadd.f32 0.0, %v656
  %v658 = vpop.f32.mrb[0].mxu0
  %659 = vdwg.mxu0
  %v660 = vadd.f32 %v161, %v657
  %v661 = vxor.u32 %v660, 2147483648
  %v662 = vmul.f32 %v661, 1.442695
  %v663 = vpow.pop %v662
  %v664 = vadd.f32 %v663, 1.0
  %v665 = vrcp.pop %v664
  %v666 = vmul.f32 1.0, %v665
  %v667 = vtanh.pop %v660
  %v669 = vrot.slane %v577, 4
  %v671 = vmul.f32 %v666, %v669
  %673 = vrot.lane.b32.xlu0 %v667, 64
  %v674 = vpop.permute.xlu0 %673
  %v676 = vmul.f32 %v666, %v674
  %678 = vrot.lane.b32.xlu0 %v676, 32
  %v679 = vpop.permute.xlu0 %678
  %v681 = vadd.f32 %v671, %v679
  %v682 = vtanh.pop %v681
  %684 = vrot.lane.b32.xlu0 %v682, 64
  %v685 = vpop.permute.xlu0 %684
  %v687 = vmul.f32 %v666, %v685
  %689 = vrot.lane.b32.xlu0 %v687, 32
  %v690 = vpop.permute.xlu0 %689
  %v691 = vsel %vm169, %v690, 0
  %693 = vmatprep.subr.mxu0 0.0
  %694 = vmatpush1.msra.mxu0 %v29
  %695 = vmatprep.subr.mxu0 0.0
  %696 = vmatpush1.msra.mxu0 %v30
  %697 = vmatprep.subr.mxu0 0.0
  %698 = vmatpush1.msra.mxu0 %v31
  %699 = vmatprep.subr.mxu0 0.0
  %700 = vmatpush1.msra.mxu0 %v32
  %701 = vmatprep.subr.mxu0 0.0
  %702 = vmatpush1.msra.mxu0 0.0
  %703 = vmatprep.subr.mxu0 0.0
  %704 = vmatpush1.msra.mxu0 0.0
  %705 = vmatprep.subr.mxu0 0.0
  %706 = vmatpush1.msra.mxu0 0.0
  %707 = vmatprep.subr.mxu0 0.0
  %708 = vmatpush1.msra.mxu0 0.0
  %709 = vmatprep.subr.mxu0 0.0
  %710 = vmatpush1.msra.mxu0 0.0
  %711 = vmatprep.subr.mxu0 0.0
  %712 = vmatpush1.msra.mxu0 0.0
  %713 = vmatprep.subr.mxu0 0.0
  %714 = vmatpush1.msra.mxu0 0.0
  %715 = vmatprep.subr.mxu0 0.0
  %716 = vmatpush1.msra.mxu0 0.0
  %717 = vmatprep.subr.mxu0 0.0
  %718 = vmatpush1.msra.mxu0 0.0
  %719 = vmatprep.subr.mxu0 0.0
  %720 = vmatpush1.msra.mxu0 0.0
  %721 = vmatprep.subr.mxu0 0.0
  %722 = vmatpush1.msra.mxu0 0.0
  %723 = vmatprep.subr.mxu0 0.0
  %724 = vmatpush1.msra.mxu0 0.0
  %725 = vmatprep.subr.mxu0 0.0
  %726 = vmatpush1.msra.mxu0 0.0
  %727 = vmatprep.subr.mxu0 0.0
  %728 = vmatpush1.msra.mxu0 0.0
  %729 = vmatprep.subr.mxu0 0.0
  %730 = vmatpush1.msra.mxu0 0.0
  %731 = vmatprep.subr.mxu0 0.0
  %732 = vmatpush1.msra.mxu0 0.0
  %733 = vmatprep.subr.mxu0 0.0
  %734 = vmatpush1.msra.mxu0 0.0
  %735 = vmatprep.subr.mxu0 0.0
  %736 = vmatpush1.msra.mxu0 0.0
  %737 = vmatprep.subr.mxu0 0.0
  %738 = vmatpush1.msra.mxu0 0.0
  %739 = vmatprep.subr.mxu0 0.0
  %740 = vmatpush1.msra.mxu0 0.0
  %741 = vmatprep.subr.mxu0 0.0
  %742 = vmatpush1.msra.mxu0 0.0
  %743 = vmatprep.subr.mxu0 0.0
  %744 = vmatpush1.msra.mxu0 0.0
  %745 = vmatprep.subr.mxu0 0.0
  %746 = vmatpush1.msra.mxu0 0.0
  %747 = vmatprep.subr.mxu0 0.0
  %748 = vmatpush1.msra.mxu0 0.0
  %749 = vmatprep.subr.mxu0 0.0
  %750 = vmatpush1.msra.mxu0 0.0
  %751 = vmatprep.subr.mxu0 0.0
  %752 = vmatpush1.msra.mxu0 0.0
  %753 = vmatprep.subr.mxu0 0.0
  %754 = vmatpush1.msra.mxu0 0.0
  %755 = vmatprep.subr.mxu0 0.0
  %756 = vmatpush1.msra.mxu0 0.0
  %757 = vmatprep.mubr.f32.mxu0 0.0
  %758 = vmatmul.mubr.f32.gmra.mrb[0].mxu0 %v691
  %v759 = vpop.f32.mrb[0].mxu0
  %v760 = vadd.f32 0.0, %v759
  %v761 = vpop.f32.mrb[0].mxu0
  %762 = vdwg.mxu0
  %v764 = vrot.slane %v760, 4
  %v766 = vadd.f32 %v161, %v764
  %v767 = vxor.u32 %v766, 2147483648
  %v768 = vmul.f32 %v767, 1.442695
  %v769 = vpow.pop %v768
  %v770 = vadd.f32 %v769, 1.0
  %v771 = vrcp.pop %v770
  %v772 = vmul.f32 1.0, %v771
  %v773 = vtanh.pop %v766
  %v775 = vrot.slane %v681, 4
  %v777 = vmul.f32 %v772, %v775
  %779 = vrot.lane.b32.xlu0 %v773, 64
  %v780 = vpop.permute.xlu0 %779
  %v782 = vmul.f32 %v772, %v780
  %784 = vrot.lane.b32.xlu0 %v782, 32
  %v785 = vpop.permute.xlu0 %784
  %v787 = vadd.f32 %v777, %v785
  %v788 = vtanh.pop %v787
  %790 = vrot.lane.b32.xlu0 %v788, 64
  %v791 = vpop.permute.xlu0 %790
  %v793 = vmul.f32 %v772, %v791
  %v795 = vrot.slane %v793, 4
  %796 = vrot.lane.b32.xlu0 %v795, 32
  %v797 = vpop.permute.xlu0 %796
  %v798 = vsel %vm169, %v797, 0
  %800 = vmatprep.subr.mxu0 0.0
  %801 = vmatpush1.msra.mxu0 %v29
  %802 = vmatprep.subr.mxu0 0.0
  %803 = vmatpush1.msra.mxu0 %v30
  %804 = vmatprep.subr.mxu0 0.0
  %805 = vmatpush1.msra.mxu0 %v31
  %806 = vmatprep.subr.mxu0 0.0
  %807 = vmatpush1.msra.mxu0 %v32
  %808 = vmatprep.subr.mxu0 0.0
  %809 = vmatpush1.msra.mxu0 0.0
  %810 = vmatprep.subr.mxu0 0.0
  %811 = vmatpush1.msra.mxu0 0.0
  %812 = vmatprep.subr.mxu0 0.0
  %813 = vmatpush1.msra.mxu0 0.0
  %814 = vmatprep.subr.mxu0 0.0
  %815 = vmatpush1.msra.mxu0 0.0
  %816 = vmatprep.subr.mxu0 0.0
  %817 = vmatpush1.msra.mxu0 0.0
  %818 = vmatprep.subr.mxu0 0.0
  %819 = vmatpush1.msra.mxu0 0.0
  %820 = vmatprep.subr.mxu0 0.0
  %821 = vmatpush1.msra.mxu0 0.0
  %822 = vmatprep.subr.mxu0 0.0
  %823 = vmatpush1.msra.mxu0 0.0
  %824 = vmatprep.subr.mxu0 0.0
  %825 = vmatpush1.msra.mxu0 0.0
  %826 = vmatprep.subr.mxu0 0.0
  %827 = vmatpush1.msra.mxu0 0.0
  %828 = vmatprep.subr.mxu0 0.0
  %829 = vmatpush1.msra.mxu0 0.0
  %830 = vmatprep.subr.mxu0 0.0
  %831 = vmatpush1.msra.mxu0 0.0
  %832 = vmatprep.subr.mxu0 0.0
  %833 = vmatpush1.msra.mxu0 0.0
  %834 = vmatprep.subr.mxu0 0.0
  %835 = vmatpush1.msra.mxu0 0.0
  %836 = vmatprep.subr.mxu0 0.0
  %837 = vmatpush1.msra.mxu0 0.0
  %838 = vmatprep.subr.mxu0 0.0
  %839 = vmatpush1.msra.mxu0 0.0
  %840 = vmatprep.subr.mxu0 0.0
  %841 = vmatpush1.msra.mxu0 0.0
  %842 = vmatprep.subr.mxu0 0.0
  %843 = vmatpush1.msra.mxu0 0.0
  %844 = vmatprep.subr.mxu0 0.0
  %845 = vmatpush1.msra.mxu0 0.0
  %846 = vmatprep.subr.mxu0 0.0
  %847 = vmatpush1.msra.mxu0 0.0
  %848 = vmatprep.subr.mxu0 0.0
  %849 = vmatpush1.msra.mxu0 0.0
  %850 = vmatprep.subr.mxu0 0.0
  %851 = vmatpush1.msra.mxu0 0.0
  %852 = vmatprep.subr.mxu0 0.0
  %853 = vmatpush1.msra.mxu0 0.0
  %854 = vmatprep.subr.mxu0 0.0
  %855 = vmatpush1.msra.mxu0 0.0
  %856 = vmatprep.subr.mxu0 0.0
  %857 = vmatpush1.msra.mxu0 0.0
  %858 = vmatprep.subr.mxu0 0.0
  %859 = vmatpush1.msra.mxu0 0.0
  %860 = vmatprep.subr.mxu0 0.0
  %861 = vmatpush1.msra.mxu0 0.0
  %862 = vmatprep.subr.mxu0 0.0
  %863 = vmatpush1.msra.mxu0 0.0
  %864 = vmatprep.mubr.f32.mxu0 0.0
  %865 = vmatmul.mubr.f32.gmra.mrb[0].mxu0 %v798
  %v866 = vpop.f32.mrb[0].mxu0
  %v867 = vadd.f32 0.0, %v866
  %v868 = vpop.f32.mrb[0].mxu0
  %869 = vdwg.mxu0
  %v870 = vadd.f32 %v166, %v867
  %v871 = vxor.u32 %v870, 2147483648
  %v872 = vmul.f32 %v871, 1.442695
  %v873 = vpow.pop %v872
  %v874 = vadd.f32 %v873, 1.0
  %v875 = vrcp.pop %v874
  %v876 = vmul.f32 1.0, %v875
  %v877 = vtanh.pop %v870
  %v879 = vrot.slane %v787, 4
  %v881 = vmul.f32 %v876, %v879
  %883 = vrot.lane.b32.xlu0 %v877, 64
  %v884 = vpop.permute.xlu0 %883
  %v886 = vmul.f32 %v876, %v884
  %888 = vrot.lane.b32.xlu0 %v886, 32
  %v889 = vpop.permute.xlu0 %888
  %v891 = vadd.f32 %v881, %v889
  %v892 = vtanh.pop %v891
  %894 = vrot.lane.b32.xlu0 %v892, 64
  %v895 = vpop.permute.xlu0 %894
  %v897 = vmul.f32 %v876, %v895
  %899 = vrot.lane.b32.xlu0 %v897, 32
  %v900 = vpop.permute.xlu0 %899
  %v901 = vsel %vm169, %v900, 0
  %903 = vmatprep.subr.mxu0 0.0
  %904 = vmatpush1.msra.mxu0 %v29
  %905 = vmatprep.subr.mxu0 0.0
  %906 = vmatpush1.msra.mxu0 %v30
  %907 = vmatprep.subr.mxu0 0.0
  %908 = vmatpush1.msra.mxu0 %v31
  %909 = vmatprep.subr.mxu0 0.0
  %910 = vmatpush1.msra.mxu0 %v32
  %911 = vmatprep.subr.mxu0 0.0
  %912 = vmatpush1.msra.mxu0 0.0
  %913 = vmatprep.subr.mxu0 0.0
  %914 = vmatpush1.msra.mxu0 0.0
  %915 = vmatprep.subr.mxu0 0.0
  %916 = vmatpush1.msra.mxu0 0.0
  %917 = vmatprep.subr.mxu0 0.0
  %918 = vmatpush1.msra.mxu0 0.0
  %919 = vmatprep.subr.mxu0 0.0
  %920 = vmatpush1.msra.mxu0 0.0
  %921 = vmatprep.subr.mxu0 0.0
  %922 = vmatpush1.msra.mxu0 0.0
  %923 = vmatprep.subr.mxu0 0.0
  %924 = vmatpush1.msra.mxu0 0.0
  %925 = vmatprep.subr.mxu0 0.0
  %926 = vmatpush1.msra.mxu0 0.0
  %927 = vmatprep.subr.mxu0 0.0
  %928 = vmatpush1.msra.mxu0 0.0
  %929 = vmatprep.subr.mxu0 0.0
  %930 = vmatpush1.msra.mxu0 0.0
  %931 = vmatprep.subr.mxu0 0.0
  %932 = vmatpush1.msra.mxu0 0.0
  %933 = vmatprep.subr.mxu0 0.0
  %934 = vmatpush1.msra.mxu0 0.0
  %935 = vmatprep.subr.mxu0 0.0
  %936 = vmatpush1.msra.mxu0 0.0
  %937 = vmatprep.subr.mxu0 0.0
  %938 = vmatpush1.msra.mxu0 0.0
  %939 = vmatprep.subr.mxu0 0.0
  %940 = vmatpush1.msra.mxu0 0.0
  %941 = vmatprep.subr.mxu0 0.0
  %942 = vmatpush1.msra.mxu0 0.0
  %943 = vmatprep.subr.mxu0 0.0
  %944 = vmatpush1.msra.mxu0 0.0
  %945 = vmatprep.subr.mxu0 0.0
  %946 = vmatpush1.msra.mxu0 0.0
  %947 = vmatprep.subr.mxu0 0.0
  %948 = vmatpush1.msra.mxu0 0.0
  %949 = vmatprep.subr.mxu0 0.0
  %950 = vmatpush1.msra.mxu0 0.0
  %951 = vmatprep.subr.mxu0 0.0
  %952 = vmatpush1.msra.mxu0 0.0
  %953 = vmatprep.subr.mxu0 0.0
  %954 = vmatpush1.msra.mxu0 0.0
  %955 = vmatprep.subr.mxu0 0.0
  %956 = vmatpush1.msra.mxu0 0.0
  %957 = vmatprep.subr.mxu0 0.0
  %958 = vmatpush1.msra.mxu0 0.0
  %959 = vmatprep.subr.mxu0 0.0
  %960 = vmatpush1.msra.mxu0 0.0
  %961 = vmatprep.subr.mxu0 0.0
  %962 = vmatpush1.msra.mxu0 0.0
  %963 = vmatprep.subr.mxu0 0.0
  %964 = vmatpush1.msra.mxu0 0.0
  %965 = vmatprep.subr.mxu0 0.0
  %966 = vmatpush1.msra.mxu0 0.0
  %967 = vmatprep.mubr.f32.mxu0 0.0
  %968 = vmatmul.mubr.f32.gmra.mrb[0].mxu0 %v901
  %v969 = vpop.f32.mrb[0].mxu0
  %v970 = vadd.f32 0.0, %v969
  %v971 = vpop.f32.mrb[0].mxu0
  %972 = vdwg.mxu0
  %v974 = vrot.slane %v970, 4
  %v976 = vadd.f32 %v166, %v974
  %v977 = vxor.u32 %v976, 2147483648
  %v978 = vmul.f32 %v977, 1.442695
  %v979 = vpow.pop %v978
  %v980 = vadd.f32 %v979, 1.0
  %v981 = vrcp.pop %v980
  %v982 = vmul.f32 1.0, %v981
  %v983 = vtanh.pop %v976
  %v985 = vrot.slane %v891, 4
  %v987 = vmul.f32 %v982, %v985
  %989 = vrot.lane.b32.xlu0 %v983, 64
  %v990 = vpop.permute.xlu0 %989
  %v992 = vmul.f32 %v982, %v990
  %994 = vrot.lane.b32.xlu0 %v992, 32
  %v995 = vpop.permute.xlu0 %994
  %v997 = vadd.f32 %v987, %v995
  %v998 = vtanh.pop %v997
  %1000 = vrot.lane.b32.xlu0 %v998, 64
  %v1001 = vpop.permute.xlu0 %1000
  %v1003 = vmul.f32 %v982, %v1001
  %v1005 = vrot.slane %v1003, 4
  %1006 = vrot.lane.b32.xlu0 %v1005, 32
  %v1007 = vpop.permute.xlu0 %1006
  %v1008 = vsel %vm169, %v1007, 0
  %1010 = vmatprep.subr.mxu0 0.0
  %1011 = vmatpush1.msra.mxu0 %v33
  %1012 = vmatprep.subr.mxu0 0.0
  %1013 = vmatpush1.msra.mxu0 %v34
  %1014 = vmatprep.subr.mxu0 0.0
  %1015 = vmatpush1.msra.mxu0 %v35
  %1016 = vmatprep.subr.mxu0 0.0
  %1017 = vmatpush1.msra.mxu0 %v36
  %1018 = vmatprep.subr.mxu0 0.0
  %1019 = vmatpush1.msra.mxu0 0.0
  %1020 = vmatprep.subr.mxu0 0.0
  %1021 = vmatpush1.msra.mxu0 0.0
  %1022 = vmatprep.subr.mxu0 0.0
  %1023 = vmatpush1.msra.mxu0 0.0
  %1024 = vmatprep.subr.mxu0 0.0
  %1025 = vmatpush1.msra.mxu0 0.0
  %1026 = vmatprep.subr.mxu0 0.0
  %1027 = vmatpush1.msra.mxu0 0.0
  %1028 = vmatprep.subr.mxu0 0.0
  %1029 = vmatpush1.msra.mxu0 0.0
  %1030 = vmatprep.subr.mxu0 0.0
  %1031 = vmatpush1.msra.mxu0 0.0
  %1032 = vmatprep.subr.mxu0 0.0
  %1033 = vmatpush1.msra.mxu0 0.0
  %1034 = vmatprep.subr.mxu0 0.0
  %1035 = vmatpush1.msra.mxu0 0.0
  %1036 = vmatprep.subr.mxu0 0.0
  %1037 = vmatpush1.msra.mxu0 0.0
  %1038 = vmatprep.subr.mxu0 0.0
  %1039 = vmatpush1.msra.mxu0 0.0
  %1040 = vmatprep.subr.mxu0 0.0
  %1041 = vmatpush1.msra.mxu0 0.0
  %1042 = vmatprep.subr.mxu0 0.0
  %1043 = vmatpush1.msra.mxu0 0.0
  %1044 = vmatprep.subr.mxu0 0.0
  %1045 = vmatpush1.msra.mxu0 0.0
  %1046 = vmatprep.subr.mxu0 0.0
  %1047 = vmatpush1.msra.mxu0 0.0
  %1048 = vmatprep.subr.mxu0 0.0
  %1049 = vmatpush1.msra.mxu0 0.0
  %1050 = vmatprep.subr.mxu0 0.0
  %1051 = vmatpush1.msra.mxu0 0.0
  %1052 = vmatprep.subr.mxu0 0.0
  %1053 = vmatpush1.msra.mxu0 0.0
  %1054 = vmatprep.subr.mxu0 0.0
  %1055 = vmatpush1.msra.mxu0 0.0
  %1056 = vmatprep.subr.mxu0 0.0
  %1057 = vmatpush1.msra.mxu0 0.0
  %1058 = vmatprep.subr.mxu0 0.0
  %1059 = vmatpush1.msra.mxu0 0.0
  %1060 = vmatprep.subr.mxu0 0.0
  %1061 = vmatpush1.msra.mxu0 0.0
  %1062 = vmatprep.subr.mxu0 0.0
  %1063 = vmatpush1.msra.mxu0 0.0
  %1064 = vmatprep.subr.mxu0 0.0
  %1065 = vmatpush1.msra.mxu0 0.0
  %1066 = vmatprep.subr.mxu0 0.0
  %1067 = vmatpush1.msra.mxu0 0.0
  %1068 = vmatprep.subr.mxu0 0.0
  %1069 = vmatpush1.msra.mxu0 0.0
  %1070 = vmatprep.subr.mxu0 0.0
  %1071 = vmatpush1.msra.mxu0 0.0
  %1072 = vmatprep.subr.mxu0 0.0
  %1073 = vmatpush1.msra.mxu0 0.0
  %1074 = vmatprep.mubr.f32.mxu0 0.0
  %1075 = vmatmul.mubr.f32.gmra.mrb[0].mxu0 %v1008
  %v1076 = vpop.f32.mrb[0].mxu0
  %v1077 = vadd.f32 %v53, %v1076
  %v1078 = vpop.f32.mrb[0].mxu0
  %1079 = vdwg.mxu0
  %vm1080 = vcmask 11264
  %1081 = vst.msk [vmem:[%s8] sm:$0xf] %vm1080, %v1077
  %1082 = vmatprep.subr.mxu0 0.0
  %1083 = vmatpush1.msra.mxu0 %v37
  %1084 = vmatprep.subr.mxu0 0.0
  %1085 = vmatpush1.msra.mxu0 %v38
  %1086 = vmatprep.subr.mxu0 0.0
  %1087 = vmatpush1.msra.mxu0 %v39
  %1088 = vmatprep.subr.mxu0 0.0
  %1089 = vmatpush1.msra.mxu0 %v40
  %1090 = vmatprep.subr.mxu0 0.0
  %1091 = vmatpush1.msra.mxu0 0.0
  %1092 = vmatprep.subr.mxu0 0.0
  %1093 = vmatpush1.msra.mxu0 0.0
  %1094 = vmatprep.subr.mxu0 0.0
  %1095 = vmatpush1.msra.mxu0 0.0
  %1096 = vmatprep.subr.mxu0 0.0
  %1097 = vmatpush1.msra.mxu0 0.0
  %1098 = vmatprep.subr.mxu0 0.0
  %1099 = vmatpush1.msra.mxu0 0.0
  %1100 = vmatprep.subr.mxu0 0.0
  %1101 = vmatpush1.msra.mxu0 0.0
  %1102 = vmatprep.subr.mxu0 0.0
  %1103 = vmatpush1.msra.mxu0 0.0
  %1104 = vmatprep.subr.mxu0 0.0
  %1105 = vmatpush1.msra.mxu0 0.0
  %1106 = vmatprep.subr.mxu0 0.0
  %1107 = vmatpush1.msra.mxu0 0.0
  %1108 = vmatprep.subr.mxu0 0.0
  %1109 = vmatpush1.msra.mxu0 0.0
  %1110 = vmatprep.subr.mxu0 0.0
  %1111 = vmatpush1.msra.mxu0 0.0
  %1112 = vmatprep.subr.mxu0 0.0
  %1113 = vmatpush1.msra.mxu0 0.0
  %1114 = vmatprep.subr.mxu0 0.0
  %1115 = vmatpush1.msra.mxu0 0.0
  %1116 = vmatprep.subr.mxu0 0.0
  %1117 = vmatpush1.msra.mxu0 0.0
  %1118 = vmatprep.subr.mxu0 0.0
  %1119 = vmatpush1.msra.mxu0 0.0
  %1120 = vmatprep.subr.mxu0 0.0
  %1121 = vmatpush1.msra.mxu0 0.0
  %1122 = vmatprep.subr.mxu0 0.0
  %1123 = vmatpush1.msra.mxu0 0.0
  %1124 = vmatprep.subr.mxu0 0.0
  %1125 = vmatpush1.msra.mxu0 0.0
  %1126 = vmatprep.subr.mxu0 0.0
  %1127 = vmatpush1.msra.mxu0 0.0
  %1128 = vmatprep.subr.mxu0 0.0
  %1129 = vmatpush1.msra.mxu0 0.0
  %1130 = vmatprep.subr.mxu0 0.0
  %1131 = vmatpush1.msra.mxu0 0.0
  %1132 = vmatprep.subr.mxu0 0.0
  %1133 = vmatpush1.msra.mxu0 0.0
  %1134 = vmatprep.subr.mxu0 0.0
  %1135 = vmatpush1.msra.mxu0 0.0
  %1136 = vmatprep.subr.mxu0 0.0
  %1137 = vmatpush1.msra.mxu0 0.0
  %1138 = vmatprep.subr.mxu0 0.0
  %1139 = vmatpush1.msra.mxu0 0.0
  %1140 = vmatprep.subr.mxu0 0.0
  %1141 = vmatpush1.msra.mxu0 0.0
  %1142 = vmatprep.subr.mxu0 0.0
  %1143 = vmatpush1.msra.mxu0 0.0
  %1144 = vmatprep.subr.mxu0 0.0
  %1145 = vmatpush1.msra.mxu0 0.0
  %1146 = vmatprep.mubr.f32.mxu0 0.0
  %1147 = vmatmul.mubr.f32.gmra.mrb[0].mxu0 %v1008
  %v1148 = vpop.f32.mrb[0].mxu0
  %v1149 = vadd.f32 %v46, %v1148
  %v1150 = vpop.f32.mrb[0].mxu0
  %1151 = vdwg.mxu0
  %v1152 = vxor.u32 %v1149, 2147483648
  %v1153 = vmul.f32 %v1152, 1.442695
  %v1154 = vpow.pop %v1153
  %v1155 = vadd.f32 %v1154, 1.0
  %v1156 = vrcp.pop %v1155
  %v1157 = vmul.f32 1.0, %v1156
  %v1158 = vtanh.pop %v1149
  %v1160 = vrot.slane %v997, 4
  %v1162 = vmul.f32 %v1157, %v1160
  %1164 = vrot.lane.b32.xlu0 %v1158, 64
  %v1165 = vpop.permute.xlu0 %1164
  %v1167 = vmul.f32 %v1157, %v1165
  %1169 = vrot.lane.b32.xlu0 %v1167, 32
  %v1170 = vpop.permute.xlu0 %1169
  %v1172 = vadd.f32 %v1162, %v1170
  %v1173 = vtanh.pop %v1172
  %1175 = vrot.lane.b32.xlu0 %v1173, 64
  %v1176 = vpop.permute.xlu0 %1175
  %v1178 = vmul.f32 %v1157, %v1176
  %1180 = vrot.lane.b32.xlu0 %v1178, 32
  %v1181 = vpop.permute.xlu0 %1180
  %v1182 = vsel %vm169, %v1181, 0
  %1184 = vmatprep.subr.mxu0 0.0
  %1185 = vmatpush1.msra.mxu0 %v33
  %1186 = vmatprep.subr.mxu0 0.0
  %1187 = vmatpush1.msra.mxu0 %v34
  %1188 = vmatprep.subr.mxu0 0.0
  %1189 = vmatpush1.msra.mxu0 %v35
  %1190 = vmatprep.subr.mxu0 0.0
  %1191 = vmatpush1.msra.mxu0 %v36
  %1192 = vmatprep.subr.mxu0 0.0
  %1193 = vmatpush1.msra.mxu0 0.0
  %1194 = vmatprep.subr.mxu0 0.0
  %1195 = vmatpush1.msra.mxu0 0.0
  %1196 = vmatprep.subr.mxu0 0.0
  %1197 = vmatpush1.msra.mxu0 0.0
  %1198 = vmatprep.subr.mxu0 0.0
  %1199 = vmatpush1.msra.mxu0 0.0
  %1200 = vmatprep.subr.mxu0 0.0
  %1201 = vmatpush1.msra.mxu0 0.0
  %1202 = vmatprep.subr.mxu0 0.0
  %1203 = vmatpush1.msra.mxu0 0.0
  %1204 = vmatprep.subr.mxu0 0.0
  %1205 = vmatpush1.msra.mxu0 0.0
  %1206 = vmatprep.subr.mxu0 0.0
  %1207 = vmatpush1.msra.mxu0 0.0
  %1208 = vmatprep.subr.mxu0 0.0
  %1209 = vmatpush1.msra.mxu0 0.0
  %1210 = vmatprep.subr.mxu0 0.0
  %1211 = vmatpush1.msra.mxu0 0.0
  %1212 = vmatprep.subr.mxu0 0.0
  %1213 = vmatpush1.msra.mxu0 0.0
  %1214 = vmatprep.subr.mxu0 0.0
  %1215 = vmatpush1.msra.mxu0 0.0
  %1216 = vmatprep.subr.mxu0 0.0
  %1217 = vmatpush1.msra.mxu0 0.0
  %1218 = vmatprep.subr.mxu0 0.0
  %1219 = vmatpush1.msra.mxu0 0.0
  %1220 = vmatprep.subr.mxu0 0.0
  %1221 = vmatpush1.msra.mxu0 0.0
  %1222 = vmatprep.subr.mxu0 0.0
  %1223 = vmatpush1.msra.mxu0 0.0
  %1224 = vmatprep.subr.mxu0 0.0
  %1225 = vmatpush1.msra.mxu0 0.0
  %1226 = vmatprep.subr.mxu0 0.0
  %1227 = vmatpush1.msra.mxu0 0.0
  %1228 = vmatprep.subr.mxu0 0.0
  %1229 = vmatpush1.msra.mxu0 0.0
  %1230 = vmatprep.subr.mxu0 0.0
  %1231 = vmatpush1.msra.mxu0 0.0
  %1232 = vmatprep.subr.mxu0 0.0
  %1233 = vmatpush1.msra.mxu0 0.0
  %1234 = vmatprep.subr.mxu0 0.0
  %1235 = vmatpush1.msra.mxu0 0.0
  %1236 = vmatprep.subr.mxu0 0.0
  %1237 = vmatpush1.msra.mxu0 0.0
  %1238 = vmatprep.subr.mxu0 0.0
  %1239 = vmatpush1.msra.mxu0 0.0
  %1240 = vmatprep.subr.mxu0 0.0
  %1241 = vmatpush1.msra.mxu0 0.0
  %1242 = vmatprep.subr.mxu0 0.0
  %1243 = vmatpush1.msra.mxu0 0.0
  %1244 = vmatprep.subr.mxu0 0.0
  %1245 = vmatpush1.msra.mxu0 0.0
  %1246 = vmatprep.subr.mxu0 0.0
  %1247 = vmatpush1.msra.mxu0 0.0
  %1248 = vmatprep.mubr.f32.mxu0 0.0
  %1249 = vmatmul.mubr.f32.gmra.mrb[0].mxu0 %v1182
  %v1250 = vpop.f32.mrb[0].mxu0
  %v1251 = vadd.f32 %v53, %v1250
  %v1252 = vpop.f32.mrb[0].mxu0
  %1253 = vdwg.mxu0
  %s1254 = scalar_lea.vmem %s8, 4
  %1255 = vst.msk [vmem:[%s1254] sm:$0xf] %vm1080, %v1251
  %1256 = vmatprep.subr.mxu0 0.0
  %1257 = vmatpush1.msra.mxu0 %v37
  %1258 = vmatprep.subr.mxu0 0.0
  %1259 = vmatpush1.msra.mxu0 %v38
  %1260 = vmatprep.subr.mxu0 0.0
  %1261 = vmatpush1.msra.mxu0 %v39
  %1262 = vmatprep.subr.mxu0 0.0
  %1263 = vmatpush1.msra.mxu0 %v40
  %1264 = vmatprep.subr.mxu0 0.0
  %1265 = vmatpush1.msra.mxu0 0.0
  %1266 = vmatprep.subr.mxu0 0.0
  %1267 = vmatpush1.msra.mxu0 0.0
  %1268 = vmatprep.subr.mxu0 0.0
  %1269 = vmatpush1.msra.mxu0 0.0
  %1270 = vmatprep.subr.mxu0 0.0
  %1271 = vmatpush1.msra.mxu0 0.0
  %1272 = vmatprep.subr.mxu0 0.0
  %1273 = vmatpush1.msra.mxu0 0.0
  %1274 = vmatprep.subr.mxu0 0.0
  %1275 = vmatpush1.msra.mxu0 0.0
  %1276 = vmatprep.subr.mxu0 0.0
  %1277 = vmatpush1.msra.mxu0 0.0
  %1278 = vmatprep.subr.mxu0 0.0
  %1279 = vmatpush1.msra.mxu0 0.0
  %1280 = vmatprep.subr.mxu0 0.0
  %1281 = vmatpush1.msra.mxu0 0.0
  %1282 = vmatprep.subr.mxu0 0.0
  %1283 = vmatpush1.msra.mxu0 0.0
  %1284 = vmatprep.subr.mxu0 0.0
  %1285 = vmatpush1.msra.mxu0 0.0
  %1286 = vmatprep.subr.mxu0 0.0
  %1287 = vmatpush1.msra.mxu0 0.0
  %1288 = vmatprep.subr.mxu0 0.0
  %1289 = vmatpush1.msra.mxu0 0.0
  %1290 = vmatprep.subr.mxu0 0.0
  %1291 = vmatpush1.msra.mxu0 0.0
  %1292 = vmatprep.subr.mxu0 0.0
  %1293 = vmatpush1.msra.mxu0 0.0
  %1294 = vmatprep.subr.mxu0 0.0
  %1295 = vmatpush1.msra.mxu0 0.0
  %1296 = vmatprep.subr.mxu0 0.0
  %1297 = vmatpush1.msra.mxu0 0.0
  %1298 = vmatprep.subr.mxu0 0.0
  %1299 = vmatpush1.msra.mxu0 0.0
  %1300 = vmatprep.subr.mxu0 0.0
  %1301 = vmatpush1.msra.mxu0 0.0
  %1302 = vmatprep.subr.mxu0 0.0
  %1303 = vmatpush1.msra.mxu0 0.0
  %1304 = vmatprep.subr.mxu0 0.0
  %1305 = vmatpush1.msra.mxu0 0.0
  %1306 = vmatprep.subr.mxu0 0.0
  %1307 = vmatpush1.msra.mxu0 0.0
  %1308 = vmatprep.subr.mxu0 0.0
  %1309 = vmatpush1.msra.mxu0 0.0
  %1310 = vmatprep.subr.mxu0 0.0
  %1311 = vmatpush1.msra.mxu0 0.0
  %1312 = vmatprep.subr.mxu0 0.0
  %1313 = vmatpush1.msra.mxu0 0.0
  %1314 = vmatprep.subr.mxu0 0.0
  %1315 = vmatpush1.msra.mxu0 0.0
  %1316 = vmatprep.subr.mxu0 0.0
  %1317 = vmatpush1.msra.mxu0 0.0
  %1318 = vmatprep.subr.mxu0 0.0
  %1319 = vmatpush1.msra.mxu0 0.0
  %1320 = vmatprep.mubr.f32.mxu0 0.0
  %1321 = vmatmul.mubr.f32.gmra.mrb[0].mxu0 %v1182
  %v1322 = vpop.f32.mrb[0].mxu0
  %v1323 = vadd.f32 %v46, %v1322
  %v1324 = vpop.f32.mrb[0].mxu0
  %1325 = vdwg.mxu0
  %v1326 = vxor.u32 %v1323, 2147483648
  %v1327 = vmul.f32 %v1326, 1.442695
  %v1328 = vpow.pop %v1327
  %v1329 = vadd.f32 %v1328, 1.0
  %v1330 = vrcp.pop %v1329
  %v1331 = vmul.f32 1.0, %v1330
  %v1332 = vtanh.pop %v1323
  %v1333 = vmul.f32 %v1331, %v1172
  %1335 = vrot.lane.b32.xlu0 %v1332, 64
  %v1336 = vpop.permute.xlu0 %1335
  %v1338 = vmul.f32 %v1331, %v1336
  %1340 = vrot.lane.b32.xlu0 %v1338, 32
  %v1341 = vpop.permute.xlu0 %1340
  %v1343 = vadd.f32 %v1333, %v1341
  %v1344 = vtanh.pop %v1343
  %1346 = vrot.lane.b32.xlu0 %v1344, 64
  %v1347 = vpop.permute.xlu0 %1346
  %v1349 = vmul.f32 %v1331, %v1347
  %1351 = vrot.lane.b32.xlu0 %v1349, 32
  %v1352 = vpop.permute.xlu0 %1351
  %v1353 = vsel %vm169, %v1352, 0
  %1355 = vmatprep.subr.mxu0 0.0
  %1356 = vmatpush1.msra.mxu0 %v33
  %1357 = vmatprep.subr.mxu0 0.0
  %1358 = vmatpush1.msra.mxu0 %v34
  %1359 = vmatprep.subr.mxu0 0.0
  %1360 = vmatpush1.msra.mxu0 %v35
  %1361 = vmatprep.subr.mxu0 0.0
  %1362 = vmatpush1.msra.mxu0 %v36
  %1363 = vmatprep.subr.mxu0 0.0
  %1364 = vmatpush1.msra.mxu0 0.0
  %1365 = vmatprep.subr.mxu0 0.0
  %1366 = vmatpush1.msra.mxu0 0.0
  %1367 = vmatprep.subr.mxu0 0.0
  %1368 = vmatpush1.msra.mxu0 0.0
  %1369 = vmatprep.subr.mxu0 0.0
  %1370 = vmatpush1.msra.mxu0 0.0
  %1371 = vmatprep.subr.mxu0 0.0
  %1372 = vmatpush1.msra.mxu0 0.0
  %1373 = vmatprep.subr.mxu0 0.0
  %1374 = vmatpush1.msra.mxu0 0.0
  %1375 = vmatprep.subr.mxu0 0.0
  %1376 = vmatpush1.msra.mxu0 0.0
  %1377 = vmatprep.subr.mxu0 0.0
  %1378 = vmatpush1.msra.mxu0 0.0
  %1379 = vmatprep.subr.mxu0 0.0
  %1380 = vmatpush1.msra.mxu0 0.0
  %1381 = vmatprep.subr.mxu0 0.0
  %1382 = vmatpush1.msra.mxu0 0.0
  %1383 = vmatprep.subr.mxu0 0.0
  %1384 = vmatpush1.msra.mxu0 0.0
  %1385 = vmatprep.subr.mxu0 0.0
  %1386 = vmatpush1.msra.mxu0 0.0
  %1387 = vmatprep.subr.mxu0 0.0
  %1388 = vmatpush1.msra.mxu0 0.0
  %1389 = vmatprep.subr.mxu0 0.0
  %1390 = vmatpush1.msra.mxu0 0.0
  %1391 = vmatprep.subr.mxu0 0.0
  %1392 = vmatpush1.msra.mxu0 0.0
  %1393 = vmatprep.subr.mxu0 0.0
  %1394 = vmatpush1.msra.mxu0 0.0
  %1395 = vmatprep.subr.mxu0 0.0
  %1396 = vmatpush1.msra.mxu0 0.0
  %1397 = vmatprep.subr.mxu0 0.0
  %1398 = vmatpush1.msra.mxu0 0.0
  %1399 = vmatprep.subr.mxu0 0.0
  %1400 = vmatpush1.msra.mxu0 0.0
  %1401 = vmatprep.subr.mxu0 0.0
  %1402 = vmatpush1.msra.mxu0 0.0
  %1403 = vmatprep.subr.mxu0 0.0
  %1404 = vmatpush1.msra.mxu0 0.0
  %1405 = vmatprep.subr.mxu0 0.0
  %1406 = vmatpush1.msra.mxu0 0.0
  %1407 = vmatprep.subr.mxu0 0.0
  %1408 = vmatpush1.msra.mxu0 0.0
  %1409 = vmatprep.subr.mxu0 0.0
  %1410 = vmatpush1.msra.mxu0 0.0
  %1411 = vmatprep.subr.mxu0 0.0
  %1412 = vmatpush1.msra.mxu0 0.0
  %1413 = vmatprep.subr.mxu0 0.0
  %1414 = vmatpush1.msra.mxu0 0.0
  %1415 = vmatprep.subr.mxu0 0.0
  %1416 = vmatpush1.msra.mxu0 0.0
  %1417 = vmatprep.subr.mxu0 0.0
  %1418 = vmatpush1.msra.mxu0 0.0
  %1419 = vmatprep.mubr.f32.mxu0 0.0
  %1420 = vmatmul.mubr.f32.gmra.mrb[0].mxu0 %v1353
  %v1421 = vpop.f32.mrb[0].mxu0
  %v1422 = vadd.f32 %v53, %v1421
  %v1423 = vpop.f32.mrb[0].mxu0
  %1424 = vdwg.mxu0
  %s1425 = scalar_lea.vmem %s8, 8
  %1426 = vst.msk [vmem:[%s1425] sm:$0xf] %vm1080, %v1422
  %1427 = vmatprep.subr.mxu0 0.0
  %1428 = vmatpush1.msra.mxu0 %v37
  %1429 = vmatprep.subr.mxu0 0.0
  %1430 = vmatpush1.msra.mxu0 %v38
  %1431 = vmatprep.subr.mxu0 0.0
  %1432 = vmatpush1.msra.mxu0 %v39
  %1433 = vmatprep.subr.mxu0 0.0
  %1434 = vmatpush1.msra.mxu0 %v40
  %1435 = vmatprep.subr.mxu0 0.0
  %1436 = vmatpush1.msra.mxu0 0.0
  %1437 = vmatprep.subr.mxu0 0.0
  %1438 = vmatpush1.msra.mxu0 0.0
  %1439 = vmatprep.subr.mxu0 0.0
  %1440 = vmatpush1.msra.mxu0 0.0
  %1441 = vmatprep.subr.mxu0 0.0
  %1442 = vmatpush1.msra.mxu0 0.0
  %1443 = vmatprep.subr.mxu0 0.0
  %1444 = vmatpush1.msra.mxu0 0.0
  %1445 = vmatprep.subr.mxu0 0.0
  %1446 = vmatpush1.msra.mxu0 0.0
  %1447 = vmatprep.subr.mxu0 0.0
  %1448 = vmatpush1.msra.mxu0 0.0
  %1449 = vmatprep.subr.mxu0 0.0
  %1450 = vmatpush1.msra.mxu0 0.0
  %1451 = vmatprep.subr.mxu0 0.0
  %1452 = vmatpush1.msra.mxu0 0.0
  %1453 = vmatprep.subr.mxu0 0.0
  %1454 = vmatpush1.msra.mxu0 0.0
  %1455 = vmatprep.subr.mxu0 0.0
  %1456 = vmatpush1.msra.mxu0 0.0
  %1457 = vmatprep.subr.mxu0 0.0
  %1458 = vmatpush1.msra.mxu0 0.0
  %1459 = vmatprep.subr.mxu0 0.0
  %1460 = vmatpush1.msra.mxu0 0.0
  %1461 = vmatprep.subr.mxu0 0.0
  %1462 = vmatpush1.msra.mxu0 0.0
  %1463 = vmatprep.subr.mxu0 0.0
  %1464 = vmatpush1.msra.mxu0 0.0
  %1465 = vmatprep.subr.mxu0 0.0
  %1466 = vmatpush1.msra.mxu0 0.0
  %1467 = vmatprep.subr.mxu0 0.0
  %1468 = vmatpush1.msra.mxu0 0.0
  %1469 = vmatprep.subr.mxu0 0.0
  %1470 = vmatpush1.msra.mxu0 0.0
  %1471 = vmatprep.subr.mxu0 0.0
  %1472 = vmatpush1.msra.mxu0 0.0
  %1473 = vmatprep.subr.mxu0 0.0
  %1474 = vmatpush1.msra.mxu0 0.0
  %1475 = vmatprep.subr.mxu0 0.0
  %1476 = vmatpush1.msra.mxu0 0.0
  %1477 = vmatprep.subr.mxu0 0.0
  %1478 = vmatpush1.msra.mxu0 0.0
  %1479 = vmatprep.subr.mxu0 0.0
  %1480 = vmatpush1.msra.mxu0 0.0
  %1481 = vmatprep.subr.mxu0 0.0
  %1482 = vmatpush1.msra.mxu0 0.0
  %1483 = vmatprep.subr.mxu0 0.0
  %1484 = vmatpush1.msra.mxu0 0.0
  %1485 = vmatprep.subr.mxu0 0.0
  %1486 = vmatpush1.msra.mxu0 0.0
  %1487 = vmatprep.subr.mxu0 0.0
  %1488 = vmatpush1.msra.mxu0 0.0
  %1489 = vmatprep.subr.mxu0 0.0
  %1490 = vmatpush1.msra.mxu0 0.0
  %1491 = vmatprep.mubr.f32.mxu0 0.0
  %1492 = vmatmul.mubr.f32.gmra.mrb[0].mxu0 %v1353
  %v1493 = vpop.f32.mrb[0].mxu0
  %v1494 = vadd.f32 %v46, %v1493
  %v1495 = vpop.f32.mrb[0].mxu0
  %1496 = vdwg.mxu0
  %v1497 = vxor.u32 %v1494, 2147483648
  %v1498 = vmul.f32 %v1497, 1.442695
  %v1499 = vpow.pop %v1498
  %v1500 = vadd.f32 %v1499, 1.0
  %v1501 = vrcp.pop %v1500
  %v1502 = vmul.f32 1.0, %v1501
  %v1503 = vtanh.pop %v1494
  %v1504 = vmul.f32 %v1502, %v1343
  %1506 = vrot.lane.b32.xlu0 %v1503, 64
  %v1507 = vpop.permute.xlu0 %1506
  %v1509 = vmul.f32 %v1502, %v1507
  %1511 = vrot.lane.b32.xlu0 %v1509, 32
  %v1512 = vpop.permute.xlu0 %1511
  %v1514 = vadd.f32 %v1504, %v1512
  %v1515 = vtanh.pop %v1514
  %1517 = vrot.lane.b32.xlu0 %v1515, 64
  %v1518 = vpop.permute.xlu0 %1517
  %v1520 = vmul.f32 %v1502, %v1518
  %1522 = vrot.lane.b32.xlu0 %v1520, 32
  %v1523 = vpop.permute.xlu0 %1522
  %v1524 = vsel %vm169, %v1523, 0
  %1526 = vmatprep.subr.mxu0 0.0
  %1527 = vmatpush1.msra.mxu0 %v33
  %1528 = vmatprep.subr.mxu0 0.0
  %1529 = vmatpush1.msra.mxu0 %v34
  %1530 = vmatprep.subr.mxu0 0.0
  %1531 = vmatpush1.msra.mxu0 %v35
  %1532 = vmatprep.subr.mxu0 0.0
  %1533 = vmatpush1.msra.mxu0 %v36
  %1534 = vmatprep.subr.mxu0 0.0
  %1535 = vmatpush1.msra.mxu0 0.0
  %1536 = vmatprep.subr.mxu0 0.0
  %1537 = vmatpush1.msra.mxu0 0.0
  %1538 = vmatprep.subr.mxu0 0.0
  %1539 = vmatpush1.msra.mxu0 0.0
  %1540 = vmatprep.subr.mxu0 0.0
  %1541 = vmatpush1.msra.mxu0 0.0
  %1542 = vmatprep.subr.mxu0 0.0
  %1543 = vmatpush1.msra.mxu0 0.0
  %1544 = vmatprep.subr.mxu0 0.0
  %1545 = vmatpush1.msra.mxu0 0.0
  %1546 = vmatprep.subr.mxu0 0.0
  %1547 = vmatpush1.msra.mxu0 0.0
  %1548 = vmatprep.subr.mxu0 0.0
  %1549 = vmatpush1.msra.mxu0 0.0
  %1550 = vmatprep.subr.mxu0 0.0
  %1551 = vmatpush1.msra.mxu0 0.0
  %1552 = vmatprep.subr.mxu0 0.0
  %1553 = vmatpush1.msra.mxu0 0.0
  %1554 = vmatprep.subr.mxu0 0.0
  %1555 = vmatpush1.msra.mxu0 0.0
  %1556 = vmatprep.subr.mxu0 0.0
  %1557 = vmatpush1.msra.mxu0 0.0
  %1558 = vmatprep.subr.mxu0 0.0
  %1559 = vmatpush1.msra.mxu0 0.0
  %1560 = vmatprep.subr.mxu0 0.0
  %1561 = vmatpush1.msra.mxu0 0.0
  %1562 = vmatprep.subr.mxu0 0.0
  %1563 = vmatpush1.msra.mxu0 0.0
  %1564 = vmatprep.subr.mxu0 0.0
  %1565 = vmatpush1.msra.mxu0 0.0
  %1566 = vmatprep.subr.mxu0 0.0
  %1567 = vmatpush1.msra.mxu0 0.0
  %1568 = vmatprep.subr.mxu0 0.0
  %1569 = vmatpush1.msra.mxu0 0.0
  %1570 = vmatprep.subr.mxu0 0.0
  %1571 = vmatpush1.msra.mxu0 0.0
  %1572 = vmatprep.subr.mxu0 0.0
  %1573 = vmatpush1.msra.mxu0 0.0
  %1574 = vmatprep.subr.mxu0 0.0
  %1575 = vmatpush1.msra.mxu0 0.0
  %1576 = vmatprep.subr.mxu0 0.0
  %1577 = vmatpush1.msra.mxu0 0.0
  %1578 = vmatprep.subr.mxu0 0.0
  %1579 = vmatpush1.msra.mxu0 0.0
  %1580 = vmatprep.subr.mxu0 0.0
  %1581 = vmatpush1.msra.mxu0 0.0
  %1582 = vmatprep.subr.mxu0 0.0
  %1583 = vmatpush1.msra.mxu0 0.0
  %1584 = vmatprep.subr.mxu0 0.0
  %1585 = vmatpush1.msra.mxu0 0.0
  %1586 = vmatprep.subr.mxu0 0.0
  %1587 = vmatpush1.msra.mxu0 0.0
  %1588 = vmatprep.subr.mxu0 0.0
  %1589 = vmatpush1.msra.mxu0 0.0
  %1590 = vmatprep.mubr.f32.mxu0 0.0
  %1591 = vmatmul.mubr.f32.gmra.mrb[0].mxu0 %v1524
  %v1592 = vpop.f32.mrb[0].mxu0
  %v1593 = vadd.f32 %v53, %v1592
  %v1594 = vpop.f32.mrb[0].mxu0
  %1595 = vdwg.mxu0
  %s1596 = scalar_lea.vmem %s8, 12
  %1597 = vst.msk [vmem:[%s1596] sm:$0xf] %vm1080, %v1593
  %1598 = vmatprep.subr.mxu0 0.0
  %1599 = vmatpush1.msra.mxu0 %v37
  %1600 = vmatprep.subr.mxu0 0.0
  %1601 = vmatpush1.msra.mxu0 %v38
  %1602 = vmatprep.subr.mxu0 0.0
  %1603 = vmatpush1.msra.mxu0 %v39
  %1604 = vmatprep.subr.mxu0 0.0
  %1605 = vmatpush1.msra.mxu0 %v40
  %1606 = vmatprep.subr.mxu0 0.0
  %1607 = vmatpush1.msra.mxu0 0.0
  %1608 = vmatprep.subr.mxu0 0.0
  %1609 = vmatpush1.msra.mxu0 0.0
  %1610 = vmatprep.subr.mxu0 0.0
  %1611 = vmatpush1.msra.mxu0 0.0
  %1612 = vmatprep.subr.mxu0 0.0
  %1613 = vmatpush1.msra.mxu0 0.0
  %1614 = vmatprep.subr.mxu0 0.0
  %1615 = vmatpush1.msra.mxu0 0.0
  %1616 = vmatprep.subr.mxu0 0.0
  %1617 = vmatpush1.msra.mxu0 0.0
  %1618 = vmatprep.subr.mxu0 0.0
  %1619 = vmatpush1.msra.mxu0 0.0
  %1620 = vmatprep.subr.mxu0 0.0
  %1621 = vmatpush1.msra.mxu0 0.0
  %1622 = vmatprep.subr.mxu0 0.0
  %1623 = vmatpush1.msra.mxu0 0.0
  %1624 = vmatprep.subr.mxu0 0.0
  %1625 = vmatpush1.msra.mxu0 0.0
  %1626 = vmatprep.subr.mxu0 0.0
  %1627 = vmatpush1.msra.mxu0 0.0
  %1628 = vmatprep.subr.mxu0 0.0
  %1629 = vmatpush1.msra.mxu0 0.0
  %1630 = vmatprep.subr.mxu0 0.0
  %1631 = vmatpush1.msra.mxu0 0.0
  %1632 = vmatprep.subr.mxu0 0.0
  %1633 = vmatpush1.msra.mxu0 0.0
  %1634 = vmatprep.subr.mxu0 0.0
  %1635 = vmatpush1.msra.mxu0 0.0
  %1636 = vmatprep.subr.mxu0 0.0
  %1637 = vmatpush1.msra.mxu0 0.0
  %1638 = vmatprep.subr.mxu0 0.0
  %1639 = vmatpush1.msra.mxu0 0.0
  %1640 = vmatprep.subr.mxu0 0.0
  %1641 = vmatpush1.msra.mxu0 0.0
  %1642 = vmatprep.subr.mxu0 0.0
  %1643 = vmatpush1.msra.mxu0 0.0
  %1644 = vmatprep.subr.mxu0 0.0
  %1645 = vmatpush1.msra.mxu0 0.0
  %1646 = vmatprep.subr.mxu0 0.0
  %1647 = vmatpush1.msra.mxu0 0.0
  %1648 = vmatprep.subr.mxu0 0.0
  %1649 = vmatpush1.msra.mxu0 0.0
  %1650 = vmatprep.subr.mxu0 0.0
  %1651 = vmatpush1.msra.mxu0 0.0
  %1652 = vmatprep.subr.mxu0 0.0
  %1653 = vmatpush1.msra.mxu0 0.0
  %1654 = vmatprep.subr.mxu0 0.0
  %1655 = vmatpush1.msra.mxu0 0.0
  %1656 = vmatprep.subr.mxu0 0.0
  %1657 = vmatpush1.msra.mxu0 0.0
  %1658 = vmatprep.subr.mxu0 0.0
  %1659 = vmatpush1.msra.mxu0 0.0
  %1660 = vmatprep.subr.mxu0 0.0
  %1661 = vmatpush1.msra.mxu0 0.0
  %1662 = vmatprep.mubr.f32.mxu0 0.0
  %1663 = vmatmul.mubr.f32.gmra.mrb[0].mxu0 %v1524
  %v1664 = vpop.f32.mrb[0].mxu0
  %v1665 = vadd.f32 %v46, %v1664
  %v1666 = vpop.f32.mrb[0].mxu0
  %1667 = vdwg.mxu0
  %v1668 = vxor.u32 %v1665, 2147483648
  %v1669 = vmul.f32 %v1668, 1.442695
  %v1670 = vpow.pop %v1669
  %v1671 = vadd.f32 %v1670, 1.0
  %v1672 = vrcp.pop %v1671
  %v1673 = vmul.f32 1.0, %v1672
  %v1674 = vtanh.pop %v1665
  %v1675 = vmul.f32 %v1673, %v1514
  %1677 = vrot.lane.b32.xlu0 %v1674, 64
  %v1678 = vpop.permute.xlu0 %1677
  %v1680 = vmul.f32 %v1673, %v1678
  %1682 = vrot.lane.b32.xlu0 %v1680, 32
  %v1683 = vpop.permute.xlu0 %1682
  %v1685 = vadd.f32 %v1675, %v1683
  %v1686 = vtanh.pop %v1685
  %1688 = vrot.lane.b32.xlu0 %v1686, 64
  %v1689 = vpop.permute.xlu0 %1688
  %v1691 = vmul.f32 %v1673, %v1689
  %1693 = vrot.lane.b32.xlu0 %v1691, 32
  %v1694 = vpop.permute.xlu0 %1693
  %v1695 = vsel %vm169, %v1694, 0
  %1697 = vmatprep.subr.mxu0 0.0
  %1698 = vmatpush1.msra.mxu0 %v33
  %1699 = vmatprep.subr.mxu0 0.0
  %1700 = vmatpush1.msra.mxu0 %v34
  %1701 = vmatprep.subr.mxu0 0.0
  %1702 = vmatpush1.msra.mxu0 %v35
  %1703 = vmatprep.subr.mxu0 0.0
  %1704 = vmatpush1.msra.mxu0 %v36
  %1705 = vmatprep.subr.mxu0 0.0
  %1706 = vmatpush1.msra.mxu0 0.0
  %1707 = vmatprep.subr.mxu0 0.0
  %1708 = vmatpush1.msra.mxu0 0.0
  %1709 = vmatprep.subr.mxu0 0.0
  %1710 = vmatpush1.msra.mxu0 0.0
  %1711 = vmatprep.subr.mxu0 0.0
  %1712 = vmatpush1.msra.mxu0 0.0
  %1713 = vmatprep.subr.mxu0 0.0
  %1714 = vmatpush1.msra.mxu0 0.0
  %1715 = vmatprep.subr.mxu0 0.0
  %1716 = vmatpush1.msra.mxu0 0.0
  %1717 = vmatprep.subr.mxu0 0.0
  %1718 = vmatpush1.msra.mxu0 0.0
  %1719 = vmatprep.subr.mxu0 0.0
  %1720 = vmatpush1.msra.mxu0 0.0
  %1721 = vmatprep.subr.mxu0 0.0
  %1722 = vmatpush1.msra.mxu0 0.0
  %1723 = vmatprep.subr.mxu0 0.0
  %1724 = vmatpush1.msra.mxu0 0.0
  %1725 = vmatprep.subr.mxu0 0.0
  %1726 = vmatpush1.msra.mxu0 0.0
  %1727 = vmatprep.subr.mxu0 0.0
  %1728 = vmatpush1.msra.mxu0 0.0
  %1729 = vmatprep.subr.mxu0 0.0
  %1730 = vmatpush1.msra.mxu0 0.0
  %1731 = vmatprep.subr.mxu0 0.0
  %1732 = vmatpush1.msra.mxu0 0.0
  %1733 = vmatprep.subr.mxu0 0.0
  %1734 = vmatpush1.msra.mxu0 0.0
  %1735 = vmatprep.subr.mxu0 0.0
  %1736 = vmatpush1.msra.mxu0 0.0
  %1737 = vmatprep.subr.mxu0 0.0
  %1738 = vmatpush1.msra.mxu0 0.0
  %1739 = vmatprep.subr.mxu0 0.0
  %1740 = vmatpush1.msra.mxu0 0.0
  %1741 = vmatprep.subr.mxu0 0.0
  %1742 = vmatpush1.msra.mxu0 0.0
  %1743 = vmatprep.subr.mxu0 0.0
  %1744 = vmatpush1.msra.mxu0 0.0
  %1745 = vmatprep.subr.mxu0 0.0
  %1746 = vmatpush1.msra.mxu0 0.0
  %1747 = vmatprep.subr.mxu0 0.0
  %1748 = vmatpush1.msra.mxu0 0.0
  %1749 = vmatprep.subr.mxu0 0.0
  %1750 = vmatpush1.msra.mxu0 0.0
  %1751 = vmatprep.subr.mxu0 0.0
  %1752 = vmatpush1.msra.mxu0 0.0
  %1753 = vmatprep.subr.mxu0 0.0
  %1754 = vmatpush1.msra.mxu0 0.0
  %1755 = vmatprep.subr.mxu0 0.0
  %1756 = vmatpush1.msra.mxu0 0.0
  %1757 = vmatprep.subr.mxu0 0.0
  %1758 = vmatpush1.msra.mxu0 0.0
  %1759 = vmatprep.subr.mxu0 0.0
  %1760 = vmatpush1.msra.mxu0 0.0
  %1761 = vmatprep.mubr.f32.mxu0 0.0
  %1762 = vmatmul.mubr.f32.gmra.mrb[0].mxu0 %v1695
  %v1763 = vpop.f32.mrb[0].mxu0
  %v1764 = vadd.f32 %v53, %v1763
  %v1765 = vpop.f32.mrb[0].mxu0
  %1766 = vdwg.mxu0
  %s1767 = scalar_lea.vmem %s8, 16
  %1768 = vst.msk [vmem:[%s1767] sm:$0xf] %vm1080, %v1764
  %1769 = vmatprep.subr.mxu0 0.0
  %1770 = vmatpush1.msra.mxu0 %v37
  %1771 = vmatprep.subr.mxu0 0.0
  %1772 = vmatpush1.msra.mxu0 %v38
  %1773 = vmatprep.subr.mxu0 0.0
  %1774 = vmatpush1.msra.mxu0 %v39
  %1775 = vmatprep.subr.mxu0 0.0
  %1776 = vmatpush1.msra.mxu0 %v40
  %1777 = vmatprep.subr.mxu0 0.0
  %1778 = vmatpush1.msra.mxu0 0.0
  %1779 = vmatprep.subr.mxu0 0.0
  %1780 = vmatpush1.msra.mxu0 0.0
  %1781 = vmatprep.subr.mxu0 0.0
  %1782 = vmatpush1.msra.mxu0 0.0
  %1783 = vmatprep.subr.mxu0 0.0
  %1784 = vmatpush1.msra.mxu0 0.0
  %1785 = vmatprep.subr.mxu0 0.0
  %1786 = vmatpush1.msra.mxu0 0.0
  %1787 = vmatprep.subr.mxu0 0.0
  %1788 = vmatpush1.msra.mxu0 0.0
  %1789 = vmatprep.subr.mxu0 0.0
  %1790 = vmatpush1.msra.mxu0 0.0
  %1791 = vmatprep.subr.mxu0 0.0
  %1792 = vmatpush1.msra.mxu0 0.0
  %1793 = vmatprep.subr.mxu0 0.0
  %1794 = vmatpush1.msra.mxu0 0.0
  %1795 = vmatprep.subr.mxu0 0.0
  %1796 = vmatpush1.msra.mxu0 0.0
  %1797 = vmatprep.subr.mxu0 0.0
  %1798 = vmatpush1.msra.mxu0 0.0
  %1799 = vmatprep.subr.mxu0 0.0
  %1800 = vmatpush1.msra.mxu0 0.0
  %1801 = vmatprep.subr.mxu0 0.0
  %1802 = vmatpush1.msra.mxu0 0.0
  %1803 = vmatprep.subr.mxu0 0.0
  %1804 = vmatpush1.msra.mxu0 0.0
  %1805 = vmatprep.subr.mxu0 0.0
  %1806 = vmatpush1.msra.mxu0 0.0
  %1807 = vmatprep.subr.mxu0 0.0
  %1808 = vmatpush1.msra.mxu0 0.0
  %1809 = vmatprep.subr.mxu0 0.0
  %1810 = vmatpush1.msra.mxu0 0.0
  %1811 = vmatprep.subr.mxu0 0.0
  %1812 = vmatpush1.msra.mxu0 0.0
  %1813 = vmatprep.subr.mxu0 0.0
  %1814 = vmatpush1.msra.mxu0 0.0
  %1815 = vmatprep.subr.mxu0 0.0
  %1816 = vmatpush1.msra.mxu0 0.0
  %1817 = vmatprep.subr.mxu0 0.0
  %1818 = vmatpush1.msra.mxu0 0.0
  %1819 = vmatprep.subr.mxu0 0.0
  %1820 = vmatpush1.msra.mxu0 0.0
  %1821 = vmatprep.subr.mxu0 0.0
  %1822 = vmatpush1.msra.mxu0 0.0
  %1823 = vmatprep.subr.mxu0 0.0
  %1824 = vmatpush1.msra.mxu0 0.0
  %1825 = vmatprep.subr.mxu0 0.0
  %1826 = vmatpush1.msra.mxu0 0.0
  %1827 = vmatprep.subr.mxu0 0.0
  %1828 = vmatpush1.msra.mxu0 0.0
  %1829 = vmatprep.subr.mxu0 0.0
  %1830 = vmatpush1.msra.mxu0 0.0
  %1831 = vmatprep.subr.mxu0 0.0
  %1832 = vmatpush1.msra.mxu0 0.0
  %1833 = vmatprep.mubr.f32.mxu0 0.0
  %1834 = vmatmul.mubr.f32.gmra.mrb[0].mxu0 %v1695
  %v1835 = vpop.f32.mrb[0].mxu0
  %v1836 = vadd.f32 %v46, %v1835
  %v1837 = vpop.f32.mrb[0].mxu0
  %1838 = vdwg.mxu0
  %v1839 = vxor.u32 %v1836, 2147483648
  %v1840 = vmul.f32 %v1839, 1.442695
  %v1841 = vpow.pop %v1840
  %v1842 = vadd.f32 %v1841, 1.0
  %v1843 = vrcp.pop %v1842
  %v1844 = vmul.f32 1.0, %v1843
  %v1845 = vtanh.pop %v1836
  %v1846 = vmul.f32 %v1844, %v1685
  %1848 = vrot.lane.b32.xlu0 %v1845, 64
  %v1849 = vpop.permute.xlu0 %1848
  %v1851 = vmul.f32 %v1844, %v1849
  %1853 = vrot.lane.b32.xlu0 %v1851, 32
  %v1854 = vpop.permute.xlu0 %1853
  %v1856 = vadd.f32 %v1846, %v1854
  %v1857 = vtanh.pop %v1856
  %1859 = vrot.lane.b32.xlu0 %v1857, 64
  %v1860 = vpop.permute.xlu0 %1859
  %v1862 = vmul.f32 %v1844, %v1860
  %1864 = vrot.lane.b32.xlu0 %v1862, 32
  %v1865 = vpop.permute.xlu0 %1864
  %v1866 = vsel %vm169, %v1865, 0
  %1868 = vmatprep.subr.mxu0 0.0
  %1869 = vmatpush1.msra.mxu0 %v33
  %1870 = vmatprep.subr.mxu0 0.0
  %1871 = vmatpush1.msra.mxu0 %v34
  %1872 = vmatprep.subr.mxu0 0.0
  %1873 = vmatpush1.msra.mxu0 %v35
  %1874 = vmatprep.subr.mxu0 0.0
  %1875 = vmatpush1.msra.mxu0 %v36
  %1876 = vmatprep.subr.mxu0 0.0
  %1877 = vmatpush1.msra.mxu0 0.0
  %1878 = vmatprep.subr.mxu0 0.0
  %1879 = vmatpush1.msra.mxu0 0.0
  %1880 = vmatprep.subr.mxu0 0.0
  %1881 = vmatpush1.msra.mxu0 0.0
  %1882 = vmatprep.subr.mxu0 0.0
  %1883 = vmatpush1.msra.mxu0 0.0
  %1884 = vmatprep.subr.mxu0 0.0
  %1885 = vmatpush1.msra.mxu0 0.0
  %1886 = vmatprep.subr.mxu0 0.0
  %1887 = vmatpush1.msra.mxu0 0.0
  %1888 = vmatprep.subr.mxu0 0.0
  %1889 = vmatpush1.msra.mxu0 0.0
  %1890 = vmatprep.subr.mxu0 0.0
  %1891 = vmatpush1.msra.mxu0 0.0
  %1892 = vmatprep.subr.mxu0 0.0
  %1893 = vmatpush1.msra.mxu0 0.0
  %1894 = vmatprep.subr.mxu0 0.0
  %1895 = vmatpush1.msra.mxu0 0.0
  %1896 = vmatprep.subr.mxu0 0.0
  %1897 = vmatpush1.msra.mxu0 0.0
  %1898 = vmatprep.subr.mxu0 0.0
  %1899 = vmatpush1.msra.mxu0 0.0
  %1900 = vmatprep.subr.mxu0 0.0
  %1901 = vmatpush1.msra.mxu0 0.0
  %1902 = vmatprep.subr.mxu0 0.0
  %1903 = vmatpush1.msra.mxu0 0.0
  %1904 = vmatprep.subr.mxu0 0.0
  %1905 = vmatpush1.msra.mxu0 0.0
  %1906 = vmatprep.subr.mxu0 0.0
  %1907 = vmatpush1.msra.mxu0 0.0
  %1908 = vmatprep.subr.mxu0 0.0
  %1909 = vmatpush1.msra.mxu0 0.0
  %1910 = vmatprep.subr.mxu0 0.0
  %1911 = vmatpush1.msra.mxu0 0.0
  %1912 = vmatprep.subr.mxu0 0.0
  %1913 = vmatpush1.msra.mxu0 0.0
  %1914 = vmatprep.subr.mxu0 0.0
  %1915 = vmatpush1.msra.mxu0 0.0
  %1916 = vmatprep.subr.mxu0 0.0
  %1917 = vmatpush1.msra.mxu0 0.0
  %1918 = vmatprep.subr.mxu0 0.0
  %1919 = vmatpush1.msra.mxu0 0.0
  %1920 = vmatprep.subr.mxu0 0.0
  %1921 = vmatpush1.msra.mxu0 0.0
  %1922 = vmatprep.subr.mxu0 0.0
  %1923 = vmatpush1.msra.mxu0 0.0
  %1924 = vmatprep.subr.mxu0 0.0
  %1925 = vmatpush1.msra.mxu0 0.0
  %1926 = vmatprep.subr.mxu0 0.0
  %1927 = vmatpush1.msra.mxu0 0.0
  %1928 = vmatprep.subr.mxu0 0.0
  %1929 = vmatpush1.msra.mxu0 0.0
  %1930 = vmatprep.subr.mxu0 0.0
  %1931 = vmatpush1.msra.mxu0 0.0
  %1932 = vmatprep.mubr.f32.mxu0 0.0
  %1933 = vmatmul.mubr.f32.gmra.mrb[0].mxu0 %v1866
  %v1934 = vpop.f32.mrb[0].mxu0
  %v1935 = vadd.f32 %v53, %v1934
  %v1936 = vpop.f32.mrb[0].mxu0
  %1937 = vdwg.mxu0
  %s1938 = scalar_lea.vmem %s8, 20
  %1939 = vst.msk [vmem:[%s1938] sm:$0xf] %vm1080, %v1935
  %1940 = vmatprep.subr.mxu0 0.0
  %1941 = vmatpush1.msra.mxu0 %v37
  %1942 = vmatprep.subr.mxu0 0.0
  %1943 = vmatpush1.msra.mxu0 %v38
  %1944 = vmatprep.subr.mxu0 0.0
  %1945 = vmatpush1.msra.mxu0 %v39
  %1946 = vmatprep.subr.mxu0 0.0
  %1947 = vmatpush1.msra.mxu0 %v40
  %1948 = vmatprep.subr.mxu0 0.0
  %1949 = vmatpush1.msra.mxu0 0.0
  %1950 = vmatprep.subr.mxu0 0.0
  %1951 = vmatpush1.msra.mxu0 0.0
  %1952 = vmatprep.subr.mxu0 0.0
  %1953 = vmatpush1.msra.mxu0 0.0
  %1954 = vmatprep.subr.mxu0 0.0
  %1955 = vmatpush1.msra.mxu0 0.0
  %1956 = vmatprep.subr.mxu0 0.0
  %1957 = vmatpush1.msra.mxu0 0.0
  %1958 = vmatprep.subr.mxu0 0.0
  %1959 = vmatpush1.msra.mxu0 0.0
  %1960 = vmatprep.subr.mxu0 0.0
  %1961 = vmatpush1.msra.mxu0 0.0
  %1962 = vmatprep.subr.mxu0 0.0
  %1963 = vmatpush1.msra.mxu0 0.0
  %1964 = vmatprep.subr.mxu0 0.0
  %1965 = vmatpush1.msra.mxu0 0.0
  %1966 = vmatprep.subr.mxu0 0.0
  %1967 = vmatpush1.msra.mxu0 0.0
  %1968 = vmatprep.subr.mxu0 0.0
  %1969 = vmatpush1.msra.mxu0 0.0
  %1970 = vmatprep.subr.mxu0 0.0
  %1971 = vmatpush1.msra.mxu0 0.0
  %1972 = vmatprep.subr.mxu0 0.0
  %1973 = vmatpush1.msra.mxu0 0.0
  %1974 = vmatprep.subr.mxu0 0.0
  %1975 = vmatpush1.msra.mxu0 0.0
  %1976 = vmatprep.subr.mxu0 0.0
  %1977 = vmatpush1.msra.mxu0 0.0
  %1978 = vmatprep.subr.mxu0 0.0
  %1979 = vmatpush1.msra.mxu0 0.0
  %1980 = vmatprep.subr.mxu0 0.0
  %1981 = vmatpush1.msra.mxu0 0.0
  %1982 = vmatprep.subr.mxu0 0.0
  %1983 = vmatpush1.msra.mxu0 0.0
  %1984 = vmatprep.subr.mxu0 0.0
  %1985 = vmatpush1.msra.mxu0 0.0
  %1986 = vmatprep.subr.mxu0 0.0
  %1987 = vmatpush1.msra.mxu0 0.0
  %1988 = vmatprep.subr.mxu0 0.0
  %1989 = vmatpush1.msra.mxu0 0.0
  %1990 = vmatprep.subr.mxu0 0.0
  %1991 = vmatpush1.msra.mxu0 0.0
  %1992 = vmatprep.subr.mxu0 0.0
  %1993 = vmatpush1.msra.mxu0 0.0
  %1994 = vmatprep.subr.mxu0 0.0
  %1995 = vmatpush1.msra.mxu0 0.0
  %1996 = vmatprep.subr.mxu0 0.0
  %1997 = vmatpush1.msra.mxu0 0.0
  %1998 = vmatprep.subr.mxu0 0.0
  %1999 = vmatpush1.msra.mxu0 0.0
  %2000 = vmatprep.subr.mxu0 0.0
  %2001 = vmatpush1.msra.mxu0 0.0
  %2002 = vmatprep.subr.mxu0 0.0
  %2003 = vmatpush1.msra.mxu0 0.0
  %2004 = vmatprep.mubr.f32.mxu0 0.0
  %2005 = vmatmul.mubr.f32.gmra.mrb[0].mxu0 %v1866
  %v2006 = vpop.f32.mrb[0].mxu0
  %v2007 = vadd.f32 %v46, %v2006
  %v2008 = vpop.f32.mrb[0].mxu0
  %2009 = vdwg.mxu0
  %v2010 = vxor.u32 %v2007, 2147483648
  %v2011 = vmul.f32 %v2010, 1.442695
  %v2012 = vpow.pop %v2011
  %v2013 = vadd.f32 %v2012, 1.0
  %v2014 = vrcp.pop %v2013
  %v2015 = vmul.f32 1.0, %v2014
  %v2016 = vtanh.pop %v2007
  %v2017 = vmul.f32 %v2015, %v1856
  %2019 = vrot.lane.b32.xlu0 %v2016, 64
  %v2020 = vpop.permute.xlu0 %2019
  %v2022 = vmul.f32 %v2015, %v2020
  %2024 = vrot.lane.b32.xlu0 %v2022, 32
  %v2025 = vpop.permute.xlu0 %2024
  %v2027 = vadd.f32 %v2017, %v2025
  %v2028 = vtanh.pop %v2027
  %2030 = vrot.lane.b32.xlu0 %v2028, 64
  %v2031 = vpop.permute.xlu0 %2030
  %v2033 = vmul.f32 %v2015, %v2031
  %2035 = vrot.lane.b32.xlu0 %v2033, 32
  %v2036 = vpop.permute.xlu0 %2035
  %v2037 = vsel %vm169, %v2036, 0
  %2039 = vmatprep.subr.mxu0 0.0
  %2040 = vmatpush1.msra.mxu0 %v33
  %2041 = vmatprep.subr.mxu0 0.0
  %2042 = vmatpush1.msra.mxu0 %v34
  %2043 = vmatprep.subr.mxu0 0.0
  %2044 = vmatpush1.msra.mxu0 %v35
  %2045 = vmatprep.subr.mxu0 0.0
  %2046 = vmatpush1.msra.mxu0 %v36
  %2047 = vmatprep.subr.mxu0 0.0
  %2048 = vmatpush1.msra.mxu0 0.0
  %2049 = vmatprep.subr.mxu0 0.0
  %2050 = vmatpush1.msra.mxu0 0.0
  %2051 = vmatprep.subr.mxu0 0.0
  %2052 = vmatpush1.msra.mxu0 0.0
  %2053 = vmatprep.subr.mxu0 0.0
  %2054 = vmatpush1.msra.mxu0 0.0
  %2055 = vmatprep.subr.mxu0 0.0
  %2056 = vmatpush1.msra.mxu0 0.0
  %2057 = vmatprep.subr.mxu0 0.0
  %2058 = vmatpush1.msra.mxu0 0.0
  %2059 = vmatprep.subr.mxu0 0.0
  %2060 = vmatpush1.msra.mxu0 0.0
  %2061 = vmatprep.subr.mxu0 0.0
  %2062 = vmatpush1.msra.mxu0 0.0
  %2063 = vmatprep.subr.mxu0 0.0
  %2064 = vmatpush1.msra.mxu0 0.0
  %2065 = vmatprep.subr.mxu0 0.0
  %2066 = vmatpush1.msra.mxu0 0.0
  %2067 = vmatprep.subr.mxu0 0.0
  %2068 = vmatpush1.msra.mxu0 0.0
  %2069 = vmatprep.subr.mxu0 0.0
  %2070 = vmatpush1.msra.mxu0 0.0
  %2071 = vmatprep.subr.mxu0 0.0
  %2072 = vmatpush1.msra.mxu0 0.0
  %2073 = vmatprep.subr.mxu0 0.0
  %2074 = vmatpush1.msra.mxu0 0.0
  %2075 = vmatprep.subr.mxu0 0.0
  %2076 = vmatpush1.msra.mxu0 0.0
  %2077 = vmatprep.subr.mxu0 0.0
  %2078 = vmatpush1.msra.mxu0 0.0
  %2079 = vmatprep.subr.mxu0 0.0
  %2080 = vmatpush1.msra.mxu0 0.0
  %2081 = vmatprep.subr.mxu0 0.0
  %2082 = vmatpush1.msra.mxu0 0.0
  %2083 = vmatprep.subr.mxu0 0.0
  %2084 = vmatpush1.msra.mxu0 0.0
  %2085 = vmatprep.subr.mxu0 0.0
  %2086 = vmatpush1.msra.mxu0 0.0
  %2087 = vmatprep.subr.mxu0 0.0
  %2088 = vmatpush1.msra.mxu0 0.0
  %2089 = vmatprep.subr.mxu0 0.0
  %2090 = vmatpush1.msra.mxu0 0.0
  %2091 = vmatprep.subr.mxu0 0.0
  %2092 = vmatpush1.msra.mxu0 0.0
  %2093 = vmatprep.subr.mxu0 0.0
  %2094 = vmatpush1.msra.mxu0 0.0
  %2095 = vmatprep.subr.mxu0 0.0
  %2096 = vmatpush1.msra.mxu0 0.0
  %2097 = vmatprep.subr.mxu0 0.0
  %2098 = vmatpush1.msra.mxu0 0.0
  %2099 = vmatprep.subr.mxu0 0.0
  %2100 = vmatpush1.msra.mxu0 0.0
  %2101 = vmatprep.subr.mxu0 0.0
  %2102 = vmatpush1.msra.mxu0 0.0
  %2103 = vmatprep.mubr.f32.mxu0 0.0
  %2104 = vmatmul.mubr.f32.gmra.mrb[0].mxu0 %v2037
  %v2105 = vpop.f32.mrb[0].mxu0
  %v2106 = vadd.f32 %v53, %v2105
  %v2107 = vpop.f32.mrb[0].mxu0
  %2108 = vdwg.mxu0
  %s2109 = scalar_lea.vmem %s8, 24
  %2110 = vst.msk [vmem:[%s2109] sm:$0xf] %vm1080, %v2106
  %2111 = vmatprep.subr.mxu0 0.0
  %2112 = vmatpush1.msra.mxu0 %v37
  %2113 = vmatprep.subr.mxu0 0.0
  %2114 = vmatpush1.msra.mxu0 %v38
  %2115 = vmatprep.subr.mxu0 0.0
  %2116 = vmatpush1.msra.mxu0 %v39
  %2117 = vmatprep.subr.mxu0 0.0
  %2118 = vmatpush1.msra.mxu0 %v40
  %2119 = vmatprep.subr.mxu0 0.0
  %2120 = vmatpush1.msra.mxu0 0.0
  %2121 = vmatprep.subr.mxu0 0.0
  %2122 = vmatpush1.msra.mxu0 0.0
  %2123 = vmatprep.subr.mxu0 0.0
  %2124 = vmatpush1.msra.mxu0 0.0
  %2125 = vmatprep.subr.mxu0 0.0
  %2126 = vmatpush1.msra.mxu0 0.0
  %2127 = vmatprep.subr.mxu0 0.0
  %2128 = vmatpush1.msra.mxu0 0.0
  %2129 = vmatprep.subr.mxu0 0.0
  %2130 = vmatpush1.msra.mxu0 0.0
  %2131 = vmatprep.subr.mxu0 0.0
  %2132 = vmatpush1.msra.mxu0 0.0
  %2133 = vmatprep.subr.mxu0 0.0
  %2134 = vmatpush1.msra.mxu0 0.0
  %2135 = vmatprep.subr.mxu0 0.0
  %2136 = vmatpush1.msra.mxu0 0.0
  %2137 = vmatprep.subr.mxu0 0.0
  %2138 = vmatpush1.msra.mxu0 0.0
  %2139 = vmatprep.subr.mxu0 0.0
  %2140 = vmatpush1.msra.mxu0 0.0
  %2141 = vmatprep.subr.mxu0 0.0
  %2142 = vmatpush1.msra.mxu0 0.0
  %2143 = vmatprep.subr.mxu0 0.0
  %2144 = vmatpush1.msra.mxu0 0.0
  %2145 = vmatprep.subr.mxu0 0.0
  %2146 = vmatpush1.msra.mxu0 0.0
  %2147 = vmatprep.subr.mxu0 0.0
  %2148 = vmatpush1.msra.mxu0 0.0
  %2149 = vmatprep.subr.mxu0 0.0
  %2150 = vmatpush1.msra.mxu0 0.0
  %2151 = vmatprep.subr.mxu0 0.0
  %2152 = vmatpush1.msra.mxu0 0.0
  %2153 = vmatprep.subr.mxu0 0.0
  %2154 = vmatpush1.msra.mxu0 0.0
  %2155 = vmatprep.subr.mxu0 0.0
  %2156 = vmatpush1.msra.mxu0 0.0
  %2157 = vmatprep.subr.mxu0 0.0
  %2158 = vmatpush1.msra.mxu0 0.0
  %2159 = vmatprep.subr.mxu0 0.0
  %2160 = vmatpush1.msra.mxu0 0.0
  %2161 = vmatprep.subr.mxu0 0.0
  %2162 = vmatpush1.msra.mxu0 0.0
  %2163 = vmatprep.subr.mxu0 0.0
  %2164 = vmatpush1.msra.mxu0 0.0
  %2165 = vmatprep.subr.mxu0 0.0
  %2166 = vmatpush1.msra.mxu0 0.0
  %2167 = vmatprep.subr.mxu0 0.0
  %2168 = vmatpush1.msra.mxu0 0.0
  %2169 = vmatprep.subr.mxu0 0.0
  %2170 = vmatpush1.msra.mxu0 0.0
  %2171 = vmatprep.subr.mxu0 0.0
  %2172 = vmatpush1.msra.mxu0 0.0
  %2173 = vmatprep.subr.mxu0 0.0
  %2174 = vmatpush1.msra.mxu0 0.0
  %2175 = vmatprep.mubr.f32.mxu0 0.0
  %2176 = vmatmul.mubr.f32.gmra.mrb[0].mxu0 %v2037
  %v2177 = vpop.f32.mrb[0].mxu0
  %v2178 = vadd.f32 %v46, %v2177
  %v2179 = vpop.f32.mrb[0].mxu0
  %2180 = vdwg.mxu0
  %v2181 = vxor.u32 %v2178, 2147483648
  %v2182 = vmul.f32 %v2181, 1.442695
  %v2183 = vpow.pop %v2182
  %v2184 = vadd.f32 %v2183, 1.0
  %v2185 = vrcp.pop %v2184
  %v2186 = vmul.f32 1.0, %v2185
  %v2187 = vtanh.pop %v2178
  %v2188 = vmul.f32 %v2186, %v2027
  %2190 = vrot.lane.b32.xlu0 %v2187, 64
  %v2191 = vpop.permute.xlu0 %2190
  %v2193 = vmul.f32 %v2186, %v2191
  %2195 = vrot.lane.b32.xlu0 %v2193, 32
  %v2196 = vpop.permute.xlu0 %2195
  %v2198 = vadd.f32 %v2188, %v2196
  %v2199 = vtanh.pop %v2198
  %2201 = vrot.lane.b32.xlu0 %v2199, 64
  %v2202 = vpop.permute.xlu0 %2201
  %v2204 = vmul.f32 %v2186, %v2202
  %2206 = vrot.lane.b32.xlu0 %v2204, 32
  %v2207 = vpop.permute.xlu0 %2206
  %v2208 = vsel %vm169, %v2207, 0
  %2210 = vmatprep.subr.mxu0 0.0
  %2211 = vmatpush1.msra.mxu0 %v33
  %2212 = vmatprep.subr.mxu0 0.0
  %2213 = vmatpush1.msra.mxu0 %v34
  %2214 = vmatprep.subr.mxu0 0.0
  %2215 = vmatpush1.msra.mxu0 %v35
  %2216 = vmatprep.subr.mxu0 0.0
  %2217 = vmatpush1.msra.mxu0 %v36
  %2218 = vmatprep.subr.mxu0 0.0
  %2219 = vmatpush1.msra.mxu0 0.0
  %2220 = vmatprep.subr.mxu0 0.0
  %2221 = vmatpush1.msra.mxu0 0.0
  %2222 = vmatprep.subr.mxu0 0.0
  %2223 = vmatpush1.msra.mxu0 0.0
  %2224 = vmatprep.subr.mxu0 0.0
  %2225 = vmatpush1.msra.mxu0 0.0
  %2226 = vmatprep.subr.mxu0 0.0
  %2227 = vmatpush1.msra.mxu0 0.0
  %2228 = vmatprep.subr.mxu0 0.0
  %2229 = vmatpush1.msra.mxu0 0.0
  %2230 = vmatprep.subr.mxu0 0.0
  %2231 = vmatpush1.msra.mxu0 0.0
  %2232 = vmatprep.subr.mxu0 0.0
  %2233 = vmatpush1.msra.mxu0 0.0
  %2234 = vmatprep.subr.mxu0 0.0
  %2235 = vmatpush1.msra.mxu0 0.0
  %2236 = vmatprep.subr.mxu0 0.0
  %2237 = vmatpush1.msra.mxu0 0.0
  %2238 = vmatprep.subr.mxu0 0.0
  %2239 = vmatpush1.msra.mxu0 0.0
  %2240 = vmatprep.subr.mxu0 0.0
  %2241 = vmatpush1.msra.mxu0 0.0
  %2242 = vmatprep.subr.mxu0 0.0
  %2243 = vmatpush1.msra.mxu0 0.0
  %2244 = vmatprep.subr.mxu0 0.0
  %2245 = vmatpush1.msra.mxu0 0.0
  %2246 = vmatprep.subr.mxu0 0.0
  %2247 = vmatpush1.msra.mxu0 0.0
  %2248 = vmatprep.subr.mxu0 0.0
  %2249 = vmatpush1.msra.mxu0 0.0
  %2250 = vmatprep.subr.mxu0 0.0
  %2251 = vmatpush1.msra.mxu0 0.0
  %2252 = vmatprep.subr.mxu0 0.0
  %2253 = vmatpush1.msra.mxu0 0.0
  %2254 = vmatprep.subr.mxu0 0.0
  %2255 = vmatpush1.msra.mxu0 0.0
  %2256 = vmatprep.subr.mxu0 0.0
  %2257 = vmatpush1.msra.mxu0 0.0
  %2258 = vmatprep.subr.mxu0 0.0
  %2259 = vmatpush1.msra.mxu0 0.0
  %2260 = vmatprep.subr.mxu0 0.0
  %2261 = vmatpush1.msra.mxu0 0.0
  %2262 = vmatprep.subr.mxu0 0.0
  %2263 = vmatpush1.msra.mxu0 0.0
  %2264 = vmatprep.subr.mxu0 0.0
  %2265 = vmatpush1.msra.mxu0 0.0
  %2266 = vmatprep.subr.mxu0 0.0
  %2267 = vmatpush1.msra.mxu0 0.0
  %2268 = vmatprep.subr.mxu0 0.0
  %2269 = vmatpush1.msra.mxu0 0.0
  %2270 = vmatprep.subr.mxu0 0.0
  %2271 = vmatpush1.msra.mxu0 0.0
  %2272 = vmatprep.subr.mxu0 0.0
  %2273 = vmatpush1.msra.mxu0 0.0
  %2274 = vmatprep.mubr.f32.mxu0 0.0
  %2275 = vmatmul.mubr.f32.gmra.mrb[0].mxu0 %v2208
  %v2276 = vpop.f32.mrb[0].mxu0
  %v2277 = vadd.f32 %v53, %v2276
  %v2278 = vpop.f32.mrb[0].mxu0
  %2279 = vdwg.mxu0
  %s2280 = scalar_lea.vmem %s8, 28
  %2281 = vst.msk [vmem:[%s2280] sm:$0xf] %vm1080, %v2277
  %2282 = vmatprep.subr.mxu0 0.0
  %2283 = vmatpush1.msra.mxu0 %v37
  %2284 = vmatprep.subr.mxu0 0.0
  %2285 = vmatpush1.msra.mxu0 %v38
  %2286 = vmatprep.subr.mxu0 0.0
  %2287 = vmatpush1.msra.mxu0 %v39
  %2288 = vmatprep.subr.mxu0 0.0
  %2289 = vmatpush1.msra.mxu0 %v40
  %2290 = vmatprep.subr.mxu0 0.0
  %2291 = vmatpush1.msra.mxu0 0.0
  %2292 = vmatprep.subr.mxu0 0.0
  %2293 = vmatpush1.msra.mxu0 0.0
  %2294 = vmatprep.subr.mxu0 0.0
  %2295 = vmatpush1.msra.mxu0 0.0
  %2296 = vmatprep.subr.mxu0 0.0
  %2297 = vmatpush1.msra.mxu0 0.0
  %2298 = vmatprep.subr.mxu0 0.0
  %2299 = vmatpush1.msra.mxu0 0.0
  %2300 = vmatprep.subr.mxu0 0.0
  %2301 = vmatpush1.msra.mxu0 0.0
  %2302 = vmatprep.subr.mxu0 0.0
  %2303 = vmatpush1.msra.mxu0 0.0
  %2304 = vmatprep.subr.mxu0 0.0
  %2305 = vmatpush1.msra.mxu0 0.0
  %2306 = vmatprep.subr.mxu0 0.0
  %2307 = vmatpush1.msra.mxu0 0.0
  %2308 = vmatprep.subr.mxu0 0.0
  %2309 = vmatpush1.msra.mxu0 0.0
  %2310 = vmatprep.subr.mxu0 0.0
  %2311 = vmatpush1.msra.mxu0 0.0
  %2312 = vmatprep.subr.mxu0 0.0
  %2313 = vmatpush1.msra.mxu0 0.0
  %2314 = vmatprep.subr.mxu0 0.0
  %2315 = vmatpush1.msra.mxu0 0.0
  %2316 = vmatprep.subr.mxu0 0.0
  %2317 = vmatpush1.msra.mxu0 0.0
  %2318 = vmatprep.subr.mxu0 0.0
  %2319 = vmatpush1.msra.mxu0 0.0
  %2320 = vmatprep.subr.mxu0 0.0
  %2321 = vmatpush1.msra.mxu0 0.0
  %2322 = vmatprep.subr.mxu0 0.0
  %2323 = vmatpush1.msra.mxu0 0.0
  %2324 = vmatprep.subr.mxu0 0.0
  %2325 = vmatpush1.msra.mxu0 0.0
  %2326 = vmatprep.subr.mxu0 0.0
  %2327 = vmatpush1.msra.mxu0 0.0
  %2328 = vmatprep.subr.mxu0 0.0
  %2329 = vmatpush1.msra.mxu0 0.0
  %2330 = vmatprep.subr.mxu0 0.0
  %2331 = vmatpush1.msra.mxu0 0.0
  %2332 = vmatprep.subr.mxu0 0.0
  %2333 = vmatpush1.msra.mxu0 0.0
  %2334 = vmatprep.subr.mxu0 0.0
  %2335 = vmatpush1.msra.mxu0 0.0
  %2336 = vmatprep.subr.mxu0 0.0
  %2337 = vmatpush1.msra.mxu0 0.0
  %2338 = vmatprep.subr.mxu0 0.0
  %2339 = vmatpush1.msra.mxu0 0.0
  %2340 = vmatprep.subr.mxu0 0.0
  %2341 = vmatpush1.msra.mxu0 0.0
  %2342 = vmatprep.subr.mxu0 0.0
  %2343 = vmatpush1.msra.mxu0 0.0
  %2344 = vmatprep.subr.mxu0 0.0
  %2345 = vmatpush1.msra.mxu0 0.0
  %2346 = vmatprep.mubr.f32.mxu0 0.0
  %2347 = vmatmul.mubr.f32.gmra.mrb[0].mxu0 %v2208
  %v2348 = vpop.f32.mrb[0].mxu0
  %v2349 = vadd.f32 %v46, %v2348
  %v2350 = vpop.f32.mrb[0].mxu0
  %2351 = vdwg.mxu0
  %v2352 = vxor.u32 %v2349, 2147483648
  %v2353 = vmul.f32 %v2352, 1.442695
  %v2354 = vpow.pop %v2353
  %v2355 = vadd.f32 %v2354, 1.0
  %v2356 = vrcp.pop %v2355
  %v2357 = vmul.f32 1.0, %v2356
  %v2358 = vtanh.pop %v2349
  %v2359 = vmul.f32 %v2357, %v2198
  %2361 = vrot.lane.b32.xlu0 %v2358, 64
  %v2362 = vpop.permute.xlu0 %2361
  %v2364 = vmul.f32 %v2357, %v2362
  %2366 = vrot.lane.b32.xlu0 %v2364, 32
  %v2367 = vpop.permute.xlu0 %2366
  %v2369 = vadd.f32 %v2359, %v2367
  %v2370 = vtanh.pop %v2369
  %2372 = vrot.lane.b32.xlu0 %v2370, 64
  %v2373 = vpop.permute.xlu0 %2372
  %v2375 = vmul.f32 %v2357, %v2373
  %2377 = vrot.lane.b32.xlu0 %v2375, 32
  %v2378 = vpop.permute.xlu0 %2377
  %v2379 = vsel %vm169, %v2378, 0
  %2381 = vmatprep.subr.mxu0 0.0
  %2382 = vmatpush1.msra.mxu0 %v33
  %2383 = vmatprep.subr.mxu0 0.0
  %2384 = vmatpush1.msra.mxu0 %v34
  %2385 = vmatprep.subr.mxu0 0.0
  %2386 = vmatpush1.msra.mxu0 %v35
  %2387 = vmatprep.subr.mxu0 0.0
  %2388 = vmatpush1.msra.mxu0 %v36
  %2389 = vmatprep.subr.mxu0 0.0
  %2390 = vmatpush1.msra.mxu0 0.0
  %2391 = vmatprep.subr.mxu0 0.0
  %2392 = vmatpush1.msra.mxu0 0.0
  %2393 = vmatprep.subr.mxu0 0.0
  %2394 = vmatpush1.msra.mxu0 0.0
  %2395 = vmatprep.subr.mxu0 0.0
  %2396 = vmatpush1.msra.mxu0 0.0
  %2397 = vmatprep.subr.mxu0 0.0
  %2398 = vmatpush1.msra.mxu0 0.0
  %2399 = vmatprep.subr.mxu0 0.0
  %2400 = vmatpush1.msra.mxu0 0.0
  %2401 = vmatprep.subr.mxu0 0.0
  %2402 = vmatpush1.msra.mxu0 0.0
  %2403 = vmatprep.subr.mxu0 0.0
  %2404 = vmatpush1.msra.mxu0 0.0
  %2405 = vmatprep.subr.mxu0 0.0
  %2406 = vmatpush1.msra.mxu0 0.0
  %2407 = vmatprep.subr.mxu0 0.0
  %2408 = vmatpush1.msra.mxu0 0.0
  %2409 = vmatprep.subr.mxu0 0.0
  %2410 = vmatpush1.msra.mxu0 0.0
  %2411 = vmatprep.subr.mxu0 0.0
  %2412 = vmatpush1.msra.mxu0 0.0
  %2413 = vmatprep.subr.mxu0 0.0
  %2414 = vmatpush1.msra.mxu0 0.0
  %2415 = vmatprep.subr.mxu0 0.0
  %2416 = vmatpush1.msra.mxu0 0.0
  %2417 = vmatprep.subr.mxu0 0.0
  %2418 = vmatpush1.msra.mxu0 0.0
  %2419 = vmatprep.subr.mxu0 0.0
  %2420 = vmatpush1.msra.mxu0 0.0
  %2421 = vmatprep.subr.mxu0 0.0
  %2422 = vmatpush1.msra.mxu0 0.0
  %2423 = vmatprep.subr.mxu0 0.0
  %2424 = vmatpush1.msra.mxu0 0.0
  %2425 = vmatprep.subr.mxu0 0.0
  %2426 = vmatpush1.msra.mxu0 0.0
  %2427 = vmatprep.subr.mxu0 0.0
  %2428 = vmatpush1.msra.mxu0 0.0
  %2429 = vmatprep.subr.mxu0 0.0
  %2430 = vmatpush1.msra.mxu0 0.0
  %2431 = vmatprep.subr.mxu0 0.0
  %2432 = vmatpush1.msra.mxu0 0.0
  %2433 = vmatprep.subr.mxu0 0.0
  %2434 = vmatpush1.msra.mxu0 0.0
  %2435 = vmatprep.subr.mxu0 0.0
  %2436 = vmatpush1.msra.mxu0 0.0
  %2437 = vmatprep.subr.mxu0 0.0
  %2438 = vmatpush1.msra.mxu0 0.0
  %2439 = vmatprep.subr.mxu0 0.0
  %2440 = vmatpush1.msra.mxu0 0.0
  %2441 = vmatprep.subr.mxu0 0.0
  %2442 = vmatpush1.msra.mxu0 0.0
  %2443 = vmatprep.subr.mxu0 0.0
  %2444 = vmatpush1.msra.mxu0 0.0
  %2445 = vmatprep.mubr.f32.mxu0 0.0
  %2446 = vmatmul.mubr.f32.gmra.mrb[0].mxu0 %v2379
  %v2447 = vpop.f32.mrb[0].mxu0
  %v2448 = vadd.f32 %v53, %v2447
  %v2449 = vpop.f32.mrb[0].mxu0
  %2450 = vdwg.mxu0
  %s2451 = scalar_lea.vmem %s8, 32
  %2452 = vst.msk [vmem:[%s2451] sm:$0xf] %vm1080, %v2448
  %2453 = vmatprep.subr.mxu0 0.0
  %2454 = vmatpush1.msra.mxu0 %v37
  %2455 = vmatprep.subr.mxu0 0.0
  %2456 = vmatpush1.msra.mxu0 %v38
  %2457 = vmatprep.subr.mxu0 0.0
  %2458 = vmatpush1.msra.mxu0 %v39
  %2459 = vmatprep.subr.mxu0 0.0
  %2460 = vmatpush1.msra.mxu0 %v40
  %2461 = vmatprep.subr.mxu0 0.0
  %2462 = vmatpush1.msra.mxu0 0.0
  %2463 = vmatprep.subr.mxu0 0.0
  %2464 = vmatpush1.msra.mxu0 0.0
  %2465 = vmatprep.subr.mxu0 0.0
  %2466 = vmatpush1.msra.mxu0 0.0
  %2467 = vmatprep.subr.mxu0 0.0
  %2468 = vmatpush1.msra.mxu0 0.0
  %2469 = vmatprep.subr.mxu0 0.0
  %2470 = vmatpush1.msra.mxu0 0.0
  %2471 = vmatprep.subr.mxu0 0.0
  %2472 = vmatpush1.msra.mxu0 0.0
  %2473 = vmatprep.subr.mxu0 0.0
  %2474 = vmatpush1.msra.mxu0 0.0
  %2475 = vmatprep.subr.mxu0 0.0
  %2476 = vmatpush1.msra.mxu0 0.0
  %2477 = vmatprep.subr.mxu0 0.0
  %2478 = vmatpush1.msra.mxu0 0.0
  %2479 = vmatprep.subr.mxu0 0.0
  %2480 = vmatpush1.msra.mxu0 0.0
  %2481 = vmatprep.subr.mxu0 0.0
  %2482 = vmatpush1.msra.mxu0 0.0
  %2483 = vmatprep.subr.mxu0 0.0
  %2484 = vmatpush1.msra.mxu0 0.0
  %2485 = vmatprep.subr.mxu0 0.0
  %2486 = vmatpush1.msra.mxu0 0.0
  %2487 = vmatprep.subr.mxu0 0.0
  %2488 = vmatpush1.msra.mxu0 0.0
  %2489 = vmatprep.subr.mxu0 0.0
  %2490 = vmatpush1.msra.mxu0 0.0
  %2491 = vmatprep.subr.mxu0 0.0
  %2492 = vmatpush1.msra.mxu0 0.0
  %2493 = vmatprep.subr.mxu0 0.0
  %2494 = vmatpush1.msra.mxu0 0.0
  %2495 = vmatprep.subr.mxu0 0.0
  %2496 = vmatpush1.msra.mxu0 0.0
  %2497 = vmatprep.subr.mxu0 0.0
  %2498 = vmatpush1.msra.mxu0 0.0
  %2499 = vmatprep.subr.mxu0 0.0
  %2500 = vmatpush1.msra.mxu0 0.0
  %2501 = vmatprep.subr.mxu0 0.0
  %2502 = vmatpush1.msra.mxu0 0.0
  %2503 = vmatprep.subr.mxu0 0.0
  %2504 = vmatpush1.msra.mxu0 0.0
  %2505 = vmatprep.subr.mxu0 0.0
  %2506 = vmatpush1.msra.mxu0 0.0
  %2507 = vmatprep.subr.mxu0 0.0
  %2508 = vmatpush1.msra.mxu0 0.0
  %2509 = vmatprep.subr.mxu0 0.0
  %2510 = vmatpush1.msra.mxu0 0.0
  %2511 = vmatprep.subr.mxu0 0.0
  %2512 = vmatpush1.msra.mxu0 0.0
  %2513 = vmatprep.subr.mxu0 0.0
  %2514 = vmatpush1.msra.mxu0 0.0
  %2515 = vmatprep.subr.mxu0 0.0
  %2516 = vmatpush1.msra.mxu0 0.0
  %2517 = vmatprep.mubr.f32.mxu0 0.0
  %2518 = vmatmul.mubr.f32.gmra.mrb[0].mxu0 %v2379
  %v2519 = vpop.f32.mrb[0].mxu0
  %v2520 = vadd.f32 %v46, %v2519
  %v2521 = vpop.f32.mrb[0].mxu0
  %2522 = vdwg.mxu0
  %v2523 = vxor.u32 %v2520, 2147483648
  %v2524 = vmul.f32 %v2523, 1.442695
  %v2525 = vpow.pop %v2524
  %v2526 = vadd.f32 %v2525, 1.0
  %v2527 = vrcp.pop %v2526
  %v2528 = vmul.f32 1.0, %v2527
  %v2529 = vtanh.pop %v2520
  %v2530 = vmul.f32 %v2528, %v2369
  %2532 = vrot.lane.b32.xlu0 %v2529, 64
  %v2533 = vpop.permute.xlu0 %2532
  %v2535 = vmul.f32 %v2528, %v2533
  %2537 = vrot.lane.b32.xlu0 %v2535, 32
  %v2538 = vpop.permute.xlu0 %2537
  %v2540 = vadd.f32 %v2530, %v2538
  %v2541 = vtanh.pop %v2540
  %2543 = vrot.lane.b32.xlu0 %v2541, 64
  %v2544 = vpop.permute.xlu0 %2543
  %v2546 = vmul.f32 %v2528, %v2544
  %2548 = vrot.lane.b32.xlu0 %v2546, 32
  %v2549 = vpop.permute.xlu0 %2548
  %v2550 = vsel %vm169, %v2549, 0
  %2552 = vmatprep.subr.mxu0 0.0
  %2553 = vmatpush1.msra.mxu0 %v33
  %2554 = vmatprep.subr.mxu0 0.0
  %2555 = vmatpush1.msra.mxu0 %v34
  %2556 = vmatprep.subr.mxu0 0.0
  %2557 = vmatpush1.msra.mxu0 %v35
  %2558 = vmatprep.subr.mxu0 0.0
  %2559 = vmatpush1.msra.mxu0 %v36
  %2560 = vmatprep.subr.mxu0 0.0
  %2561 = vmatpush1.msra.mxu0 0.0
  %2562 = vmatprep.subr.mxu0 0.0
  %2563 = vmatpush1.msra.mxu0 0.0
  %2564 = vmatprep.subr.mxu0 0.0
  %2565 = vmatpush1.msra.mxu0 0.0
  %2566 = vmatprep.subr.mxu0 0.0
  %2567 = vmatpush1.msra.mxu0 0.0
  %2568 = vmatprep.subr.mxu0 0.0
  %2569 = vmatpush1.msra.mxu0 0.0
  %2570 = vmatprep.subr.mxu0 0.0
  %2571 = vmatpush1.msra.mxu0 0.0
  %2572 = vmatprep.subr.mxu0 0.0
  %2573 = vmatpush1.msra.mxu0 0.0
  %2574 = vmatprep.subr.mxu0 0.0
  %2575 = vmatpush1.msra.mxu0 0.0
  %2576 = vmatprep.subr.mxu0 0.0
  %2577 = vmatpush1.msra.mxu0 0.0
  %2578 = vmatprep.subr.mxu0 0.0
  %2579 = vmatpush1.msra.mxu0 0.0
  %2580 = vmatprep.subr.mxu0 0.0
  %2581 = vmatpush1.msra.mxu0 0.0
  %2582 = vmatprep.subr.mxu0 0.0
  %2583 = vmatpush1.msra.mxu0 0.0
  %2584 = vmatprep.subr.mxu0 0.0
  %2585 = vmatpush1.msra.mxu0 0.0
  %2586 = vmatprep.subr.mxu0 0.0
  %2587 = vmatpush1.msra.mxu0 0.0
  %2588 = vmatprep.subr.mxu0 0.0
  %2589 = vmatpush1.msra.mxu0 0.0
  %2590 = vmatprep.subr.mxu0 0.0
  %2591 = vmatpush1.msra.mxu0 0.0
  %2592 = vmatprep.subr.mxu0 0.0
  %2593 = vmatpush1.msra.mxu0 0.0
  %2594 = vmatprep.subr.mxu0 0.0
  %2595 = vmatpush1.msra.mxu0 0.0
  %2596 = vmatprep.subr.mxu0 0.0
  %2597 = vmatpush1.msra.mxu0 0.0
  %2598 = vmatprep.subr.mxu0 0.0
  %2599 = vmatpush1.msra.mxu0 0.0
  %2600 = vmatprep.subr.mxu0 0.0
  %2601 = vmatpush1.msra.mxu0 0.0
  %2602 = vmatprep.subr.mxu0 0.0
  %2603 = vmatpush1.msra.mxu0 0.0
  %2604 = vmatprep.subr.mxu0 0.0
  %2605 = vmatpush1.msra.mxu0 0.0
  %2606 = vmatprep.subr.mxu0 0.0
  %2607 = vmatpush1.msra.mxu0 0.0
  %2608 = vmatprep.subr.mxu0 0.0
  %2609 = vmatpush1.msra.mxu0 0.0
  %2610 = vmatprep.subr.mxu0 0.0
  %2611 = vmatpush1.msra.mxu0 0.0
  %2612 = vmatprep.subr.mxu0 0.0
  %2613 = vmatpush1.msra.mxu0 0.0
  %2614 = vmatprep.subr.mxu0 0.0
  %2615 = vmatpush1.msra.mxu0 0.0
  %2616 = vmatprep.mubr.f32.mxu0 0.0
  %2617 = vmatmul.mubr.f32.gmra.mrb[0].mxu0 %v2550
  %v2618 = vpop.f32.mrb[0].mxu0
  %v2619 = vadd.f32 %v53, %v2618
  %v2620 = vpop.f32.mrb[0].mxu0
  %2621 = vdwg.mxu0
  %s2622 = scalar_lea.vmem %s8, 36
  %2623 = vst.msk [vmem:[%s2622] sm:$0xf] %vm1080, %v2619
  %2624 = vmatprep.subr.mxu0 0.0
  %2625 = vmatpush1.msra.mxu0 %v37
  %2626 = vmatprep.subr.mxu0 0.0
  %2627 = vmatpush1.msra.mxu0 %v38
  %2628 = vmatprep.subr.mxu0 0.0
  %2629 = vmatpush1.msra.mxu0 %v39
  %2630 = vmatprep.subr.mxu0 0.0
  %2631 = vmatpush1.msra.mxu0 %v40
  %2632 = vmatprep.subr.mxu0 0.0
  %2633 = vmatpush1.msra.mxu0 0.0
  %2634 = vmatprep.subr.mxu0 0.0
  %2635 = vmatpush1.msra.mxu0 0.0
  %2636 = vmatprep.subr.mxu0 0.0
  %2637 = vmatpush1.msra.mxu0 0.0
  %2638 = vmatprep.subr.mxu0 0.0
  %2639 = vmatpush1.msra.mxu0 0.0
  %2640 = vmatprep.subr.mxu0 0.0
  %2641 = vmatpush1.msra.mxu0 0.0
  %2642 = vmatprep.subr.mxu0 0.0
  %2643 = vmatpush1.msra.mxu0 0.0
  %2644 = vmatprep.subr.mxu0 0.0
  %2645 = vmatpush1.msra.mxu0 0.0
  %2646 = vmatprep.subr.mxu0 0.0
  %2647 = vmatpush1.msra.mxu0 0.0
  %2648 = vmatprep.subr.mxu0 0.0
  %2649 = vmatpush1.msra.mxu0 0.0
  %2650 = vmatprep.subr.mxu0 0.0
  %2651 = vmatpush1.msra.mxu0 0.0
  %2652 = vmatprep.subr.mxu0 0.0
  %2653 = vmatpush1.msra.mxu0 0.0
  %2654 = vmatprep.subr.mxu0 0.0
  %2655 = vmatpush1.msra.mxu0 0.0
  %2656 = vmatprep.subr.mxu0 0.0
  %2657 = vmatpush1.msra.mxu0 0.0
  %2658 = vmatprep.subr.mxu0 0.0
  %2659 = vmatpush1.msra.mxu0 0.0
  %2660 = vmatprep.subr.mxu0 0.0
  %2661 = vmatpush1.msra.mxu0 0.0
  %2662 = vmatprep.subr.mxu0 0.0
  %2663 = vmatpush1.msra.mxu0 0.0
  %2664 = vmatprep.subr.mxu0 0.0
  %2665 = vmatpush1.msra.mxu0 0.0
  %2666 = vmatprep.subr.mxu0 0.0
  %2667 = vmatpush1.msra.mxu0 0.0
  %2668 = vmatprep.subr.mxu0 0.0
  %2669 = vmatpush1.msra.mxu0 0.0
  %2670 = vmatprep.subr.mxu0 0.0
  %2671 = vmatpush1.msra.mxu0 0.0
  %2672 = vmatprep.subr.mxu0 0.0
  %2673 = vmatpush1.msra.mxu0 0.0
  %2674 = vmatprep.subr.mxu0 0.0
  %2675 = vmatpush1.msra.mxu0 0.0
  %2676 = vmatprep.subr.mxu0 0.0
  %2677 = vmatpush1.msra.mxu0 0.0
  %2678 = vmatprep.subr.mxu0 0.0
  %2679 = vmatpush1.msra.mxu0 0.0
  %2680 = vmatprep.subr.mxu0 0.0
  %2681 = vmatpush1.msra.mxu0 0.0
  %2682 = vmatprep.subr.mxu0 0.0
  %2683 = vmatpush1.msra.mxu0 0.0
  %2684 = vmatprep.subr.mxu0 0.0
  %2685 = vmatpush1.msra.mxu0 0.0
  %2686 = vmatprep.subr.mxu0 0.0
  %2687 = vmatpush1.msra.mxu0 0.0
  %2688 = vmatprep.mubr.f32.mxu0 0.0
  %2689 = vmatmul.mubr.f32.gmra.mrb[0].mxu0 %v2550
  %v2690 = vpop.f32.mrb[0].mxu0
  %v2691 = vadd.f32 %v46, %v2690
  %v2692 = vpop.f32.mrb[0].mxu0
  %2693 = vdwg.mxu0
  %v2694 = vxor.u32 %v2691, 2147483648
  %v2695 = vmul.f32 %v2694, 1.442695
  %v2696 = vpow.pop %v2695
  %v2697 = vadd.f32 %v2696, 1.0
  %v2698 = vrcp.pop %v2697
  %v2699 = vmul.f32 1.0, %v2698
  %v2700 = vtanh.pop %v2691
  %v2701 = vmul.f32 %v2699, %v2540
  %2703 = vrot.lane.b32.xlu0 %v2700, 64
  %v2704 = vpop.permute.xlu0 %2703
  %v2706 = vmul.f32 %v2699, %v2704
  %2708 = vrot.lane.b32.xlu0 %v2706, 32
  %v2709 = vpop.permute.xlu0 %2708
  %v2711 = vadd.f32 %v2701, %v2709
  %v2712 = vtanh.pop %v2711
  %2714 = vrot.lane.b32.xlu0 %v2712, 64
  %v2715 = vpop.permute.xlu0 %2714
  %v2717 = vmul.f32 %v2699, %v2715
  %2719 = vrot.lane.b32.xlu0 %v2717, 32
  %v2720 = vpop.permute.xlu0 %2719
  %v2721 = vsel %vm169, %v2720, 0
  %2723 = vmatprep.subr.mxu0 0.0
  %2724 = vmatpush1.msra.mxu0 %v33
  %2725 = vmatprep.subr.mxu0 0.0
  %2726 = vmatpush1.msra.mxu0 %v34
  %2727 = vmatprep.subr.mxu0 0.0
  %2728 = vmatpush1.msra.mxu0 %v35
  %2729 = vmatprep.subr.mxu0 0.0
  %2730 = vmatpush1.msra.mxu0 %v36
  %2731 = vmatprep.subr.mxu0 0.0
  %2732 = vmatpush1.msra.mxu0 0.0
  %2733 = vmatprep.subr.mxu0 0.0
  %2734 = vmatpush1.msra.mxu0 0.0
  %2735 = vmatprep.subr.mxu0 0.0
  %2736 = vmatpush1.msra.mxu0 0.0
  %2737 = vmatprep.subr.mxu0 0.0
  %2738 = vmatpush1.msra.mxu0 0.0
  %2739 = vmatprep.subr.mxu0 0.0
  %2740 = vmatpush1.msra.mxu0 0.0
  %2741 = vmatprep.subr.mxu0 0.0
  %2742 = vmatpush1.msra.mxu0 0.0
  %2743 = vmatprep.subr.mxu0 0.0
  %2744 = vmatpush1.msra.mxu0 0.0
  %2745 = vmatprep.subr.mxu0 0.0
  %2746 = vmatpush1.msra.mxu0 0.0
  %2747 = vmatprep.subr.mxu0 0.0
  %2748 = vmatpush1.msra.mxu0 0.0
  %2749 = vmatprep.subr.mxu0 0.0
  %2750 = vmatpush1.msra.mxu0 0.0
  %2751 = vmatprep.subr.mxu0 0.0
  %2752 = vmatpush1.msra.mxu0 0.0
  %2753 = vmatprep.subr.mxu0 0.0
  %2754 = vmatpush1.msra.mxu0 0.0
  %2755 = vmatprep.subr.mxu0 0.0
  %2756 = vmatpush1.msra.mxu0 0.0
  %2757 = vmatprep.subr.mxu0 0.0
  %2758 = vmatpush1.msra.mxu0 0.0
  %2759 = vmatprep.subr.mxu0 0.0
  %2760 = vmatpush1.msra.mxu0 0.0
  %2761 = vmatprep.subr.mxu0 0.0
  %2762 = vmatpush1.msra.mxu0 0.0
  %2763 = vmatprep.subr.mxu0 0.0
  %2764 = vmatpush1.msra.mxu0 0.0
  %2765 = vmatprep.subr.mxu0 0.0
  %2766 = vmatpush1.msra.mxu0 0.0
  %2767 = vmatprep.subr.mxu0 0.0
  %2768 = vmatpush1.msra.mxu0 0.0
  %2769 = vmatprep.subr.mxu0 0.0
  %2770 = vmatpush1.msra.mxu0 0.0
  %2771 = vmatprep.subr.mxu0 0.0
  %2772 = vmatpush1.msra.mxu0 0.0
  %2773 = vmatprep.subr.mxu0 0.0
  %2774 = vmatpush1.msra.mxu0 0.0
  %2775 = vmatprep.subr.mxu0 0.0
  %2776 = vmatpush1.msra.mxu0 0.0
  %2777 = vmatprep.subr.mxu0 0.0
  %2778 = vmatpush1.msra.mxu0 0.0
  %2779 = vmatprep.subr.mxu0 0.0
  %2780 = vmatpush1.msra.mxu0 0.0
  %2781 = vmatprep.subr.mxu0 0.0
  %2782 = vmatpush1.msra.mxu0 0.0
  %2783 = vmatprep.subr.mxu0 0.0
  %2784 = vmatpush1.msra.mxu0 0.0
  %2785 = vmatprep.subr.mxu0 0.0
  %2786 = vmatpush1.msra.mxu0 0.0
  %2787 = vmatprep.mubr.f32.mxu0 0.0
  %2788 = vmatmul.mubr.f32.gmra.mrb[0].mxu0 %v2721
  %v2789 = vpop.f32.mrb[0].mxu0
  %v2790 = vadd.f32 %v53, %v2789
  %v2791 = vpop.f32.mrb[0].mxu0
  %2792 = vdwg.mxu0
  %s2793 = scalar_lea.vmem %s8, 40
  %2794 = vst.msk [vmem:[%s2793] sm:$0xf] %vm1080, %v2790
  %2795 = vmatprep.subr.mxu0 0.0
  %2796 = vmatpush1.msra.mxu0 %v37
  %2797 = vmatprep.subr.mxu0 0.0
  %2798 = vmatpush1.msra.mxu0 %v38
  %2799 = vmatprep.subr.mxu0 0.0
  %2800 = vmatpush1.msra.mxu0 %v39
  %2801 = vmatprep.subr.mxu0 0.0
  %2802 = vmatpush1.msra.mxu0 %v40
  %2803 = vmatprep.subr.mxu0 0.0
  %2804 = vmatpush1.msra.mxu0 0.0
  %2805 = vmatprep.subr.mxu0 0.0
  %2806 = vmatpush1.msra.mxu0 0.0
  %2807 = vmatprep.subr.mxu0 0.0
  %2808 = vmatpush1.msra.mxu0 0.0
  %2809 = vmatprep.subr.mxu0 0.0
  %2810 = vmatpush1.msra.mxu0 0.0
  %2811 = vmatprep.subr.mxu0 0.0
  %2812 = vmatpush1.msra.mxu0 0.0
  %2813 = vmatprep.subr.mxu0 0.0
  %2814 = vmatpush1.msra.mxu0 0.0
  %2815 = vmatprep.subr.mxu0 0.0
  %2816 = vmatpush1.msra.mxu0 0.0
  %2817 = vmatprep.subr.mxu0 0.0
  %2818 = vmatpush1.msra.mxu0 0.0
  %2819 = vmatprep.subr.mxu0 0.0
  %2820 = vmatpush1.msra.mxu0 0.0
  %2821 = vmatprep.subr.mxu0 0.0
  %2822 = vmatpush1.msra.mxu0 0.0
  %2823 = vmatprep.subr.mxu0 0.0
  %2824 = vmatpush1.msra.mxu0 0.0
  %2825 = vmatprep.subr.mxu0 0.0
  %2826 = vmatpush1.msra.mxu0 0.0
  %2827 = vmatprep.subr.mxu0 0.0
  %2828 = vmatpush1.msra.mxu0 0.0
  %2829 = vmatprep.subr.mxu0 0.0
  %2830 = vmatpush1.msra.mxu0 0.0
  %2831 = vmatprep.subr.mxu0 0.0
  %2832 = vmatpush1.msra.mxu0 0.0
  %2833 = vmatprep.subr.mxu0 0.0
  %2834 = vmatpush1.msra.mxu0 0.0
  %2835 = vmatprep.subr.mxu0 0.0
  %2836 = vmatpush1.msra.mxu0 0.0
  %2837 = vmatprep.subr.mxu0 0.0
  %2838 = vmatpush1.msra.mxu0 0.0
  %2839 = vmatprep.subr.mxu0 0.0
  %2840 = vmatpush1.msra.mxu0 0.0
  %2841 = vmatprep.subr.mxu0 0.0
  %2842 = vmatpush1.msra.mxu0 0.0
  %2843 = vmatprep.subr.mxu0 0.0
  %2844 = vmatpush1.msra.mxu0 0.0
  %2845 = vmatprep.subr.mxu0 0.0
  %2846 = vmatpush1.msra.mxu0 0.0
  %2847 = vmatprep.subr.mxu0 0.0
  %2848 = vmatpush1.msra.mxu0 0.0
  %2849 = vmatprep.subr.mxu0 0.0
  %2850 = vmatpush1.msra.mxu0 0.0
  %2851 = vmatprep.subr.mxu0 0.0
  %2852 = vmatpush1.msra.mxu0 0.0
  %2853 = vmatprep.subr.mxu0 0.0
  %2854 = vmatpush1.msra.mxu0 0.0
  %2855 = vmatprep.subr.mxu0 0.0
  %2856 = vmatpush1.msra.mxu0 0.0
  %2857 = vmatprep.subr.mxu0 0.0
  %2858 = vmatpush1.msra.mxu0 0.0
  %2859 = vmatprep.mubr.f32.mxu0 0.0
  %2860 = vmatmul.mubr.f32.gmra.mrb[0].mxu0 %v2721
  %v2861 = vpop.f32.mrb[0].mxu0
  %v2862 = vadd.f32 %v46, %v2861
  %v2863 = vpop.f32.mrb[0].mxu0
  %2864 = vdwg.mxu0
  %v2865 = vxor.u32 %v2862, 2147483648
  %v2866 = vmul.f32 %v2865, 1.442695
  %v2867 = vpow.pop %v2866
  %v2868 = vadd.f32 %v2867, 1.0
  %v2869 = vrcp.pop %v2868
  %v2870 = vmul.f32 1.0, %v2869
  %v2871 = vtanh.pop %v2862
  %v2872 = vmul.f32 %v2870, %v2711
  %2874 = vrot.lane.b32.xlu0 %v2871, 64
  %v2875 = vpop.permute.xlu0 %2874
  %v2877 = vmul.f32 %v2870, %v2875
  %2879 = vrot.lane.b32.xlu0 %v2877, 32
  %v2880 = vpop.permute.xlu0 %2879
  %v2882 = vadd.f32 %v2872, %v2880
  %v2883 = vtanh.pop %v2882
  %2885 = vrot.lane.b32.xlu0 %v2883, 64
  %v2886 = vpop.permute.xlu0 %2885
  %v2888 = vmul.f32 %v2870, %v2886
  %2890 = vrot.lane.b32.xlu0 %v2888, 32
  %v2891 = vpop.permute.xlu0 %2890
  %v2892 = vsel %vm169, %v2891, 0
  %2894 = vmatprep.subr.mxu0 0.0
  %2895 = vmatpush1.msra.mxu0 %v33
  %2896 = vmatprep.subr.mxu0 0.0
  %2897 = vmatpush1.msra.mxu0 %v34
  %2898 = vmatprep.subr.mxu0 0.0
  %2899 = vmatpush1.msra.mxu0 %v35
  %2900 = vmatprep.subr.mxu0 0.0
  %2901 = vmatpush1.msra.mxu0 %v36
  %2902 = vmatprep.subr.mxu0 0.0
  %2903 = vmatpush1.msra.mxu0 0.0
  %2904 = vmatprep.subr.mxu0 0.0
  %2905 = vmatpush1.msra.mxu0 0.0
  %2906 = vmatprep.subr.mxu0 0.0
  %2907 = vmatpush1.msra.mxu0 0.0
  %2908 = vmatprep.subr.mxu0 0.0
  %2909 = vmatpush1.msra.mxu0 0.0
  %2910 = vmatprep.subr.mxu0 0.0
  %2911 = vmatpush1.msra.mxu0 0.0
  %2912 = vmatprep.subr.mxu0 0.0
  %2913 = vmatpush1.msra.mxu0 0.0
  %2914 = vmatprep.subr.mxu0 0.0
  %2915 = vmatpush1.msra.mxu0 0.0
  %2916 = vmatprep.subr.mxu0 0.0
  %2917 = vmatpush1.msra.mxu0 0.0
  %2918 = vmatprep.subr.mxu0 0.0
  %2919 = vmatpush1.msra.mxu0 0.0
  %2920 = vmatprep.subr.mxu0 0.0
  %2921 = vmatpush1.msra.mxu0 0.0
  %2922 = vmatprep.subr.mxu0 0.0
  %2923 = vmatpush1.msra.mxu0 0.0
  %2924 = vmatprep.subr.mxu0 0.0
  %2925 = vmatpush1.msra.mxu0 0.0
  %2926 = vmatprep.subr.mxu0 0.0
  %2927 = vmatpush1.msra.mxu0 0.0
  %2928 = vmatprep.subr.mxu0 0.0
  %2929 = vmatpush1.msra.mxu0 0.0
  %2930 = vmatprep.subr.mxu0 0.0
  %2931 = vmatpush1.msra.mxu0 0.0
  %2932 = vmatprep.subr.mxu0 0.0
  %2933 = vmatpush1.msra.mxu0 0.0
  %2934 = vmatprep.subr.mxu0 0.0
  %2935 = vmatpush1.msra.mxu0 0.0
  %2936 = vmatprep.subr.mxu0 0.0
  %2937 = vmatpush1.msra.mxu0 0.0
  %2938 = vmatprep.subr.mxu0 0.0
  %2939 = vmatpush1.msra.mxu0 0.0
  %2940 = vmatprep.subr.mxu0 0.0
  %2941 = vmatpush1.msra.mxu0 0.0
  %2942 = vmatprep.subr.mxu0 0.0
  %2943 = vmatpush1.msra.mxu0 0.0
  %2944 = vmatprep.subr.mxu0 0.0
  %2945 = vmatpush1.msra.mxu0 0.0
  %2946 = vmatprep.subr.mxu0 0.0
  %2947 = vmatpush1.msra.mxu0 0.0
  %2948 = vmatprep.subr.mxu0 0.0
  %2949 = vmatpush1.msra.mxu0 0.0
  %2950 = vmatprep.subr.mxu0 0.0
  %2951 = vmatpush1.msra.mxu0 0.0
  %2952 = vmatprep.subr.mxu0 0.0
  %2953 = vmatpush1.msra.mxu0 0.0
  %2954 = vmatprep.subr.mxu0 0.0
  %2955 = vmatpush1.msra.mxu0 0.0
  %2956 = vmatprep.subr.mxu0 0.0
  %2957 = vmatpush1.msra.mxu0 0.0
  %2958 = vmatprep.mubr.f32.mxu0 0.0
  %2959 = vmatmul.mubr.f32.gmra.mrb[0].mxu0 %v2892
  %v2960 = vpop.f32.mrb[0].mxu0
  %v2961 = vadd.f32 %v53, %v2960
  %v2962 = vpop.f32.mrb[0].mxu0
  %2963 = vdwg.mxu0
  %s2964 = scalar_lea.vmem %s8, 44
  %2965 = vst.msk [vmem:[%s2964] sm:$0xf] %vm1080, %v2961
  // Predicated region
  $region34: #{tpu_custom_call.1} parent=0 // pred_check
    _
  $region35: #{tpu_custom_call.1} parent=0 // pred_check_branch
    %2967 = sbr.rel (0) target = $region37
  $region36: #{tpu_custom_call.1} parent=0 // pred_region
    _
  $region37: #{tpu_custom_call.1} parent=0 // pred_fallthru
    _
  // Predicated region
  $region38: #{tpu_custom_call.1} parent=0 // pred_check
    _
  $region39: #{tpu_custom_call.1} parent=0 // pred_check_branch
    %2969 = sbr.rel (0) target = $region41
  $region40: #{tpu_custom_call.1} parent=0 // pred_region
    _
  $region41: #{tpu_custom_call.1} parent=0 // pred_fallthru
    _

</llo_original>
